<compile_context>
chip_gen: v5e
topology: v5e:2x2
jax: 0.10.0
libtpu: 0.0.40
codegen_flags: <defaults>
</compile_context>

<pallas_src>
import jax
import jax.numpy as jnp
from jax import lax
from jax.experimental import pallas as pl
from jax.experimental.pallas import tpu as pltpu


def _round_up(a, b):
    return (a + b - 1) // b * b


# --------------------------------- geometry -----------------------------------
def _geometry(D, H, W, lane_tile):
    Dp, Hp, Wp = D + 2, H + 2, W + 2
    padded_len = Dp * Hp * Wp
    offset = Hp * Wp + Wp + 1                 # flat shift of the "center" tap
    shifts = tuple(kd * Hp * Wp + kh * Wp + kw
                   for kd in range(3) for kh in range(3) for kw in range(3))
    # tile must cover the one-sided halo (offset) so [window p-1 | p | p+1] spans every read
    tile = _round_up(max(lane_tile, offset), 128)
    n_tiles = -(-padded_len // tile)
    l_out = n_tiles * tile                    # flat positions covered by the output grid
    l_in = l_out + tile                       # input length (window p+1 exists at last step)
    return dict(D=D, H=H, W=W, Dp=Dp, Hp=Hp, Wp=Wp, padded_len=padded_len,
                offset=offset, shifts=shifts, tile=tile, n_tiles=n_tiles,
                l_out=l_out, l_in=l_in)


def _interior_mask(g):
    """(1, l_out) bf16 {0,1}: 1 exactly at interior padded-flat positions (d,h,w in [1,X])."""
    d = jnp.arange(g["Dp"])
    h = jnp.arange(g["Hp"])
    w = jnp.arange(g["Wp"])
    ind = (((d >= 1) & (d <= g["D"]))[:, None, None]
           & ((h >= 1) & (h <= g["H"]))[None, :, None]
           & ((w >= 1) & (w <= g["W"]))[None, None, :])
    m = ind.reshape(1, g["padded_len"]).astype(jnp.bfloat16)
    return jnp.pad(m, ((0, 0), (0, g["l_out"] - g["padded_len"])))


def _to_padded_flat(x, g):
    """NDHWC f32 -> channels-first, zero-padded, flattened, end-padded bf16 (N, C, l_in)."""
    N = x.shape[0]
    C = x.shape[-1]
    xp = jnp.pad(x.astype(jnp.bfloat16), ((0, 0), (1, 1), (1, 1), (1, 1), (0, 0)))
    xf = jnp.transpose(xp, (0, 4, 1, 2, 3)).reshape(N, C, g["padded_len"])
    return jnp.pad(xf, ((0, 0), (0, 0), (0, g["l_in"] - g["padded_len"])))


def _from_padded_flat(y, g):
    """(N, C, l_in) padded-flat -> NDHWC (interior positions only)."""
    N, C = y.shape[0], y.shape[1]
    yv = y[:, :, :g["padded_len"]].reshape(N, C, g["Dp"], g["Hp"], g["Wp"])
    yv = yv[:, :, 1:g["D"] + 1, 1:g["H"] + 1, 1:g["W"] + 1]
    return jnp.transpose(yv, (0, 2, 3, 4, 1))


# ----------------------------- Pallas kernel ----------------------------------
def _make_conv_kernel(shifts, tile, offset, with_residual):
    """Fused 3x3x3 conv (single im2col matmul) + BN affine (+ residual) + ReLU + interior mask.

    Per grid step (n, p):
      x0_ref    : (1, Cin, tile)  bf16  window 0 of this batch element (DMA'd once per n)
      xnext_ref : (1, Cin, tile)  bf16  window p+1
      w_ref     : (Cout, 27*Cin)  f32   per-tap weight slab, column index = tap*Cin + c
      scale/bias: (Cout, 1)       f32   folded BN affine
      mask_ref  : (1, tile)       bf16  1 at interior padded-flat positions, else 0
      res_ref   : (1, Cout, tile) bf16  residual in the same padded-flat layout (optional)
      o_ref     : (1, Cout, tile)       lane-dense output tile (tile % 128 == 0)
      carry_ref : (Cin, 2*tile)   f32   VMEM carry = [window p-1 | window p]
      patch_ref : (27*Cin, tile)  f32   VMEM im2col column matrix
    """

    def kernel(*refs):
        if with_residual:
            (x0_ref, xnext_ref, w_ref, scale_ref, bias_ref, mask_ref,
             res_ref, o_ref, carry_ref, patch_ref) = refs
        else:
            (x0_ref, xnext_ref, w_ref, scale_ref, bias_ref, mask_ref,
             o_ref, carry_ref, patch_ref) = refs
            res_ref = None

        p = pl.program_id(1)
        cin = x0_ref.shape[1]

        # Refill the halo carry at the start of each batch element's tile sweep.
        # Window -1 does not exist: zero it (it only ever feeds non-interior outputs,
        # which are masked to exact zero below).
        @pl.when(p == 0)
        def _():
            carry_ref[:, 0:tile] = jnp.zeros((cin, tile), jnp.float32)
            carry_ref[:, tile:2 * tile] = x0_ref[0].astype(jnp.float32)

        x_next = xnext_ref[0].astype(jnp.float32)                    # window p+1
        xw = jnp.concatenate([carry_ref[...], x_next], axis=-1)      # (Cin, 3*tile)

        # In-VMEM im2col: one (27*Cin, tile) column matrix -> a single MXU matmul
        # (no per-tap K=Cin dots, no VALU accumulate chain).
        for t, s in enumerate(shifts):                               # static unroll, 27 taps
            start = tile - offset + s                                # static slice start
            patch_ref[t * cin:(t + 1) * cin, :] = xw[:, start:start + tile]
        acc = jnp.dot(w_ref[...], patch_ref[...],
                      preferred_element_type=jnp.float32)            # (Cout, tile)

        y = acc * scale_ref[...] + bias_ref[...]                     # folded BN affine, f32
        if with_residual:
            y = y + res_ref[0].astype(jnp.float32)                   # bf16 residual, f32 add
        y = jnp.maximum(y, 0.0)                                      # ReLU
        # Force non-interior (padding ring / tail) positions to exact zero so this output
        # can be consumed directly as the next conv's zero-padded input.
        y = jnp.where(mask_ref[...] > 0, y, 0.0)
        o_ref[0] = y.astype(o_ref.dtype)                             # lane-dense store

        # Slide the carry to [window p | window p+1] for the next grid step.
        carry_ref[:, 0:tile] = carry_ref[:, tile:2 * tile]
        carry_ref[:, tile:2 * tile] = x_next

    return kernel


# ------------------------------- JAX glue --------------------------------------
def _conv_bn_relu_flat(xf, w, bn_scale, bn_bias, mask, g, residual=None,
                       out_dtype=jnp.bfloat16):
    """relu(bn(conv3x3x3_same(x)) [+ residual]) on padded-flat tensors, one pallas_call.

    xf       : (N, Cin, l_in) bf16 padded-flat input
    w        : (3, 3, 3, Cin, Cout) conv weights
    residual : (N, Cout, l_in) bf16 padded-flat residual or None
    returns  : (N, Cout, l_in) `out_dtype` padded-flat output (non-interior positions are 0
               inside [0, l_out); the final tile-block [l_out, l_in) is never written).
    """
    N, Cin, l_in = xf.shape
    Cout = w.shape[-1]
    tile, n_tiles = g["tile"], g["n_tiles"]
    assert l_in == g["l_in"]

    # single lane-dense weight slab: column index = tap*Cin + c  (matches patch rows)
    w2d = jnp.transpose(w.reshape(27, Cin, Cout), (2, 0, 1)).reshape(Cout, 27 * Cin)
    w2d = w2d.astype(jnp.float32)
    scale2 = bn_scale.reshape(Cout, 1).astype(jnp.float32)
    bias2 = bn_bias.reshape(Cout, 1).astype(jnp.float32)

    inputs = [xf, xf, w2d, scale2, bias2, mask]
    in_specs = [
        pl.BlockSpec((1, Cin, tile), lambda n, p: (n, 0, 0)),       # window 0 (once per n)
        pl.BlockSpec((1, Cin, tile), lambda n, p: (n, 0, p + 1)),   # window p+1
        pl.BlockSpec((Cout, 27 * Cin), lambda n, p: (0, 0)),
        pl.BlockSpec((Cout, 1), lambda n, p: (0, 0)),
        pl.BlockSpec((Cout, 1), lambda n, p: (0, 0)),
        pl.BlockSpec((1, tile), lambda n, p: (0, p)),               # interior mask
    ]
    with_res = residual is not None
    if with_res:
        assert residual.shape == (N, Cout, l_in)
        inputs.append(residual)
        in_specs.append(pl.BlockSpec((1, Cout, tile), lambda n, p: (n, 0, p)))

    out_itemsize = 2 if out_dtype == jnp.bfloat16 else 4

    # VMEM budget: double-buffered blocks + persistent scratch; stay within v7x's 64 MiB
    # while leaving headroom for fatter tiles on v5e/v6e.
    step_bytes = tile * (2 * Cin * 2 + 2 + (Cout * 2 if with_res else 0) + Cout * out_itemsize)
    scratch_bytes = (2 * tile * Cin + 27 * Cin * tile) * 4
    vmem_limit = int(min(48 * 2 ** 20,
                         max(32 * 2 ** 20, 4 * step_bytes + scratch_bytes + (2 << 20))))

    flops = 2 * N * g["l_out"] * 27 * Cin * Cout
    bytes_accessed = int(
        N * Cin * l_in * 2                                  # x read (~once)
        + N * g["l_out"] * 2                                # interior mask
        + (N * Cout * g["l_out"] * 2 if with_res else 0)    # residual (bf16)
        + N * Cout * g["l_out"] * out_itemsize              # output
        + w2d.size * 4 + (scale2.size + bias2.size) * 4)

    return pl.pallas_call(
        _make_conv_kernel(g["shifts"], tile, g["offset"], with_res),
        out_shape=jax.ShapeDtypeStruct((N, Cout, l_in), out_dtype),
        grid=(N, n_tiles),
        in_specs=in_specs,
        out_specs=pl.BlockSpec((1, Cout, tile), lambda n, p: (n, 0, p)),
        scratch_shapes=[pltpu.VMEM((Cin, 2 * tile), jnp.float32),      # halo carry
                        pltpu.VMEM((27 * Cin, tile), jnp.float32)],    # im2col patch
        compiler_params=pltpu.CompilerParams(
            dimension_semantics=("parallel", "arbitrary"),   # N parallel (v7x 2 TCs);
            vmem_limit_bytes=vmem_limit),                    # tile axis carries the halo
        cost_estimate=pl.CostEstimate(flops=flops, transcendentals=0,
                                      bytes_accessed=bytes_accessed),
    )(*inputs)


def block_forward(x, params, lane_tile=1024):
    """Forward of `Block` (i_downsample=None, stride=1).  x: (N, D, H, W, C) f32, NDHWC."""
    N, D, H, W, Cin = x.shape
    g = _geometry(D, H, W, lane_tile)
    mask = _interior_mask(g)
    xf = _to_padded_flat(x, g)                                       # identity, padded-flat bf16
    # x = relu(batch_norm2(conv1(x)))   -- batch_norm2 after conv1, as in the original code
    y1 = _conv_bn_relu_flat(xf, params["w1"], params["bn2_scale"], params["bn2_bias"],
                            mask, g, residual=None, out_dtype=jnp.bfloat16)
    # x = batch_norm2(conv2(x)); x += identity; x = relu(x)
    # y1 is already the padded-flat bf16 input conv2 needs; xf is already the residual.
    y2 = _conv_bn_relu_flat(y1, params["w2"], params["bn2_scale"], params["bn2_bias"],
                            mask, g, residual=xf, out_dtype=jnp.float32)
    return _from_padded_flat(y2, g)


# --------------------------- reference (pure JAX, f32) -------------------------
def _ref_forward(x, params):
    def conv(a, w):
        return lax.conv_general_dilated(
            a, w, (1, 1, 1), "SAME",
            dimension_numbers=("NDHWC", "DHWIO", "NDHWC"))
    s, b = params["bn2_scale"], params["bn2_bias"]
    y = jax.nn.relu(conv(x, params["w1"]) * s + b)
    y = conv(y, params["w2"]) * s + b
    return jax.nn.relu(y + x)


# ----------------------------------- main --------------------------------------
def _make_params(key, in_channels, out_channels):
    k1, k2 = jax.random.split(key)
    w1 = jax.random.normal(k1, (3, 3, 3, in_channels, out_channels), jnp.float32) * 0.1
    w2 = jax.random.normal(k2, (3, 3, 3, out_channels, out_channels), jnp.float32) * 0.1
    eps = 1e-5
    c = jnp.arange(out_channels, dtype=jnp.float32)
    # batch_norm2 (the one actually used) — inference-mode affine fold
    gamma2 = 1.0 + 0.1 * c
    beta2 = 0.05 * c
    mean2 = 0.01 * c
    var2 = 1.0 + 0.02 * c
    scale2 = gamma2 / jnp.sqrt(var2 + eps)
    bias2 = beta2 - mean2 * scale2
    # batch_norm1 exists in __init__ but is never used in forward (quirk preserved)
    return {"w1": w1, "w2": w2, "bn2_scale": scale2, "bn2_bias": bias2}


if __name__ == "__main__":
    key = jax.random.PRNGKey(0)
    kx, kp = jax.random.split(key)

    N, D, H, W = 2, 8, 8, 8
    in_channels = out_channels = 4   # residual add requires Cin == Cout (no downsample)

    x = jax.random.normal(kx, (N, D, H, W, in_channels), jnp.float32)
    params = _make_params(kp, in_channels, out_channels)

    ref = jax.block_until_ready(_ref_forward(x, params))

    # Fat tiles: the whole padded 10x10x10 volume fits a single 1024-lane tile per batch
    # element (grid = (N, 1)).
    out = jax.block_until_ready(jax.jit(block_forward)(x, params))
    assert out.shape == (N, D, H, W, out_channels)
    # bf16 HBM tensors vs the pure-f32 reference -> bf16-level tolerance.  Structural /
    # indexing bugs would give O(1) errors.
    assert jnp.allclose(out, ref, atol=5e-2, rtol=5e-2), float(jnp.max(jnp.abs(out - ref)))

    # Also exercise the multi-tile path (halo carry across "arbitrary" grid steps).
    out2 = jax.block_until_ready(
        jax.jit(lambda a, p: block_forward(a, p, lane_tile=256))(x, params))
    assert jnp.allclose(out2, ref, atol=5e-2, rtol=5e-2), float(jnp.max(jnp.abs(out2 - ref)))

    print("KERNEL_OK")
</pallas_src>

<mosaic_0001>
module attributes {stable_mosaic.version = 11 : i64} {
  func.func @kernel(%arg0: i32, %arg1: i32, %arg2: memref<1x4x1024xbf16, #tpu.memory_space<vmem>>, %arg3: memref<1x4x1024xbf16, #tpu.memory_space<vmem>>, %arg4: memref<4x108xf32, #tpu.memory_space<vmem>>, %arg5: memref<4x1xf32, #tpu.memory_space<vmem>>, %arg6: memref<4x1xf32, #tpu.memory_space<vmem>>, %arg7: memref<1x1024xbf16, #tpu.memory_space<vmem>>, %arg8: memref<1x4x1024xbf16, #tpu.memory_space<vmem>>, %arg9: memref<4x2048xf32, #tpu.memory_space<vmem>>, %arg10: memref<108x1024xf32, #tpu.memory_space<vmem>>) attributes {dimension_semantics = [#tpu.dimension_semantics<parallel>, #tpu.dimension_semantics<arbitrary>], iteration_bounds = array<i64: 2, 1>, scalar_prefetch = 0 : i64, scratch_operands = 2 : i64, tpu.core_type = #tpu.core_type<tc>, window_params = [{transform_indices = @transform_0, window_bounds = array<i64: 1, 4, 1024>}, {transform_indices = @transform_1, window_bounds = array<i64: 1, 4, 1024>}, {pipeline_mode = #tpu.pipeline_mode<synchronous>, transform_indices = @transform_2, window_bounds = array<i64: 4, 108>}, {pipeline_mode = #tpu.pipeline_mode<synchronous>, transform_indices = @transform_3, window_bounds = array<i64: 4, 1>}, {pipeline_mode = #tpu.pipeline_mode<synchronous>, transform_indices = @transform_4, window_bounds = array<i64: 4, 1>}, {transform_indices = @transform_5, window_bounds = array<i64: 1, 1024>}, {transform_indices = @transform_6, window_bounds = array<i64: 1, 4, 1024>}]} {
    %c0_i32 = arith.constant 0 : i32
    %0 = arith.cmpi eq, %arg1, %c0_i32 : i32
    %1 = arith.extui %0 : i1 to i32
    %c0_i32_0 = arith.constant 0 : i32
    %2 = arith.cmpi ne, %1, %c0_i32_0 : i32
    scf.if %2 {
      %cst_54 = arith.constant 0.000000e+00 : f32
      %87 = vector.broadcast %cst_54 : f32 to vector<4x1024xf32>
      %c0_55 = arith.constant 0 : index
      %c0_56 = arith.constant 0 : index
      %88 = vector.load %arg9[%c0_55, %c0_56] : memref<4x2048xf32, #tpu.memory_space<vmem>>, vector<4x1024xf32>
      tpu.vector_store %arg9[%c0_55, %c0_56], %87 {strides = array<i32>} : memref<4x2048xf32, #tpu.memory_space<vmem>>, vector<4x1024xf32>,
      %c0_57 = arith.constant 0 : index
      %c0_58 = arith.constant 0 : index
      %c0_59 = arith.constant 0 : index
      %89 = vector.load %arg2[%c0_57, %c0_58, %c0_59] : memref<1x4x1024xbf16, #tpu.memory_space<vmem>>, vector<1x4x1024xbf16>
      %90 = vector.shape_cast %89 : vector<1x4x1024xbf16> to vector<4x1024xbf16>
      %91 = arith.extf %90 : vector<4x1024xbf16> to vector<4x1024xf32>
      %c0_60 = arith.constant 0 : index
      %c1024_61 = arith.constant 1024 : index
      %92 = vector.load %arg9[%c0_60, %c1024_61] : memref<4x2048xf32, #tpu.memory_space<vmem>>, vector<4x1024xf32>
      tpu.vector_store %arg9[%c0_60, %c1024_61], %91 {strides = array<i32>} : memref<4x2048xf32, #tpu.memory_space<vmem>>, vector<4x1024xf32>,
    } else {
    }
    %c0 = arith.constant 0 : index
    %c0_1 = arith.constant 0 : index
    %c0_2 = arith.constant 0 : index
    %3 = vector.load %arg3[%c0, %c0_1, %c0_2] : memref<1x4x1024xbf16, #tpu.memory_space<vmem>>, vector<1x4x1024xbf16>
    %4 = vector.shape_cast %3 : vector<1x4x1024xbf16> to vector<4x1024xbf16>
    %5 = arith.extf %4 : vector<4x1024xbf16> to vector<4x1024xf32>
    %c0_3 = arith.constant 0 : index
    %c0_4 = arith.constant 0 : index
    %6 = vector.load %arg9[%c0_3, %c0_4] : memref<4x2048xf32, #tpu.memory_space<vmem>>, vector<4x2048xf32>
    %7 = tpu.concatenate %6, %5 in 1 : vector<4x2048xf32>, vector<4x1024xf32> -> vector<4x3072xf32>
    %8 = vector.extract_strided_slice %7 {offsets = [0, 913], sizes = [4, 1024], strides = [1, 1]} : vector<4x3072xf32> to vector<4x1024xf32>
    %c0_5 = arith.constant 0 : index
    %c0_6 = arith.constant 0 : index
    %9 = vector.load %arg10[%c0_5, %c0_6] : memref<108x1024xf32, #tpu.memory_space<vmem>>, vector<4x1024xf32>
    tpu.vector_store %arg10[%c0_5, %c0_6], %8 {strides = array<i32>} : memref<108x1024xf32, #tpu.memory_space<vmem>>, vector<4x1024xf32>,
    %10 = vector.extract_strided_slice %7 {offsets = [0, 914], sizes = [4, 1024], strides = [1, 1]} : vector<4x3072xf32> to vector<4x1024xf32>
    %c4 = arith.constant 4 : index
    %c0_7 = arith.constant 0 : index
    %11 = vector.load %arg10[%c4, %c0_7] : memref<108x1024xf32, #tpu.memory_space<vmem>>, vector<4x1024xf32>
    tpu.vector_store %arg10[%c4, %c0_7], %10 {strides = array<i32>} : memref<108x1024xf32, #tpu.memory_space<vmem>>, vector<4x1024xf32>,
    %12 = vector.extract_strided_slice %7 {offsets = [0, 915], sizes = [4, 1024], strides = [1, 1]} : vector<4x3072xf32> to vector<4x1024xf32>
    %c8 = arith.constant 8 : index
    %c0_8 = arith.constant 0 : index
    %13 = vector.load %arg10[%c8, %c0_8] : memref<108x1024xf32, #tpu.memory_space<vmem>>, vector<4x1024xf32>
    tpu.vector_store %arg10[%c8, %c0_8], %12 {strides = array<i32>} : memref<108x1024xf32, #tpu.memory_space<vmem>>, vector<4x1024xf32>,
    %14 = vector.extract_strided_slice %7 {offsets = [0, 923], sizes = [4, 1024], strides = [1, 1]} : vector<4x3072xf32> to vector<4x1024xf32>
    %c12 = arith.constant 12 : index
    %c0_9 = arith.constant 0 : index
    %15 = vector.load %arg10[%c12, %c0_9] : memref<108x1024xf32, #tpu.memory_space<vmem>>, vector<4x1024xf32>
    tpu.vector_store %arg10[%c12, %c0_9], %14 {strides = array<i32>} : memref<108x1024xf32, #tpu.memory_space<vmem>>, vector<4x1024xf32>,
    %16 = vector.extract_strided_slice %7 {offsets = [0, 924], sizes = [4, 1024], strides = [1, 1]} : vector<4x3072xf32> to vector<4x1024xf32>
    %c16 = arith.constant 16 : index
    %c0_10 = arith.constant 0 : index
    %17 = vector.load %arg10[%c16, %c0_10] : memref<108x1024xf32, #tpu.memory_space<vmem>>, vector<4x1024xf32>
    tpu.vector_store %arg10[%c16, %c0_10], %16 {strides = array<i32>} : memref<108x1024xf32, #tpu.memory_space<vmem>>, vector<4x1024xf32>,
    %18 = vector.extract_strided_slice %7 {offsets = [0, 925], sizes = [4, 1024], strides = [1, 1]} : vector<4x3072xf32> to vector<4x1024xf32>
    %c20 = arith.constant 20 : index
    %c0_11 = arith.constant 0 : index
    %19 = vector.load %arg10[%c20, %c0_11] : memref<108x1024xf32, #tpu.memory_space<vmem>>, vector<4x1024xf32>
    tpu.vector_store %arg10[%c20, %c0_11], %18 {strides = array<i32>} : memref<108x1024xf32, #tpu.memory_space<vmem>>, vector<4x1024xf32>,
    %20 = vector.extract_strided_slice %7 {offsets = [0, 933], sizes = [4, 1024], strides = [1, 1]} : vector<4x3072xf32> to vector<4x1024xf32>
    %c24 = arith.constant 24 : index
    %c0_12 = arith.constant 0 : index
    %21 = vector.load %arg10[%c24, %c0_12] : memref<108x1024xf32, #tpu.memory_space<vmem>>, vector<4x1024xf32>
    tpu.vector_store %arg10[%c24, %c0_12], %20 {strides = array<i32>} : memref<108x1024xf32, #tpu.memory_space<vmem>>, vector<4x1024xf32>,
    %22 = vector.extract_strided_slice %7 {offsets = [0, 934], sizes = [4, 1024], strides = [1, 1]} : vector<4x3072xf32> to vector<4x1024xf32>
    %c28 = arith.constant 28 : index
    %c0_13 = arith.constant 0 : index
    %23 = vector.load %arg10[%c28, %c0_13] : memref<108x1024xf32, #tpu.memory_space<vmem>>, vector<4x1024xf32>
    tpu.vector_store %arg10[%c28, %c0_13], %22 {strides = array<i32>} : memref<108x1024xf32, #tpu.memory_space<vmem>>, vector<4x1024xf32>,
    %24 = vector.extract_strided_slice %7 {offsets = [0, 935], sizes = [4, 1024], strides = [1, 1]} : vector<4x3072xf32> to vector<4x1024xf32>
    %c32 = arith.constant 32 : index
    %c0_14 = arith.constant 0 : index
    %25 = vector.load %arg10[%c32, %c0_14] : memref<108x1024xf32, #tpu.memory_space<vmem>>, vector<4x1024xf32>
    tpu.vector_store %arg10[%c32, %c0_14], %24 {strides = array<i32>} : memref<108x1024xf32, #tpu.memory_space<vmem>>, vector<4x1024xf32>,
    %26 = vector.extract_strided_slice %7 {offsets = [0, 1013], sizes = [4, 1024], strides = [1, 1]} : vector<4x3072xf32> to vector<4x1024xf32>
    %c36 = arith.constant 36 : index
    %c0_15 = arith.constant 0 : index
    %27 = vector.load %arg10[%c36, %c0_15] : memref<108x1024xf32, #tpu.memory_space<vmem>>, vector<4x1024xf32>
    tpu.vector_store %arg10[%c36, %c0_15], %26 {strides = array<i32>} : memref<108x1024xf32, #tpu.memory_space<vmem>>, vector<4x1024xf32>,
    %28 = vector.extract_strided_slice %7 {offsets = [0, 1014], sizes = [4, 1024], strides = [1, 1]} : vector<4x3072xf32> to vector<4x1024xf32>
    %c40 = arith.constant 40 : index
    %c0_16 = arith.constant 0 : index
    %29 = vector.load %arg10[%c40, %c0_16] : memref<108x1024xf32, #tpu.memory_space<vmem>>, vector<4x1024xf32>
    tpu.vector_store %arg10[%c40, %c0_16], %28 {strides = array<i32>} : memref<108x1024xf32, #tpu.memory_space<vmem>>, vector<4x1024xf32>,
    %30 = vector.extract_strided_slice %7 {offsets = [0, 1015], sizes = [4, 1024], strides = [1, 1]} : vector<4x3072xf32> to vector<4x1024xf32>
    %c44 = arith.constant 44 : index
    %c0_17 = arith.constant 0 : index
    %31 = vector.load %arg10[%c44, %c0_17] : memref<108x1024xf32, #tpu.memory_space<vmem>>, vector<4x1024xf32>
    tpu.vector_store %arg10[%c44, %c0_17], %30 {strides = array<i32>} : memref<108x1024xf32, #tpu.memory_space<vmem>>, vector<4x1024xf32>,
    %32 = vector.extract_strided_slice %7 {offsets = [0, 1023], sizes = [4, 1024], strides = [1, 1]} : vector<4x3072xf32> to vector<4x1024xf32>
    %c48 = arith.constant 48 : index
    %c0_18 = arith.constant 0 : index
    %33 = vector.load %arg10[%c48, %c0_18] : memref<108x1024xf32, #tpu.memory_space<vmem>>, vector<4x1024xf32>
    tpu.vector_store %arg10[%c48, %c0_18], %32 {strides = array<i32>} : memref<108x1024xf32, #tpu.memory_space<vmem>>, vector<4x1024xf32>,
    %34 = vector.extract_strided_slice %7 {offsets = [0, 1024], sizes = [4, 1024], strides = [1, 1]} : vector<4x3072xf32> to vector<4x1024xf32>
    %c52 = arith.constant 52 : index
    %c0_19 = arith.constant 0 : index
    %35 = vector.load %arg10[%c52, %c0_19] : memref<108x1024xf32, #tpu.memory_space<vmem>>, vector<4x1024xf32>
    tpu.vector_store %arg10[%c52, %c0_19], %34 {strides = array<i32>} : memref<108x1024xf32, #tpu.memory_space<vmem>>, vector<4x1024xf32>,
    %36 = vector.extract_strided_slice %7 {offsets = [0, 1025], sizes = [4, 1024], strides = [1, 1]} : vector<4x3072xf32> to vector<4x1024xf32>
    %c56 = arith.constant 56 : index
    %c0_20 = arith.constant 0 : index
    %37 = vector.load %arg10[%c56, %c0_20] : memref<108x1024xf32, #tpu.memory_space<vmem>>, vector<4x1024xf32>
    tpu.vector_store %arg10[%c56, %c0_20], %36 {strides = array<i32>} : memref<108x1024xf32, #tpu.memory_space<vmem>>, vector<4x1024xf32>,
    %38 = vector.extract_strided_slice %7 {offsets = [0, 1033], sizes = [4, 1024], strides = [1, 1]} : vector<4x3072xf32> to vector<4x1024xf32>
    %c60 = arith.constant 60 : index
    %c0_21 = arith.constant 0 : index
    %39 = vector.load %arg10[%c60, %c0_21] : memref<108x1024xf32, #tpu.memory_space<vmem>>, vector<4x1024xf32>
    tpu.vector_store %arg10[%c60, %c0_21], %38 {strides = array<i32>} : memref<108x1024xf32, #tpu.memory_space<vmem>>, vector<4x1024xf32>,
    %40 = vector.extract_strided_slice %7 {offsets = [0, 1034], sizes = [4, 1024], strides = [1, 1]} : vector<4x3072xf32> to vector<4x1024xf32>
    %c64 = arith.constant 64 : index
    %c0_22 = arith.constant 0 : index
    %41 = vector.load %arg10[%c64, %c0_22] : memref<108x1024xf32, #tpu.memory_space<vmem>>, vector<4x1024xf32>
    tpu.vector_store %arg10[%c64, %c0_22], %40 {strides = array<i32>} : memref<108x1024xf32, #tpu.memory_space<vmem>>, vector<4x1024xf32>,
    %42 = vector.extract_strided_slice %7 {offsets = [0, 1035], sizes = [4, 1024], strides = [1, 1]} : vector<4x3072xf32> to vector<4x1024xf32>
    %c68 = arith.constant 68 : index
    %c0_23 = arith.constant 0 : index
    %43 = vector.load %arg10[%c68, %c0_23] : memref<108x1024xf32, #tpu.memory_space<vmem>>, vector<4x1024xf32>
    tpu.vector_store %arg10[%c68, %c0_23], %42 {strides = array<i32>} : memref<108x1024xf32, #tpu.memory_space<vmem>>, vector<4x1024xf32>,
    %44 = vector.extract_strided_slice %7 {offsets = [0, 1113], sizes = [4, 1024], strides = [1, 1]} : vector<4x3072xf32> to vector<4x1024xf32>
    %c72 = arith.constant 72 : index
    %c0_24 = arith.constant 0 : index
    %45 = vector.load %arg10[%c72, %c0_24] : memref<108x1024xf32, #tpu.memory_space<vmem>>, vector<4x1024xf32>
    tpu.vector_store %arg10[%c72, %c0_24], %44 {strides = array<i32>} : memref<108x1024xf32, #tpu.memory_space<vmem>>, vector<4x1024xf32>,
    %46 = vector.extract_strided_slice %7 {offsets = [0, 1114], sizes = [4, 1024], strides = [1, 1]} : vector<4x3072xf32> to vector<4x1024xf32>
    %c76 = arith.constant 76 : index
    %c0_25 = arith.constant 0 : index
    %47 = vector.load %arg10[%c76, %c0_25] : memref<108x1024xf32, #tpu.memory_space<vmem>>, vector<4x1024xf32>
    tpu.vector_store %arg10[%c76, %c0_25], %46 {strides = array<i32>} : memref<108x1024xf32, #tpu.memory_space<vmem>>, vector<4x1024xf32>,
    %48 = vector.extract_strided_slice %7 {offsets = [0, 1115], sizes = [4, 1024], strides = [1, 1]} : vector<4x3072xf32> to vector<4x1024xf32>
    %c80 = arith.constant 80 : index
    %c0_26 = arith.constant 0 : index
    %49 = vector.load %arg10[%c80, %c0_26] : memref<108x1024xf32, #tpu.memory_space<vmem>>, vector<4x1024xf32>
    tpu.vector_store %arg10[%c80, %c0_26], %48 {strides = array<i32>} : memref<108x1024xf32, #tpu.memory_space<vmem>>, vector<4x1024xf32>,
    %50 = vector.extract_strided_slice %7 {offsets = [0, 1123], sizes = [4, 1024], strides = [1, 1]} : vector<4x3072xf32> to vector<4x1024xf32>
    %c84 = arith.constant 84 : index
    %c0_27 = arith.constant 0 : index
    %51 = vector.load %arg10[%c84, %c0_27] : memref<108x1024xf32, #tpu.memory_space<vmem>>, vector<4x1024xf32>
    tpu.vector_store %arg10[%c84, %c0_27], %50 {strides = array<i32>} : memref<108x1024xf32, #tpu.memory_space<vmem>>, vector<4x1024xf32>,
    %52 = vector.extract_strided_slice %7 {offsets = [0, 1124], sizes = [4, 1024], strides = [1, 1]} : vector<4x3072xf32> to vector<4x1024xf32>
    %c88 = arith.constant 88 : index
    %c0_28 = arith.constant 0 : index
    %53 = vector.load %arg10[%c88, %c0_28] : memref<108x1024xf32, #tpu.memory_space<vmem>>, vector<4x1024xf32>
    tpu.vector_store %arg10[%c88, %c0_28], %52 {strides = array<i32>} : memref<108x1024xf32, #tpu.memory_space<vmem>>, vector<4x1024xf32>,
    %54 = vector.extract_strided_slice %7 {offsets = [0, 1125], sizes = [4, 1024], strides = [1, 1]} : vector<4x3072xf32> to vector<4x1024xf32>
    %c92 = arith.constant 92 : index
    %c0_29 = arith.constant 0 : index
    %55 = vector.load %arg10[%c92, %c0_29] : memref<108x1024xf32, #tpu.memory_space<vmem>>, vector<4x1024xf32>
    tpu.vector_store %arg10[%c92, %c0_29], %54 {strides = array<i32>} : memref<108x1024xf32, #tpu.memory_space<vmem>>, vector<4x1024xf32>,
    %56 = vector.extract_strided_slice %7 {offsets = [0, 1133], sizes = [4, 1024], strides = [1, 1]} : vector<4x3072xf32> to vector<4x1024xf32>
    %c96 = arith.constant 96 : index
    %c0_30 = arith.constant 0 : index
    %57 = vector.load %arg10[%c96, %c0_30] : memref<108x1024xf32, #tpu.memory_space<vmem>>, vector<4x1024xf32>
    tpu.vector_store %arg10[%c96, %c0_30], %56 {strides = array<i32>} : memref<108x1024xf32, #tpu.memory_space<vmem>>, vector<4x1024xf32>,
    %58 = vector.extract_strided_slice %7 {offsets = [0, 1134], sizes = [4, 1024], strides = [1, 1]} : vector<4x3072xf32> to vector<4x1024xf32>
    %c100 = arith.constant 100 : index
    %c0_31 = arith.constant 0 : index
    %59 = vector.load %arg10[%c100, %c0_31] : memref<108x1024xf32, #tpu.memory_space<vmem>>, vector<4x1024xf32>
    tpu.vector_store %arg10[%c100, %c0_31], %58 {strides = array<i32>} : memref<108x1024xf32, #tpu.memory_space<vmem>>, vector<4x1024xf32>,
    %60 = vector.extract_strided_slice %7 {offsets = [0, 1135], sizes = [4, 1024], strides = [1, 1]} : vector<4x3072xf32> to vector<4x1024xf32>
    %c104 = arith.constant 104 : index
    %c0_32 = arith.constant 0 : index
    %61 = vector.load %arg10[%c104, %c0_32] : memref<108x1024xf32, #tpu.memory_space<vmem>>, vector<4x1024xf32>
    tpu.vector_store %arg10[%c104, %c0_32], %60 {strides = array<i32>} : memref<108x1024xf32, #tpu.memory_space<vmem>>, vector<4x1024xf32>,
    %c0_33 = arith.constant 0 : index
    %c0_34 = arith.constant 0 : index
    %62 = vector.load %arg4[%c0_33, %c0_34] : memref<4x108xf32, #tpu.memory_space<vmem>>, vector<4x108xf32>
    %c0_35 = arith.constant 0 : index
    %c0_36 = arith.constant 0 : index
    %63 = vector.load %arg10[%c0_35, %c0_36] : memref<108x1024xf32, #tpu.memory_space<vmem>>, vector<108x1024xf32>
    %cst = arith.constant dense<0.000000e+00> : vector<4x1024xf32>
    %64 = tpu.matmul %62, %63, %cst {dimension_numbers = #tpu.dot_dimension_numbers<[1], [0], [0], [1], [0, 0, 1, 1], [], []>} : vector<4x108xf32>, vector<108x1024xf32>, vector<4x1024xf32> -> vector<4x1024xf32>
    %c0_37 = arith.constant 0 : index
    %c0_38 = arith.constant 0 : index
    %65 = vector.load %arg5[%c0_37, %c0_38] : memref<4x1xf32, #tpu.memory_space<vmem>>, vector<4x1xf32>
    %66 = vector.broadcast %65 : vector<4x1xf32> to vector<4x1024xf32>
    %67 = arith.mulf %64, %66 : vector<4x1024xf32>
    %c0_39 = arith.constant 0 : index
    %c0_40 = arith.constant 0 : index
    %68 = vector.load %arg6[%c0_39, %c0_40] : memref<4x1xf32, #tpu.memory_space<vmem>>, vector<4x1xf32>
    %69 = vector.broadcast %68 : vector<4x1xf32> to vector<4x1024xf32>
    %70 = arith.addf %67, %69 : vector<4x1024xf32>
    %cst_41 = arith.constant 0.000000e+00 : f32
    %71 = vector.broadcast %cst_41 : f32 to vector<4x1024xf32>
    %72 = arith.maximumf %70, %71 : vector<4x1024xf32>
    %c0_42 = arith.constant 0 : index
    %c0_43 = arith.constant 0 : index
    %73 = vector.load %arg7[%c0_42, %c0_43] : memref<1x1024xbf16, #tpu.memory_space<vmem>>, vector<1x1024xbf16>
    %cst_44 = arith.constant 0.000000e+00 : bf16
    %74 = vector.broadcast %cst_44 : bf16 to vector<1x1024xbf16>
    %75 = arith.cmpf ogt, %73, %74 : vector<1x1024xbf16>
    %cst_45 = arith.constant 0.000000e+00 : f32
    %76 = vector.shape_cast %75 : vector<1x1024xi1> to vector<1x1024xi1>
    %77 = vector.broadcast %76 : vector<1x1024xi1> to vector<4x1024xi1>
    %78 = vector.broadcast %cst_45 : f32 to vector<4x1024xf32>
    %79 = arith.select %77, %72, %78 : vector<4x1024xi1>, vector<4x1024xf32>
    %80 = arith.truncf %79 : vector<4x1024xf32> to vector<4x1024xbf16>
    %c0_46 = arith.constant 0 : index
    %c0_47 = arith.constant 0 : index
    %c0_48 = arith.constant 0 : index
    %81 = vector.load %arg8[%c0_46, %c0_47, %c0_48] : memref<1x4x1024xbf16, #tpu.memory_space<vmem>>, vector<1x4x1024xbf16>
    %82 = vector.shape_cast %81 : vector<1x4x1024xbf16> to vector<4x1024xbf16>
    %83 = vector.shape_cast %80 : vector<4x1024xbf16> to vector<1x4x1024xbf16>
    tpu.vector_store %arg8[%c0_46, %c0_47, %c0_48], %83 {strides = array<i32>} : memref<1x4x1024xbf16, #tpu.memory_space<vmem>>, vector<1x4x1024xbf16>,
    %c0_49 = arith.constant 0 : index
    %c1024 = arith.constant 1024 : index
    %84 = vector.load %arg9[%c0_49, %c1024] : memref<4x2048xf32, #tpu.memory_space<vmem>>, vector<4x1024xf32>
    %c0_50 = arith.constant 0 : index
    %c0_51 = arith.constant 0 : index
    %85 = vector.load %arg9[%c0_50, %c0_51] : memref<4x2048xf32, #tpu.memory_space<vmem>>, vector<4x1024xf32>
    tpu.vector_store %arg9[%c0_50, %c0_51], %84 {strides = array<i32>} : memref<4x2048xf32, #tpu.memory_space<vmem>>, vector<4x1024xf32>,
    %c0_52 = arith.constant 0 : index
    %c1024_53 = arith.constant 1024 : index
    %86 = vector.load %arg9[%c0_52, %c1024_53] : memref<4x2048xf32, #tpu.memory_space<vmem>>, vector<4x1024xf32>
    tpu.vector_store %arg9[%c0_52, %c1024_53], %5 {strides = array<i32>} : memref<4x2048xf32, #tpu.memory_space<vmem>>, vector<4x1024xf32>,
    return
  }
  func.func @transform_0(%arg0: i32, %arg1: i32) -> (i32, i32, i32) {
    %c0_i32 = arith.constant 0 : i32
    %c0_i32_0 = arith.constant 0 : i32
    %c0_i32_1 = arith.constant 0 : i32
    return %arg0, %c0_i32, %c0_i32_0 : i32, i32, i32
  }
  func.func @transform_1(%arg0: i32, %arg1: i32) -> (i32, i32, i32) {
    %c1_i32 = arith.constant 1 : i32
    %0 = arith.addi %arg1, %c1_i32 : i32
    %c0_i32 = arith.constant 0 : i32
    %c0_i32_0 = arith.constant 0 : i32
    return %arg0, %c0_i32, %0 : i32, i32, i32
  }
  func.func @transform_2(%arg0: i32, %arg1: i32) -> (i32, i32) {
    %c0_i32 = arith.constant 0 : i32
    %c0_i32_0 = arith.constant 0 : i32
    %c0_i32_1 = arith.constant 0 : i32
    return %c0_i32, %c0_i32_0 : i32, i32
  }
  func.func @transform_3(%arg0: i32, %arg1: i32) -> (i32, i32) {
    %c0_i32 = arith.constant 0 : i32
    %c0_i32_0 = arith.constant 0 : i32
    %c0_i32_1 = arith.constant 0 : i32
    return %c0_i32, %c0_i32_0 : i32, i32
  }
  func.func @transform_4(%arg0: i32, %arg1: i32) -> (i32, i32) {
    %c0_i32 = arith.constant 0 : i32
    %c0_i32_0 = arith.constant 0 : i32
    %c0_i32_1 = arith.constant 0 : i32
    return %c0_i32, %c0_i32_0 : i32, i32
  }
  func.func @transform_5(%arg0: i32, %arg1: i32) -> (i32, i32) {
    %c0_i32 = arith.constant 0 : i32
    %c0_i32_0 = arith.constant 0 : i32
    return %c0_i32, %arg1 : i32, i32
  }
  func.func @transform_6(%arg0: i32, %arg1: i32) -> (i32, i32, i32) {
    %c0_i32 = arith.constant 0 : i32
    %c0_i32_0 = arith.constant 0 : i32
    return %arg0, %c0_i32, %arg1 : i32, i32, i32
  }
}

module attributes {stable_mosaic.version = 11 : i64} {
  func.func @kernel(%arg0: i32, %arg1: i32, %arg2: memref<1x4x1024xbf16, #tpu.memory_space<vmem>>, %arg3: memref<1x4x1024xbf16, #tpu.memory_space<vmem>>, %arg4: memref<4x108xf32, #tpu.memory_space<vmem>>, %arg5: memref<4x1xf32, #tpu.memory_space<vmem>>, %arg6: memref<4x1xf32, #tpu.memory_space<vmem>>, %arg7: memref<1x1024xbf16, #tpu.memory_space<vmem>>, %arg8: memref<1x4x1024xbf16, #tpu.memory_space<vmem>>, %arg9: memref<1x4x1024xf32, #tpu.memory_space<vmem>>, %arg10: memref<4x2048xf32, #tpu.memory_space<vmem>>, %arg11: memref<108x1024xf32, #tpu.memory_space<vmem>>) attributes {dimension_semantics = [#tpu.dimension_semantics<parallel>, #tpu.dimension_semantics<arbitrary>], iteration_bounds = array<i64: 2, 1>, scalar_prefetch = 0 : i64, scratch_operands = 2 : i64, tpu.core_type = #tpu.core_type<tc>, window_params = [{transform_indices = @transform_0, window_bounds = array<i64: 1, 4, 1024>}, {transform_indices = @transform_1, window_bounds = array<i64: 1, 4, 1024>}, {pipeline_mode = #tpu.pipeline_mode<synchronous>, transform_indices = @transform_2, window_bounds = array<i64: 4, 108>}, {pipeline_mode = #tpu.pipeline_mode<synchronous>, transform_indices = @transform_3, window_bounds = array<i64: 4, 1>}, {pipeline_mode = #tpu.pipeline_mode<synchronous>, transform_indices = @transform_4, window_bounds = array<i64: 4, 1>}, {transform_indices = @transform_5, window_bounds = array<i64: 1, 1024>}, {transform_indices = @transform_6, window_bounds = array<i64: 1, 4, 1024>}, {transform_indices = @transform_7, window_bounds = array<i64: 1, 4, 1024>}]} {
    %c0_i32 = arith.constant 0 : i32
    %0 = arith.cmpi eq, %arg1, %c0_i32 : i32
    %1 = arith.extui %0 : i1 to i32
    %c0_i32_0 = arith.constant 0 : i32
    %2 = arith.cmpi ne, %1, %c0_i32_0 : i32
    scf.if %2 {
      %cst_57 = arith.constant 0.000000e+00 : f32
      %90 = vector.broadcast %cst_57 : f32 to vector<4x1024xf32>
      %c0_58 = arith.constant 0 : index
      %c0_59 = arith.constant 0 : index
      %91 = vector.load %arg10[%c0_58, %c0_59] : memref<4x2048xf32, #tpu.memory_space<vmem>>, vector<4x1024xf32>
      tpu.vector_store %arg10[%c0_58, %c0_59], %90 {strides = array<i32>} : memref<4x2048xf32, #tpu.memory_space<vmem>>, vector<4x1024xf32>,
      %c0_60 = arith.constant 0 : index
      %c0_61 = arith.constant 0 : index
      %c0_62 = arith.constant 0 : index
      %92 = vector.load %arg2[%c0_60, %c0_61, %c0_62] : memref<1x4x1024xbf16, #tpu.memory_space<vmem>>, vector<1x4x1024xbf16>
      %93 = vector.shape_cast %92 : vector<1x4x1024xbf16> to vector<4x1024xbf16>
      %94 = arith.extf %93 : vector<4x1024xbf16> to vector<4x1024xf32>
      %c0_63 = arith.constant 0 : index
      %c1024_64 = arith.constant 1024 : index
      %95 = vector.load %arg10[%c0_63, %c1024_64] : memref<4x2048xf32, #tpu.memory_space<vmem>>, vector<4x1024xf32>
      tpu.vector_store %arg10[%c0_63, %c1024_64], %94 {strides = array<i32>} : memref<4x2048xf32, #tpu.memory_space<vmem>>, vector<4x1024xf32>,
    } else {
    }
    %c0 = arith.constant 0 : index
    %c0_1 = arith.constant 0 : index
    %c0_2 = arith.constant 0 : index
    %3 = vector.load %arg3[%c0, %c0_1, %c0_2] : memref<1x4x1024xbf16, #tpu.memory_space<vmem>>, vector<1x4x1024xbf16>
    %4 = vector.shape_cast %3 : vector<1x4x1024xbf16> to vector<4x1024xbf16>
    %5 = arith.extf %4 : vector<4x1024xbf16> to vector<4x1024xf32>
    %c0_3 = arith.constant 0 : index
    %c0_4 = arith.constant 0 : index
    %6 = vector.load %arg10[%c0_3, %c0_4] : memref<4x2048xf32, #tpu.memory_space<vmem>>, vector<4x2048xf32>
    %7 = tpu.concatenate %6, %5 in 1 : vector<4x2048xf32>, vector<4x1024xf32> -> vector<4x3072xf32>
    %8 = vector.extract_strided_slice %7 {offsets = [0, 913], sizes = [4, 1024], strides = [1, 1]} : vector<4x3072xf32> to vector<4x1024xf32>
    %c0_5 = arith.constant 0 : index
    %c0_6 = arith.constant 0 : index
    %9 = vector.load %arg11[%c0_5, %c0_6] : memref<108x1024xf32, #tpu.memory_space<vmem>>, vector<4x1024xf32>
    tpu.vector_store %arg11[%c0_5, %c0_6], %8 {strides = array<i32>} : memref<108x1024xf32, #tpu.memory_space<vmem>>, vector<4x1024xf32>,
    %10 = vector.extract_strided_slice %7 {offsets = [0, 914], sizes = [4, 1024], strides = [1, 1]} : vector<4x3072xf32> to vector<4x1024xf32>
    %c4 = arith.constant 4 : index
    %c0_7 = arith.constant 0 : index
    %11 = vector.load %arg11[%c4, %c0_7] : memref<108x1024xf32, #tpu.memory_space<vmem>>, vector<4x1024xf32>
    tpu.vector_store %arg11[%c4, %c0_7], %10 {strides = array<i32>} : memref<108x1024xf32, #tpu.memory_space<vmem>>, vector<4x1024xf32>,
    %12 = vector.extract_strided_slice %7 {offsets = [0, 915], sizes = [4, 1024], strides = [1, 1]} : vector<4x3072xf32> to vector<4x1024xf32>
    %c8 = arith.constant 8 : index
    %c0_8 = arith.constant 0 : index
    %13 = vector.load %arg11[%c8, %c0_8] : memref<108x1024xf32, #tpu.memory_space<vmem>>, vector<4x1024xf32>
    tpu.vector_store %arg11[%c8, %c0_8], %12 {strides = array<i32>} : memref<108x1024xf32, #tpu.memory_space<vmem>>, vector<4x1024xf32>,
    %14 = vector.extract_strided_slice %7 {offsets = [0, 923], sizes = [4, 1024], strides = [1, 1]} : vector<4x3072xf32> to vector<4x1024xf32>
    %c12 = arith.constant 12 : index
    %c0_9 = arith.constant 0 : index
    %15 = vector.load %arg11[%c12, %c0_9] : memref<108x1024xf32, #tpu.memory_space<vmem>>, vector<4x1024xf32>
    tpu.vector_store %arg11[%c12, %c0_9], %14 {strides = array<i32>} : memref<108x1024xf32, #tpu.memory_space<vmem>>, vector<4x1024xf32>,
    %16 = vector.extract_strided_slice %7 {offsets = [0, 924], sizes = [4, 1024], strides = [1, 1]} : vector<4x3072xf32> to vector<4x1024xf32>
    %c16 = arith.constant 16 : index
    %c0_10 = arith.constant 0 : index
    %17 = vector.load %arg11[%c16, %c0_10] : memref<108x1024xf32, #tpu.memory_space<vmem>>, vector<4x1024xf32>
    tpu.vector_store %arg11[%c16, %c0_10], %16 {strides = array<i32>} : memref<108x1024xf32, #tpu.memory_space<vmem>>, vector<4x1024xf32>,
    %18 = vector.extract_strided_slice %7 {offsets = [0, 925], sizes = [4, 1024], strides = [1, 1]} : vector<4x3072xf32> to vector<4x1024xf32>
    %c20 = arith.constant 20 : index
    %c0_11 = arith.constant 0 : index
    %19 = vector.load %arg11[%c20, %c0_11] : memref<108x1024xf32, #tpu.memory_space<vmem>>, vector<4x1024xf32>
    tpu.vector_store %arg11[%c20, %c0_11], %18 {strides = array<i32>} : memref<108x1024xf32, #tpu.memory_space<vmem>>, vector<4x1024xf32>,
    %20 = vector.extract_strided_slice %7 {offsets = [0, 933], sizes = [4, 1024], strides = [1, 1]} : vector<4x3072xf32> to vector<4x1024xf32>
    %c24 = arith.constant 24 : index
    %c0_12 = arith.constant 0 : index
    %21 = vector.load %arg11[%c24, %c0_12] : memref<108x1024xf32, #tpu.memory_space<vmem>>, vector<4x1024xf32>
    tpu.vector_store %arg11[%c24, %c0_12], %20 {strides = array<i32>} : memref<108x1024xf32, #tpu.memory_space<vmem>>, vector<4x1024xf32>,
    %22 = vector.extract_strided_slice %7 {offsets = [0, 934], sizes = [4, 1024], strides = [1, 1]} : vector<4x3072xf32> to vector<4x1024xf32>
    %c28 = arith.constant 28 : index
    %c0_13 = arith.constant 0 : index
    %23 = vector.load %arg11[%c28, %c0_13] : memref<108x1024xf32, #tpu.memory_space<vmem>>, vector<4x1024xf32>
    tpu.vector_store %arg11[%c28, %c0_13], %22 {strides = array<i32>} : memref<108x1024xf32, #tpu.memory_space<vmem>>, vector<4x1024xf32>,
    %24 = vector.extract_strided_slice %7 {offsets = [0, 935], sizes = [4, 1024], strides = [1, 1]} : vector<4x3072xf32> to vector<4x1024xf32>
    %c32 = arith.constant 32 : index
    %c0_14 = arith.constant 0 : index
    %25 = vector.load %arg11[%c32, %c0_14] : memref<108x1024xf32, #tpu.memory_space<vmem>>, vector<4x1024xf32>
    tpu.vector_store %arg11[%c32, %c0_14], %24 {strides = array<i32>} : memref<108x1024xf32, #tpu.memory_space<vmem>>, vector<4x1024xf32>,
    %26 = vector.extract_strided_slice %7 {offsets = [0, 1013], sizes = [4, 1024], strides = [1, 1]} : vector<4x3072xf32> to vector<4x1024xf32>
    %c36 = arith.constant 36 : index
    %c0_15 = arith.constant 0 : index
    %27 = vector.load %arg11[%c36, %c0_15] : memref<108x1024xf32, #tpu.memory_space<vmem>>, vector<4x1024xf32>
    tpu.vector_store %arg11[%c36, %c0_15], %26 {strides = array<i32>} : memref<108x1024xf32, #tpu.memory_space<vmem>>, vector<4x1024xf32>,
    %28 = vector.extract_strided_slice %7 {offsets = [0, 1014], sizes = [4, 1024], strides = [1, 1]} : vector<4x3072xf32> to vector<4x1024xf32>
    %c40 = arith.constant 40 : index
    %c0_16 = arith.constant 0 : index
    %29 = vector.load %arg11[%c40, %c0_16] : memref<108x1024xf32, #tpu.memory_space<vmem>>, vector<4x1024xf32>
    tpu.vector_store %arg11[%c40, %c0_16], %28 {strides = array<i32>} : memref<108x1024xf32, #tpu.memory_space<vmem>>, vector<4x1024xf32>,
    %30 = vector.extract_strided_slice %7 {offsets = [0, 1015], sizes = [4, 1024], strides = [1, 1]} : vector<4x3072xf32> to vector<4x1024xf32>
    %c44 = arith.constant 44 : index
    %c0_17 = arith.constant 0 : index
    %31 = vector.load %arg11[%c44, %c0_17] : memref<108x1024xf32, #tpu.memory_space<vmem>>, vector<4x1024xf32>
    tpu.vector_store %arg11[%c44, %c0_17], %30 {strides = array<i32>} : memref<108x1024xf32, #tpu.memory_space<vmem>>, vector<4x1024xf32>,
    %32 = vector.extract_strided_slice %7 {offsets = [0, 1023], sizes = [4, 1024], strides = [1, 1]} : vector<4x3072xf32> to vector<4x1024xf32>
    %c48 = arith.constant 48 : index
    %c0_18 = arith.constant 0 : index
    %33 = vector.load %arg11[%c48, %c0_18] : memref<108x1024xf32, #tpu.memory_space<vmem>>, vector<4x1024xf32>
    tpu.vector_store %arg11[%c48, %c0_18], %32 {strides = array<i32>} : memref<108x1024xf32, #tpu.memory_space<vmem>>, vector<4x1024xf32>,
    %34 = vector.extract_strided_slice %7 {offsets = [0, 1024], sizes = [4, 1024], strides = [1, 1]} : vector<4x3072xf32> to vector<4x1024xf32>
    %c52 = arith.constant 52 : index
    %c0_19 = arith.constant 0 : index
    %35 = vector.load %arg11[%c52, %c0_19] : memref<108x1024xf32, #tpu.memory_space<vmem>>, vector<4x1024xf32>
    tpu.vector_store %arg11[%c52, %c0_19], %34 {strides = array<i32>} : memref<108x1024xf32, #tpu.memory_space<vmem>>, vector<4x1024xf32>,
    %36 = vector.extract_strided_slice %7 {offsets = [0, 1025], sizes = [4, 1024], strides = [1, 1]} : vector<4x3072xf32> to vector<4x1024xf32>
    %c56 = arith.constant 56 : index
    %c0_20 = arith.constant 0 : index
    %37 = vector.load %arg11[%c56, %c0_20] : memref<108x1024xf32, #tpu.memory_space<vmem>>, vector<4x1024xf32>
    tpu.vector_store %arg11[%c56, %c0_20], %36 {strides = array<i32>} : memref<108x1024xf32, #tpu.memory_space<vmem>>, vector<4x1024xf32>,
    %38 = vector.extract_strided_slice %7 {offsets = [0, 1033], sizes = [4, 1024], strides = [1, 1]} : vector<4x3072xf32> to vector<4x1024xf32>
    %c60 = arith.constant 60 : index
    %c0_21 = arith.constant 0 : index
    %39 = vector.load %arg11[%c60, %c0_21] : memref<108x1024xf32, #tpu.memory_space<vmem>>, vector<4x1024xf32>
    tpu.vector_store %arg11[%c60, %c0_21], %38 {strides = array<i32>} : memref<108x1024xf32, #tpu.memory_space<vmem>>, vector<4x1024xf32>,
    %40 = vector.extract_strided_slice %7 {offsets = [0, 1034], sizes = [4, 1024], strides = [1, 1]} : vector<4x3072xf32> to vector<4x1024xf32>
    %c64 = arith.constant 64 : index
    %c0_22 = arith.constant 0 : index
    %41 = vector.load %arg11[%c64, %c0_22] : memref<108x1024xf32, #tpu.memory_space<vmem>>, vector<4x1024xf32>
    tpu.vector_store %arg11[%c64, %c0_22], %40 {strides = array<i32>} : memref<108x1024xf32, #tpu.memory_space<vmem>>, vector<4x1024xf32>,
    %42 = vector.extract_strided_slice %7 {offsets = [0, 1035], sizes = [4, 1024], strides = [1, 1]} : vector<4x3072xf32> to vector<4x1024xf32>
    %c68 = arith.constant 68 : index
    %c0_23 = arith.constant 0 : index
    %43 = vector.load %arg11[%c68, %c0_23] : memref<108x1024xf32, #tpu.memory_space<vmem>>, vector<4x1024xf32>
    tpu.vector_store %arg11[%c68, %c0_23], %42 {strides = array<i32>} : memref<108x1024xf32, #tpu.memory_space<vmem>>, vector<4x1024xf32>,
    %44 = vector.extract_strided_slice %7 {offsets = [0, 1113], sizes = [4, 1024], strides = [1, 1]} : vector<4x3072xf32> to vector<4x1024xf32>
    %c72 = arith.constant 72 : index
    %c0_24 = arith.constant 0 : index
    %45 = vector.load %arg11[%c72, %c0_24] : memref<108x1024xf32, #tpu.memory_space<vmem>>, vector<4x1024xf32>
    tpu.vector_store %arg11[%c72, %c0_24], %44 {strides = array<i32>} : memref<108x1024xf32, #tpu.memory_space<vmem>>, vector<4x1024xf32>,
    %46 = vector.extract_strided_slice %7 {offsets = [0, 1114], sizes = [4, 1024], strides = [1, 1]} : vector<4x3072xf32> to vector<4x1024xf32>
    %c76 = arith.constant 76 : index
    %c0_25 = arith.constant 0 : index
    %47 = vector.load %arg11[%c76, %c0_25] : memref<108x1024xf32, #tpu.memory_space<vmem>>, vector<4x1024xf32>
    tpu.vector_store %arg11[%c76, %c0_25], %46 {strides = array<i32>} : memref<108x1024xf32, #tpu.memory_space<vmem>>, vector<4x1024xf32>,
    %48 = vector.extract_strided_slice %7 {offsets = [0, 1115], sizes = [4, 1024], strides = [1, 1]} : vector<4x3072xf32> to vector<4x1024xf32>
    %c80 = arith.constant 80 : index
    %c0_26 = arith.constant 0 : index
    %49 = vector.load %arg11[%c80, %c0_26] : memref<108x1024xf32, #tpu.memory_space<vmem>>, vector<4x1024xf32>
    tpu.vector_store %arg11[%c80, %c0_26], %48 {strides = array<i32>} : memref<108x1024xf32, #tpu.memory_space<vmem>>, vector<4x1024xf32>,
    %50 = vector.extract_strided_slice %7 {offsets = [0, 1123], sizes = [4, 1024], strides = [1, 1]} : vector<4x3072xf32> to vector<4x1024xf32>
    %c84 = arith.constant 84 : index
    %c0_27 = arith.constant 0 : index
    %51 = vector.load %arg11[%c84, %c0_27] : memref<108x1024xf32, #tpu.memory_space<vmem>>, vector<4x1024xf32>
    tpu.vector_store %arg11[%c84, %c0_27], %50 {strides = array<i32>} : memref<108x1024xf32, #tpu.memory_space<vmem>>, vector<4x1024xf32>,
    %52 = vector.extract_strided_slice %7 {offsets = [0, 1124], sizes = [4, 1024], strides = [1, 1]} : vector<4x3072xf32> to vector<4x1024xf32>
    %c88 = arith.constant 88 : index
    %c0_28 = arith.constant 0 : index
    %53 = vector.load %arg11[%c88, %c0_28] : memref<108x1024xf32, #tpu.memory_space<vmem>>, vector<4x1024xf32>
    tpu.vector_store %arg11[%c88, %c0_28], %52 {strides = array<i32>} : memref<108x1024xf32, #tpu.memory_space<vmem>>, vector<4x1024xf32>,
    %54 = vector.extract_strided_slice %7 {offsets = [0, 1125], sizes = [4, 1024], strides = [1, 1]} : vector<4x3072xf32> to vector<4x1024xf32>
    %c92 = arith.constant 92 : index
    %c0_29 = arith.constant 0 : index
    %55 = vector.load %arg11[%c92, %c0_29] : memref<108x1024xf32, #tpu.memory_space<vmem>>, vector<4x1024xf32>
    tpu.vector_store %arg11[%c92, %c0_29], %54 {strides = array<i32>} : memref<108x1024xf32, #tpu.memory_space<vmem>>, vector<4x1024xf32>,
    %56 = vector.extract_strided_slice %7 {offsets = [0, 1133], sizes = [4, 1024], strides = [1, 1]} : vector<4x3072xf32> to vector<4x1024xf32>
    %c96 = arith.constant 96 : index
    %c0_30 = arith.constant 0 : index
    %57 = vector.load %arg11[%c96, %c0_30] : memref<108x1024xf32, #tpu.memory_space<vmem>>, vector<4x1024xf32>
    tpu.vector_store %arg11[%c96, %c0_30], %56 {strides = array<i32>} : memref<108x1024xf32, #tpu.memory_space<vmem>>, vector<4x1024xf32>,
    %58 = vector.extract_strided_slice %7 {offsets = [0, 1134], sizes = [4, 1024], strides = [1, 1]} : vector<4x3072xf32> to vector<4x1024xf32>
    %c100 = arith.constant 100 : index
    %c0_31 = arith.constant 0 : index
    %59 = vector.load %arg11[%c100, %c0_31] : memref<108x1024xf32, #tpu.memory_space<vmem>>, vector<4x1024xf32>
    tpu.vector_store %arg11[%c100, %c0_31], %58 {strides = array<i32>} : memref<108x1024xf32, #tpu.memory_space<vmem>>, vector<4x1024xf32>,
    %60 = vector.extract_strided_slice %7 {offsets = [0, 1135], sizes = [4, 1024], strides = [1, 1]} : vector<4x3072xf32> to vector<4x1024xf32>
    %c104 = arith.constant 104 : index
    %c0_32 = arith.constant 0 : index
    %61 = vector.load %arg11[%c104, %c0_32] : memref<108x1024xf32, #tpu.memory_space<vmem>>, vector<4x1024xf32>
    tpu.vector_store %arg11[%c104, %c0_32], %60 {strides = array<i32>} : memref<108x1024xf32, #tpu.memory_space<vmem>>, vector<4x1024xf32>,
    %c0_33 = arith.constant 0 : index
    %c0_34 = arith.constant 0 : index
    %62 = vector.load %arg4[%c0_33, %c0_34] : memref<4x108xf32, #tpu.memory_space<vmem>>, vector<4x108xf32>
    %c0_35 = arith.constant 0 : index
    %c0_36 = arith.constant 0 : index
    %63 = vector.load %arg11[%c0_35, %c0_36] : memref<108x1024xf32, #tpu.memory_space<vmem>>, vector<108x1024xf32>
    %cst = arith.constant dense<0.000000e+00> : vector<4x1024xf32>
    %64 = tpu.matmul %62, %63, %cst {dimension_numbers = #tpu.dot_dimension_numbers<[1], [0], [0], [1], [0, 0, 1, 1], [], []>} : vector<4x108xf32>, vector<108x1024xf32>, vector<4x1024xf32> -> vector<4x1024xf32>
    %c0_37 = arith.constant 0 : index
    %c0_38 = arith.constant 0 : index
    %65 = vector.load %arg5[%c0_37, %c0_38] : memref<4x1xf32, #tpu.memory_space<vmem>>, vector<4x1xf32>
    %66 = vector.broadcast %65 : vector<4x1xf32> to vector<4x1024xf32>
    %67 = arith.mulf %64, %66 : vector<4x1024xf32>
    %c0_39 = arith.constant 0 : index
    %c0_40 = arith.constant 0 : index
    %68 = vector.load %arg6[%c0_39, %c0_40] : memref<4x1xf32, #tpu.memory_space<vmem>>, vector<4x1xf32>
    %69 = vector.broadcast %68 : vector<4x1xf32> to vector<4x1024xf32>
    %70 = arith.addf %67, %69 : vector<4x1024xf32>
    %c0_41 = arith.constant 0 : index
    %c0_42 = arith.constant 0 : index
    %c0_43 = arith.constant 0 : index
    %71 = vector.load %arg8[%c0_41, %c0_42, %c0_43] : memref<1x4x1024xbf16, #tpu.memory_space<vmem>>, vector<1x4x1024xbf16>
    %72 = vector.shape_cast %71 : vector<1x4x1024xbf16> to vector<4x1024xbf16>
    %73 = arith.extf %72 : vector<4x1024xbf16> to vector<4x1024xf32>
    %74 = arith.addf %70, %73 : vector<4x1024xf32>
    %cst_44 = arith.constant 0.000000e+00 : f32
    %75 = vector.broadcast %cst_44 : f32 to vector<4x1024xf32>
    %76 = arith.maximumf %74, %75 : vector<4x1024xf32>
    %c0_45 = arith.constant 0 : index
    %c0_46 = arith.constant 0 : index
    %77 = vector.load %arg7[%c0_45, %c0_46] : memref<1x1024xbf16, #tpu.memory_space<vmem>>, vector<1x1024xbf16>
    %cst_47 = arith.constant 0.000000e+00 : bf16
    %78 = vector.broadcast %cst_47 : bf16 to vector<1x1024xbf16>
    %79 = arith.cmpf ogt, %77, %78 : vector<1x1024xbf16>
    %cst_48 = arith.constant 0.000000e+00 : f32
    %80 = vector.shape_cast %79 : vector<1x1024xi1> to vector<1x1024xi1>
    %81 = vector.broadcast %80 : vector<1x1024xi1> to vector<4x1024xi1>
    %82 = vector.broadcast %cst_48 : f32 to vector<4x1024xf32>
    %83 = arith.select %81, %76, %82 : vector<4x1024xi1>, vector<4x1024xf32>
    %c0_49 = arith.constant 0 : index
    %c0_50 = arith.constant 0 : index
    %c0_51 = arith.constant 0 : index
    %84 = vector.load %arg9[%c0_49, %c0_50, %c0_51] : memref<1x4x1024xf32, #tpu.memory_space<vmem>>, vector<1x4x1024xf32>
    %85 = vector.shape_cast %84 : vector<1x4x1024xf32> to vector<4x1024xf32>
    %86 = vector.shape_cast %83 : vector<4x1024xf32> to vector<1x4x1024xf32>
    tpu.vector_store %arg9[%c0_49, %c0_50, %c0_51], %86 {strides = array<i32>} : memref<1x4x1024xf32, #tpu.memory_space<vmem>>, vector<1x4x1024xf32>,
    %c0_52 = arith.constant 0 : index
    %c1024 = arith.constant 1024 : index
    %87 = vector.load %arg10[%c0_52, %c1024] : memref<4x2048xf32, #tpu.memory_space<vmem>>, vector<4x1024xf32>
    %c0_53 = arith.constant 0 : index
    %c0_54 = arith.constant 0 : index
    %88 = vector.load %arg10[%c0_53, %c0_54] : memref<4x2048xf32, #tpu.memory_space<vmem>>, vector<4x1024xf32>
    tpu.vector_store %arg10[%c0_53, %c0_54], %87 {strides = array<i32>} : memref<4x2048xf32, #tpu.memory_space<vmem>>, vector<4x1024xf32>,
    %c0_55 = arith.constant 0 : index
    %c1024_56 = arith.constant 1024 : index
    %89 = vector.load %arg10[%c0_55, %c1024_56] : memref<4x2048xf32, #tpu.memory_space<vmem>>, vector<4x1024xf32>
    tpu.vector_store %arg10[%c0_55, %c1024_56], %5 {strides = array<i32>} : memref<4x2048xf32, #tpu.memory_space<vmem>>, vector<4x1024xf32>,
    return
  }
  func.func @transform_0(%arg0: i32, %arg1: i32) -> (i32, i32, i32) {
    %c0_i32 = arith.constant 0 : i32
    %c0_i32_0 = arith.constant 0 : i32
    %c0_i32_1 = arith.constant 0 : i32
    return %arg0, %c0_i32, %c0_i32_0 : i32, i32, i32
  }
  func.func @transform_1(%arg0: i32, %arg1: i32) -> (i32, i32, i32) {
    %c1_i32 = arith.constant 1 : i32
    %0 = arith.addi %arg1, %c1_i32 : i32
    %c0_i32 = arith.constant 0 : i32
    %c0_i32_0 = arith.constant 0 : i32
    return %arg0, %c0_i32, %0 : i32, i32, i32
  }
  func.func @transform_2(%arg0: i32, %arg1: i32) -> (i32, i32) {
    %c0_i32 = arith.constant 0 : i32
    %c0_i32_0 = arith.constant 0 : i32
    %c0_i32_1 = arith.constant 0 : i32
    return %c0_i32, %c0_i32_0 : i32, i32
  }
  func.func @transform_3(%arg0: i32, %arg1: i32) -> (i32, i32) {
    %c0_i32 = arith.constant 0 : i32
    %c0_i32_0 = arith.constant 0 : i32
    %c0_i32_1 = arith.constant 0 : i32
    return %c0_i32, %c0_i32_0 : i32, i32
  }
  func.func @transform_4(%arg0: i32, %arg1: i32) -> (i32, i32) {
    %c0_i32 = arith.constant 0 : i32
    %c0_i32_0 = arith.constant 0 : i32
    %c0_i32_1 = arith.constant 0 : i32
    return %c0_i32, %c0_i32_0 : i32, i32
  }
  func.func @transform_5(%arg0: i32, %arg1: i32) -> (i32, i32) {
    %c0_i32 = arith.constant 0 : i32
    %c0_i32_0 = arith.constant 0 : i32
    return %c0_i32, %arg1 : i32, i32
  }
  func.func @transform_6(%arg0: i32, %arg1: i32) -> (i32, i32, i32) {
    %c0_i32 = arith.constant 0 : i32
    %c0_i32_0 = arith.constant 0 : i32
    return %arg0, %c0_i32, %arg1 : i32, i32, i32
  }
  func.func @transform_7(%arg0: i32, %arg1: i32) -> (i32, i32, i32) {
    %c0_i32 = arith.constant 0 : i32
    %c0_i32_0 = arith.constant 0 : i32
    return %arg0, %c0_i32, %arg1 : i32, i32, i32
  }
}

</mosaic_0001>

<llo_original>
// kernel: block_forward.2
$region0: #{block_forward.2}
  #allocation0 [shape = 'u32[]', space=smem, size = 0x4, offset = 0x4, fixed_abs, tag = 'smem constant byte address 0x4 - core index']
  #allocation1 [shape = 'u32[72,128]{1,0:T(1,128)}', space=vmem, size = 0x9000, scoped, tag = 'internal scratch']
  #allocation2 [shape = 'f32[4,2048]{1,0:T(4,128)}', space=vmem, size = 0x8000, scoped, tag = 'scratch operand']
  #allocation3 [shape = 'f32[108,1024]{1,0:T(8,128)}', space=vmem, size = 0x70000, scoped, tag = 'scratch operand']
  %s0 = inlined_call_operand.vmem [shape: bf16[2,4,2048], index: 0, kind: input, shape index: {}, may-alias: {0,1}]
  %s1 = inlined_call_operand.vmem [shape: bf16[2,4,2048], index: 1, kind: input, shape index: {}, may-alias: {0,1}]
  %s2 = inlined_call_operand.vmem [shape: f32[4,108], index: 2, kind: input, shape index: {}]
  %s3 = inlined_call_operand.vmem [shape: f32[4,1], index: 3, kind: input, shape index: {}]
  %s4 = inlined_call_operand.vmem [shape: f32[4,1], index: 4, kind: input, shape index: {}]
  %s5 = inlined_call_operand.vmem [shape: bf16[1,1024], index: 5, kind: input, shape index: {}]
  %s6 = inlined_call_operand.vmem [shape: bf16[2,4,2048], index: 6, kind: output, shape index: {}]
  %s7 = sld [smem:[#allocation0]]
  $region61: #{block_forward.2} parent=0
    _
  %s9 = ssub.s32 1, %s7
  %s10 = scalar_select 0, %s9, %s7
  loop: start=0, step=1, limit=4
  $region2: #{block_forward.2} parent=0 // loop_pre_header
    _
  $region3: #{block_forward.2} parent=0 // loop_header
    %s12 = sphi 0, %s16
    %p13 = scmp.ge.s32.totalorder %s12, 4
    %s19 = sphi 0, %s31
    %s20 = sphi 0, %s27
    %s21 = sphi 0, %s19
    %s22 = sphi 0, %s20
    %s23 = sphi 0, %s21
    %s24 = sphi 0, %s22
    %s34 = sphi 0, %s36
    %s37 = sphi 0, %s34
    %s38 = sphi 0, %s37
    %s54 = sphi 0, %s38
    %s64 = sphi 0, %s66
    %s67 = sphi 0, %s64
    %s68 = sphi 0, %s67
    %s84 = sphi 0, %s68
    %s88 = sphi 0, %s88
    %s90 = sphi 0, %s88
    %s91 = sphi 0, %s90
    %s105 = sphi 0, %s91
    %s109 = sphi 0, %s109
    %s111 = sphi 0, %s109
    %s112 = sphi 0, %s111
    %s126 = sphi 0, %s112
    %s130 = sphi 0, %s130
    %s132 = sphi 0, %s130
    %s133 = sphi 0, %s132
    %s147 = sphi 0, %s133
    %s153 = sphi 0, %s155
    %s156 = sphi 0, %s153
    %s157 = sphi 0, %s156
    %s173 = sphi 0, %s157
    %s181 = sphi 0, %s183
    %s184 = sphi 0, %s181
    %s185 = sphi 0, %s184
    %s201 = sphi 0, %s185
  $region4: #{block_forward.2} parent=0 // loop_header_branch
    %15 = sbr.rel (%p13) target = $region8
  $region5: #{block_forward.2} parent=0 // loop_body
    %s17 = ssub.s32 %s12, 1
    %s18 = ssub.s32 %s12, 2
    %s25 = sadd.s32 1, %s20
    %p26 = scmp.ge.s32.totalorder %s25, 1
    %s27 = scalar_select %p26, 0, %s25
    %s28 = sadd.s32 1, %s19
    %s29 = scalar_select %p26, %s28, %s19
    %p30 = scmp.ge.s32.totalorder %s29, 2
    %s31 = scalar_select %p30, 0, %s29
    %s32 = ssub.s32 %s19, %s31
    %p33 = scmp.eq.s32.totalorder %s32, 0
    %s35 = sadd.s32 %s34, 1
    %s36 = scalar_select %p33, %s34, %s35
    %p39 = pneg %p33
    %p40 = scmp.eq.s32.totalorder %s12, 1
    %p41 = por %p39, %p40
    %p42 = scmp.ne.s32.totalorder %s34, %s37
    %p43 = scmp.eq.s32.totalorder %s12, 0
    %p44 = por %p42, %p43
    %p45 = scmp.ne.s32.totalorder %s34, %s37
    %p46 = scmp.eq.s32.totalorder %s17, 1
    %p47 = por %p45, %p46
    %p48 = scmp.ne.s32.totalorder %s37, %s38
    %p49 = scmp.eq.s32.totalorder %s17, 0
    %p50 = por %p48, %p49
    %p51 = scmp.ne.s32.totalorder %s37, %s38
    %p52 = scmp.eq.s32.totalorder %s18, 1
    %p53 = por %p51, %p52
    %p55 = scmp.ne.s32.totalorder %s38, %s54
    %p56 = scmp.eq.s32.totalorder %s18, 0
    %p57 = por %p55, %p56
    %s58 = sadd.s32 %s20, 1
    %s59 = sadd.s32 %s27, 1
    %s60 = ssub.s32 %s19, %s31
    %s61 = ssub.s32 %s58, %s59
    %s62 = sor.u32 %s60, %s61
    %p63 = scmp.eq.s32.totalorder %s62, 0
    %s65 = sadd.s32 %s64, 1
    %s66 = scalar_select %p63, %s64, %s65
    %p69 = pneg %p63
    %p70 = scmp.eq.s32.totalorder %s12, 1
    %p71 = por %p69, %p70
    %p72 = scmp.ne.s32.totalorder %s64, %s67
    %p73 = scmp.eq.s32.totalorder %s12, 0
    %p74 = por %p72, %p73
    %p75 = scmp.ne.s32.totalorder %s64, %s67
    %p76 = scmp.eq.s32.totalorder %s17, 1
    %p77 = por %p75, %p76
    %p78 = scmp.ne.s32.totalorder %s67, %s68
    %p79 = scmp.eq.s32.totalorder %s17, 0
    %p80 = por %p78, %p79
    %p81 = scmp.ne.s32.totalorder %s67, %s68
    %p82 = scmp.eq.s32.totalorder %s18, 1
    %p83 = por %p81, %p82
    %p85 = scmp.ne.s32.totalorder %s68, %s84
    %p86 = scmp.eq.s32.totalorder %s18, 0
    %p87 = por %p85, %p86
    %s89 = sadd.s32 %s88, 1
    %p92 = scmp.eq.s32.totalorder %s12, 1
    %p93 = scmp.ne.s32.totalorder %s88, %s90
    %p94 = scmp.eq.s32.totalorder %s12, 0
    %p95 = por %p93, %p94
    %p96 = scmp.ne.s32.totalorder %s88, %s90
    %p97 = scmp.eq.s32.totalorder %s17, 1
    %p98 = por %p96, %p97
    %p99 = scmp.ne.s32.totalorder %s90, %s91
    %p100 = scmp.eq.s32.totalorder %s17, 0
    %p101 = por %p99, %p100
    %p102 = scmp.ne.s32.totalorder %s90, %s91
    %p103 = scmp.eq.s32.totalorder %s18, 1
    %p104 = por %p102, %p103
    %p106 = scmp.ne.s32.totalorder %s91, %s105
    %p107 = scmp.eq.s32.totalorder %s18, 0
    %p108 = por %p106, %p107
    %s110 = sadd.s32 %s109, 1
    %p113 = scmp.eq.s32.totalorder %s12, 1
    %p114 = scmp.ne.s32.totalorder %s109, %s111
    %p115 = scmp.eq.s32.totalorder %s12, 0
    %p116 = por %p114, %p115
    %p117 = scmp.ne.s32.totalorder %s109, %s111
    %p118 = scmp.eq.s32.totalorder %s17, 1
    %p119 = por %p117, %p118
    %p120 = scmp.ne.s32.totalorder %s111, %s112
    %p121 = scmp.eq.s32.totalorder %s17, 0
    %p122 = por %p120, %p121
    %p123 = scmp.ne.s32.totalorder %s111, %s112
    %p124 = scmp.eq.s32.totalorder %s18, 1
    %p125 = por %p123, %p124
    %p127 = scmp.ne.s32.totalorder %s112, %s126
    %p128 = scmp.eq.s32.totalorder %s18, 0
    %p129 = por %p127, %p128
    %s131 = sadd.s32 %s130, 1
    %p134 = scmp.eq.s32.totalorder %s12, 1
    %p135 = scmp.ne.s32.totalorder %s130, %s132
    %p136 = scmp.eq.s32.totalorder %s12, 0
    %p137 = por %p135, %p136
    %p138 = scmp.ne.s32.totalorder %s130, %s132
    %p139 = scmp.eq.s32.totalorder %s17, 1
    %p140 = por %p138, %p139
    %p141 = scmp.ne.s32.totalorder %s132, %s133
    %p142 = scmp.eq.s32.totalorder %s17, 0
    %p143 = por %p141, %p142
    %p144 = scmp.ne.s32.totalorder %s132, %s133
    %p145 = scmp.eq.s32.totalorder %s18, 1
    %p146 = por %p144, %p145
    %p148 = scmp.ne.s32.totalorder %s133, %s147
    %p149 = scmp.eq.s32.totalorder %s18, 0
    %p150 = por %p148, %p149
    %s151 = ssub.s32 %s20, %s27
    %p152 = scmp.eq.s32.totalorder %s151, 0
    %s154 = sadd.s32 %s153, 1
    %s155 = scalar_select %p152, %s153, %s154
    %p158 = pneg %p152
    %p159 = scmp.eq.s32.totalorder %s12, 1
    %p160 = por %p158, %p159
    %p161 = scmp.ne.s32.totalorder %s153, %s156
    %p162 = scmp.eq.s32.totalorder %s12, 0
    %p163 = por %p161, %p162
    %p164 = scmp.ne.s32.totalorder %s153, %s156
    %p165 = scmp.eq.s32.totalorder %s17, 1
    %p166 = por %p164, %p165
    %p167 = scmp.ne.s32.totalorder %s156, %s157
    %p168 = scmp.eq.s32.totalorder %s17, 0
    %p169 = por %p167, %p168
    %p170 = scmp.ne.s32.totalorder %s156, %s157
    %p171 = scmp.eq.s32.totalorder %s18, 1
    %p172 = por %p170, %p171
    %p174 = scmp.ne.s32.totalorder %s157, %s173
    %p175 = scmp.eq.s32.totalorder %s18, 0
    %p176 = por %p174, %p175
    %s177 = ssub.s32 %s19, %s31
    %s178 = ssub.s32 %s20, %s27
    %s179 = sor.u32 %s177, %s178
    %p180 = scmp.eq.s32.totalorder %s179, 0
    %s182 = sadd.s32 %s181, 1
    %s183 = scalar_select %p180, %s181, %s182
    %p186 = pneg %p180
    %p187 = scmp.eq.s32.totalorder %s12, 1
    %p188 = por %p186, %p187
    %p189 = scmp.ne.s32.totalorder %s181, %s184
    %p190 = scmp.eq.s32.totalorder %s12, 0
    %p191 = por %p189, %p190
    %p192 = scmp.ne.s32.totalorder %s181, %s184
    %p193 = scmp.eq.s32.totalorder %s17, 1
    %p194 = por %p192, %p193
    %p195 = scmp.ne.s32.totalorder %s184, %s185
    %p196 = scmp.eq.s32.totalorder %s17, 0
    %p197 = por %p195, %p196
    %p198 = scmp.ne.s32.totalorder %s184, %s185
    %p199 = scmp.eq.s32.totalorder %s18, 1
    %p200 = por %p198, %p199
    %p202 = scmp.ne.s32.totalorder %s185, %s201
    %p203 = scmp.eq.s32.totalorder %s18, 0
    %p204 = por %p202, %p203
    %p205 = scmp.le.s32.totalorder 1, %s12
    %p206 = scmp.lt.s32.totalorder %s12, 3
    %p207 = pnand %p205, %p206
    %p208 = pneg %p207
    // Predicated region
    $region9: #{block_forward.2} parent=5 // pred_check
      _
    $region10: #{block_forward.2} parent=5 // pred_check_branch
      %210 = sbr.rel (%p207) target = $region12
    $region11: #{block_forward.2} parent=5 // pred_region
      %s211 = ssub.s32 %s12, 1
      // Predicated region
      $region13: #{block_forward.2} parent=11 // pred_check
        %p212 = pneg %p101
      $region14: #{block_forward.2} parent=11 // pred_check_branch
        %214 = sbr.rel (%p212) target = $region16
      $region15: #{block_forward.2} parent=11 // pred_region
        _
      $region16: #{block_forward.2} parent=11 // pred_fallthru
        _
      // Predicated region
      $region17: #{block_forward.2} parent=11 // pred_check
        %p215 = pneg %p122
      $region18: #{block_forward.2} parent=11 // pred_check_branch
        %217 = sbr.rel (%p215) target = $region20
      $region19: #{block_forward.2} parent=11 // pred_region
        _
      $region20: #{block_forward.2} parent=11 // pred_fallthru
        _
      // Predicated region
      $region21: #{block_forward.2} parent=11 // pred_check
        %p218 = pneg %p143
      $region22: #{block_forward.2} parent=11 // pred_check_branch
        %220 = sbr.rel (%p218) target = $region24
      $region23: #{block_forward.2} parent=11 // pred_region
        _
      $region24: #{block_forward.2} parent=11 // pred_fallthru
        _
      // Predicated region
      $region25: #{block_forward.2} parent=11 // pred_check
        %p221 = pneg %p169
      $region26: #{block_forward.2} parent=11 // pred_check_branch
        %223 = sbr.rel (%p221) target = $region28
      $region27: #{block_forward.2} parent=11 // pred_region
        %s224 = smul.u32 8, %s22
        %p225 = scmp.lt.s32.totalorder %s224, 7
        %s226 = scalar_select %p225, %s224, 7
        %s227 = scalar_lea.vmem %s5, %s226
        %s228 = smul.u32 8, %s22
      $region28: #{block_forward.2} parent=11 // pred_fallthru
        _
    $region12: #{block_forward.2} parent=5 // pred_fallthru
      _
    %p229 = scmp.lt.s32.totalorder %s12, 2
    // Predicated region
    $region29: #{block_forward.2} parent=5 // pred_check
      %p230 = pneg %p229
    $region30: #{block_forward.2} parent=5 // pred_check_branch
      %232 = sbr.rel (%p230) target = $region32
    $region31: #{block_forward.2} parent=5 // pred_region
      // Predicated region
      $region33: #{block_forward.2} parent=31 // pred_check
        %p233 = pneg %p44
      $region34: #{block_forward.2} parent=31 // pred_check_branch
        %235 = sbr.rel (%p233) target = $region36
      $region35: #{block_forward.2} parent=31 // pred_region
        %p236 = scmp.lt.s32.totalorder %s19, 1
        %s237 = scalar_select %p236, %s19, 1
        %s238 = smul.addr %s237, 16
        %s239 = smul.addr %s238, 2
        %s240 = scalar_lea.vmem %s0, %s239
      $region36: #{block_forward.2} parent=31 // pred_fallthru
        _
      // Predicated region
      $region37: #{block_forward.2} parent=31 // pred_check
        %p241 = pneg %p74
      $region38: #{block_forward.2} parent=31 // pred_check_branch
        %243 = sbr.rel (%p241) target = $region40
      $region39: #{block_forward.2} parent=31 // pred_region
        %s244 = sadd.s32 %s20, 1
        %s245 = smul.u32 8, %s244
        %p246 = scmp.lt.s32.totalorder %s19, 1
        %s247 = scalar_select %p246, %s19, 1
        %p248 = scmp.lt.s32.totalorder %s245, 15
        %s249 = scalar_select %p248, %s245, 15
        %s250 = smul.addr %s247, 16
        %s251 = sadd.s32 %s249, %s250
        %s252 = smul.addr %s251, 2
        %s253 = scalar_lea.vmem %s1, %s252
        %s254 = sadd.s32 %s20, 1
        %s255 = smul.u32 8, %s254
      $region40: #{block_forward.2} parent=31 // pred_fallthru
        _
    $region32: #{block_forward.2} parent=5 // pred_fallthru
      _
    %p256 = scmp.le.s32.totalorder 1, %s12
    %p257 = scmp.lt.s32.totalorder %s12, 3
    %p258 = pnand %p256, %p257
    %p259 = pneg %p258
    // Predicated region
    $region41: #{block_forward.2} parent=5 // pred_check
      _
    $region42: #{block_forward.2} parent=5 // pred_check_branch
      %261 = sbr.rel (%p258) target = $region44
    $region43: #{block_forward.2} parent=5 // pred_region
      %s262 = ssub.s32 %s12, 1
      %p263 = scmp.lt.s32.totalorder %s21, 1
      %s264 = scalar_select %p263, %s21, 1
      %s265 = smul.addr %s264, 16
      %s266 = smul.addr %s265, 2
      %s267 = scalar_lea.vmem %s0, %s266
      %p268 = pneg %p50
      %p269 = pneg %p47
      %s270 = sadd.s32 %s22, 1
      %s271 = smul.u32 8, %s270
      %p272 = scmp.lt.s32.totalorder %s21, 1
      %s273 = scalar_select %p272, %s21, 1
      %p274 = scmp.lt.s32.totalorder %s271, 15
      %s275 = scalar_select %p274, %s271, 15
      %s276 = smul.addr %s273, 16
      %s277 = sadd.s32 %s275, %s276
      %s278 = smul.addr %s277, 2
      %s279 = scalar_lea.vmem %s1, %s278
      %p280 = pneg %p80
      %p281 = pneg %p77
      %p282 = pneg %p101
      %p283 = pneg %p98
      %p284 = pneg %p122
      %p285 = pneg %p119
      %p286 = pneg %p143
      %p287 = pneg %p140
      %s288 = smul.u32 8, %s22
      %p289 = scmp.lt.s32.totalorder %s288, 7
      %s290 = scalar_select %p289, %s288, 7
      %s291 = scalar_lea.vmem %s5, %s290
      %p292 = pneg %p169
      %p293 = pneg %p166
      %p294 = pneg %p197
      %p295 = pneg %p194
      %s296 = smul.u32 8, %s22
      %p297 = scmp.lt.s32.totalorder %s21, 1
      %s298 = scalar_select %p297, %s21, 1
      %p299 = scmp.lt.s32.totalorder %s296, 15
      %s300 = scalar_select %p299, %s296, 15
      %s301 = smul.addr %s298, 16
      %s302 = sadd.s32 %s300, %s301
      %s303 = smul.addr %s302, 2
      %s304 = scalar_lea.vmem %s6, %s303
      %p305 = scmp.lt.s32.totalorder %s21, 1
      %s306 = scalar_select %p305, %s21, 1
      %s307 = smul.addr %s306, 16
      %s308 = smul.addr %s307, 2
      %s309 = scalar_lea.vmem %s0, %s308
      %s310 = sadd.s32 %s22, 1
      %s311 = smul.u32 8, %s310
      %p312 = scmp.lt.s32.totalorder %s21, 1
      %s313 = scalar_select %p312, %s21, 1
      %p314 = scmp.lt.s32.totalorder %s311, 15
      %s315 = scalar_select %p314, %s311, 15
      %s316 = smul.addr %s313, 16
      %s317 = sadd.s32 %s315, %s316
      %s318 = smul.addr %s317, 2
      %s319 = scalar_lea.vmem %s1, %s318
      %s320 = sadd.s32 %s22, 1
      %s321 = smul.u32 8, %s320
      %s322 = smul.u32 8, %s22
      %p323 = scmp.lt.s32.totalorder %s322, 7
      %s324 = scalar_select %p323, %s322, 7
      %s325 = scalar_lea.vmem %s5, %s324
      %s326 = smul.u32 8, %s22
      %s327 = smul.u32 8, %s22
      %p328 = scmp.lt.s32.totalorder %s21, 1
      %s329 = scalar_select %p328, %s21, 1
      %p330 = scmp.lt.s32.totalorder %s327, 15
      %s331 = scalar_select %p330, %s327, 15
      %s332 = smul.addr %s329, 16
      %s333 = sadd.s32 %s331, %s332
      %s334 = smul.addr %s333, 2
      %s335 = scalar_lea.vmem %s6, %s334
      %s336 = smul.u32 8, %s22
      %p337 = scmp.eq.s32.totalorder %s22, 0
      // Predicated region
      $region45: #{block_forward.2} parent=43 // pred_check
        %p338 = pneg %p337
      $region46: #{block_forward.2} parent=43 // pred_check_branch
        %340 = sbr.rel (%p338) target = $region48
      $region47: #{block_forward.2} parent=43 // pred_region
        %341 = vst [vmem:[#allocation2] sm:$0xff] 0.0
        %342 = vst [vmem:[#allocation2 + $0x8] sm:$0xff] 0.0
        %343 = vst [vmem:[#allocation2 + $0x10] sm:$0xff] 0.0
        %344 = vst [vmem:[#allocation2 + $0x18] sm:$0xff] 0.0
        %v345 = vld [vmem:[%s309] sm:$0xff]
        %v346 = vld [vmem:[%s309 + $0x8] sm:$0xff]
        %v347 = vunpack.c.l.bf16 %v345
        %v348 = vunpack.c.h.bf16 %v345
        %v349 = vunpack.c.l.bf16 %v346
        %v350 = vunpack.c.h.bf16 %v346
        %351 = vst [vmem:[#allocation2 + $0x20] sm:$0xff] %v347
        %352 = vst [vmem:[#allocation2 + $0x28] sm:$0xff] %v348
        %353 = vst [vmem:[#allocation2 + $0x30] sm:$0xff] %v349
        %354 = vst [vmem:[#allocation2 + $0x38] sm:$0xff] %v350
      $region48: #{block_forward.2} parent=43 // pred_fallthru
        _
      %v355 = vld [vmem:[%s319] sm:$0xff]
      %v356 = vld [vmem:[%s319 + $0x8] sm:$0xff]
      %v357 = vunpack.c.l.bf16 %v355
      %v358 = vunpack.c.h.bf16 %v355
      %v359 = vunpack.c.l.bf16 %v356
      %v360 = vunpack.c.h.bf16 %v356
      %v361 = vld [vmem:[#allocation2] sm:$0xff]
      %v362 = vld [vmem:[#allocation2 + $0x8] sm:$0xff]
      %v363 = vld [vmem:[#allocation2 + $0x10] sm:$0xff]
      %v364 = vld [vmem:[#allocation2 + $0x18] sm:$0xff]
      %v365 = vld [vmem:[#allocation2 + $0x20] sm:$0xff]
      %v366 = vld [vmem:[#allocation2 + $0x28] sm:$0xff]
      %v367 = vld [vmem:[#allocation2 + $0x30] sm:$0xff]
      %v368 = vld [vmem:[#allocation2 + $0x38] sm:$0xff]
      %377 = vst [vmem:[#allocation1] ss:$2 sm:$0xff] %v361
      %s378 = scalar_lea.vmem [#allocation1], 16
      %379 = vst [vmem:[%s378] ss:$2 sm:$0xff] %v362
      %s380 = scalar_lea.vmem [#allocation1], 32
      %381 = vst [vmem:[%s380] ss:$2 sm:$0xff] %v363
      %s382 = scalar_lea.vmem [#allocation1], 48
      %383 = vst [vmem:[%s382] ss:$2 sm:$0xff] %v364
      %v384 = vld.sshfl [vmem:[#allocation1 + $0x38] sm:$0xff pattern:$0x75316420]
      %385 = vst [vmem:[#allocation1] ss:$2 sm:$0xff] %v365
      %386 = vst [vmem:[%s378] ss:$2 sm:$0xff] %v366
      %387 = vst [vmem:[%s380] ss:$2 sm:$0xff] %v367
      %388 = vst [vmem:[%s382] ss:$2 sm:$0xff] %v368
      %v389 = vld.sshfl [vmem:[#allocation1] sm:$0xff pattern:$0x75316420]
      %v390 = vld.sshfl [vmem:[#allocation1 + $0x8] sm:$0xff pattern:$0x75316420]
      %v391 = vld.sshfl [vmem:[#allocation1 + $0x10] sm:$0xff pattern:$0x75316420]
      %v392 = vld.sshfl [vmem:[#allocation1 + $0x18] sm:$0xff pattern:$0x75316420]
      %v393 = vld.sshfl [vmem:[#allocation1 + $0x20] sm:$0xff pattern:$0x75316420]
      %v394 = vld.sshfl [vmem:[#allocation1 + $0x28] sm:$0xff pattern:$0x75316420]
      %v395 = vld.sshfl [vmem:[#allocation1 + $0x30] sm:$0xff pattern:$0x75316420]
      %v396 = vld.sshfl [vmem:[#allocation1 + $0x38] sm:$0xff pattern:$0x75316420]
      %401 = vst [vmem:[#allocation1] ss:$2 sm:$0xff] %v357
      %s402 = scalar_lea.vmem [#allocation1], 16
      %403 = vst [vmem:[%s402] ss:$2 sm:$0xff] %v358
      %s404 = scalar_lea.vmem [#allocation1], 32
      %405 = vst [vmem:[%s404] ss:$2 sm:$0xff] %v359
      %s406 = scalar_lea.vmem [#allocation1], 48
      %407 = vst [vmem:[%s406] ss:$2 sm:$0xff] %v360
      %v408 = vld.sshfl [vmem:[#allocation1] sm:$0xff pattern:$0x75316420]
      %409 = vrot.lane.b32.xlu0 %v384, 111
      %v410 = vpop.permute.xlu0 %409
      %411 = vrot.lane.b32.xlu0 %v389, 111
      %v412 = vpop.permute.xlu0 %411
      %413 = vrot.lane.b32.xlu0 %v390, 111
      %v414 = vpop.permute.xlu0 %413
      %415 = vrot.lane.b32.xlu0 %v391, 111
      %v416 = vpop.permute.xlu0 %415
      %417 = vrot.lane.b32.xlu0 %v392, 111
      %v418 = vpop.permute.xlu0 %417
      %419 = vrot.lane.b32.xlu0 %v393, 111
      %v420 = vpop.permute.xlu0 %419
      %421 = vrot.lane.b32.xlu0 %v394, 111
      %v422 = vpop.permute.xlu0 %421
      %423 = vrot.lane.b32.xlu0 %v395, 111
      %v424 = vpop.permute.xlu0 %423
      %425 = vrot.lane.b32.xlu0 %v396, 111
      %v426 = vpop.permute.xlu0 %425
      %vm427 = vcmask 908288
      %v428 = vsel %vm427, %v410, %v412
      %v429 = vsel %vm427, %v412, %v414
      %v430 = vsel %vm427, %v414, %v416
      %v431 = vsel %vm427, %v416, %v418
      %v432 = vsel %vm427, %v418, %v420
      %v433 = vsel %vm427, %v420, %v422
      %v434 = vsel %vm427, %v422, %v424
      %v435 = vsel %vm427, %v424, %v426
      %444 = vst [vmem:[#allocation3] sm:$0xf] %v428
      %445 = vst [vmem:[#allocation3 + $0x8] sm:$0xf] %v429
      %446 = vst [vmem:[#allocation3 + $0x10] sm:$0xf] %v430
      %447 = vst [vmem:[#allocation3 + $0x18] sm:$0xf] %v431
      %448 = vst [vmem:[#allocation3 + $0x20] sm:$0xf] %v432
      %449 = vst [vmem:[#allocation3 + $0x28] sm:$0xf] %v433
      %450 = vst [vmem:[#allocation3 + $0x30] sm:$0xf] %v434
      %451 = vst [vmem:[#allocation3 + $0x38] sm:$0xf] %v435
      %v452 = vrot.slane %v384, 4
      %v453 = vrot.slane %v389, 4
      %v454 = vrot.slane %v390, 4
      %v455 = vrot.slane %v391, 4
      %v456 = vrot.slane %v392, 4
      %v457 = vrot.slane %v393, 4
      %v458 = vrot.slane %v394, 4
      %v459 = vrot.slane %v395, 4
      %v460 = vrot.slane %v396, 4
      %461 = vrot.lane.b32.xlu0 %v452, 110
      %v462 = vpop.permute.xlu0 %461
      %463 = vrot.lane.b32.xlu0 %v453, 110
      %v464 = vpop.permute.xlu0 %463
      %465 = vrot.lane.b32.xlu0 %v454, 110
      %v466 = vpop.permute.xlu0 %465
      %467 = vrot.lane.b32.xlu0 %v455, 110
      %v468 = vpop.permute.xlu0 %467
      %469 = vrot.lane.b32.xlu0 %v456, 110
      %v470 = vpop.permute.xlu0 %469
      %471 = vrot.lane.b32.xlu0 %v457, 110
      %v472 = vpop.permute.xlu0 %471
      %473 = vrot.lane.b32.xlu0 %v458, 110
      %v474 = vpop.permute.xlu0 %473
      %475 = vrot.lane.b32.xlu0 %v459, 110
      %v476 = vpop.permute.xlu0 %475
      %477 = vrot.lane.b32.xlu0 %v460, 110
      %v478 = vpop.permute.xlu0 %477
      %vm479 = vcmask 900096
      %v480 = vsel %vm479, %v462, %v464
      %v481 = vsel %vm479, %v464, %v466
      %v482 = vsel %vm479, %v466, %v468
      %v483 = vsel %vm479, %v468, %v470
      %v484 = vsel %vm479, %v470, %v472
      %v485 = vsel %vm479, %v472, %v474
      %v486 = vsel %vm479, %v474, %v476
      %v487 = vsel %vm479, %v476, %v478
      %496 = vst [vmem:[#allocation3] sm:$0xf0] %v480
      %497 = vst [vmem:[#allocation3 + $0x8] sm:$0xf0] %v481
      %498 = vst [vmem:[#allocation3 + $0x10] sm:$0xf0] %v482
      %499 = vst [vmem:[#allocation3 + $0x18] sm:$0xf0] %v483
      %500 = vst [vmem:[#allocation3 + $0x20] sm:$0xf0] %v484
      %501 = vst [vmem:[#allocation3 + $0x28] sm:$0xf0] %v485
      %502 = vst [vmem:[#allocation3 + $0x30] sm:$0xf0] %v486
      %503 = vst [vmem:[#allocation3 + $0x38] sm:$0xf0] %v487
      %504 = vrot.lane.b32.xlu0 %v384, 109
      %v505 = vpop.permute.xlu0 %504
      %506 = vrot.lane.b32.xlu0 %v389, 109
      %v507 = vpop.permute.xlu0 %506
      %508 = vrot.lane.b32.xlu0 %v390, 109
      %v509 = vpop.permute.xlu0 %508
      %510 = vrot.lane.b32.xlu0 %v391, 109
      %v511 = vpop.permute.xlu0 %510
      %512 = vrot.lane.b32.xlu0 %v392, 109
      %v513 = vpop.permute.xlu0 %512
      %514 = vrot.lane.b32.xlu0 %v393, 109
      %v515 = vpop.permute.xlu0 %514
      %516 = vrot.lane.b32.xlu0 %v394, 109
      %v517 = vpop.permute.xlu0 %516
      %518 = vrot.lane.b32.xlu0 %v395, 109
      %v519 = vpop.permute.xlu0 %518
      %520 = vrot.lane.b32.xlu0 %v396, 109
      %v521 = vpop.permute.xlu0 %520
      %vm522 = vcmask 891904
      %v523 = vsel %vm522, %v505, %v507
      %v524 = vsel %vm522, %v507, %v509
      %v525 = vsel %vm522, %v509, %v511
      %v526 = vsel %vm522, %v511, %v513
      %v527 = vsel %vm522, %v513, %v515
      %v528 = vsel %vm522, %v515, %v517
      %v529 = vsel %vm522, %v517, %v519
      %v530 = vsel %vm522, %v519, %v521
      %539 = vst [vmem:[#allocation3 + $0x40] sm:$0xf] %v523
      %540 = vst [vmem:[#allocation3 + $0x48] sm:$0xf] %v524
      %541 = vst [vmem:[#allocation3 + $0x50] sm:$0xf] %v525
      %542 = vst [vmem:[#allocation3 + $0x58] sm:$0xf] %v526
      %543 = vst [vmem:[#allocation3 + $0x60] sm:$0xf] %v527
      %544 = vst [vmem:[#allocation3 + $0x68] sm:$0xf] %v528
      %545 = vst [vmem:[#allocation3 + $0x70] sm:$0xf] %v529
      %546 = vst [vmem:[#allocation3 + $0x78] sm:$0xf] %v530
      %547 = vrot.lane.b32.xlu0 %v452, 101
      %v548 = vpop.permute.xlu0 %547
      %549 = vrot.lane.b32.xlu0 %v453, 101
      %v550 = vpop.permute.xlu0 %549
      %551 = vrot.lane.b32.xlu0 %v454, 101
      %v552 = vpop.permute.xlu0 %551
      %553 = vrot.lane.b32.xlu0 %v455, 101
      %v554 = vpop.permute.xlu0 %553
      %555 = vrot.lane.b32.xlu0 %v456, 101
      %v556 = vpop.permute.xlu0 %555
      %557 = vrot.lane.b32.xlu0 %v457, 101
      %v558 = vpop.permute.xlu0 %557
      %559 = vrot.lane.b32.xlu0 %v458, 101
      %v560 = vpop.permute.xlu0 %559
      %561 = vrot.lane.b32.xlu0 %v459, 101
      %v562 = vpop.permute.xlu0 %561
      %563 = vrot.lane.b32.xlu0 %v460, 101
      %v564 = vpop.permute.xlu0 %563
      %vm565 = vcmask 826368
      %v566 = vsel %vm565, %v548, %v550
      %v567 = vsel %vm565, %v550, %v552
      %v568 = vsel %vm565, %v552, %v554
      %v569 = vsel %vm565, %v554, %v556
      %v570 = vsel %vm565, %v556, %v558
      %v571 = vsel %vm565, %v558, %v560
      %v572 = vsel %vm565, %v560, %v562
      %v573 = vsel %vm565, %v562, %v564
      %582 = vst [vmem:[#allocation3 + $0x40] sm:$0xf0] %v566
      %583 = vst [vmem:[#allocation3 + $0x48] sm:$0xf0] %v567
      %584 = vst [vmem:[#allocation3 + $0x50] sm:$0xf0] %v568
      %585 = vst [vmem:[#allocation3 + $0x58] sm:$0xf0] %v569
      %586 = vst [vmem:[#allocation3 + $0x60] sm:$0xf0] %v570
      %587 = vst [vmem:[#allocation3 + $0x68] sm:$0xf0] %v571
      %588 = vst [vmem:[#allocation3 + $0x70] sm:$0xf0] %v572
      %589 = vst [vmem:[#allocation3 + $0x78] sm:$0xf0] %v573
      %590 = vrot.lane.b32.xlu0 %v384, 100
      %v591 = vpop.permute.xlu0 %590
      %592 = vrot.lane.b32.xlu0 %v389, 100
      %v593 = vpop.permute.xlu0 %592
      %594 = vrot.lane.b32.xlu0 %v390, 100
      %v595 = vpop.permute.xlu0 %594
      %596 = vrot.lane.b32.xlu0 %v391, 100
      %v597 = vpop.permute.xlu0 %596
      %598 = vrot.lane.b32.xlu0 %v392, 100
      %v599 = vpop.permute.xlu0 %598
      %600 = vrot.lane.b32.xlu0 %v393, 100
      %v601 = vpop.permute.xlu0 %600
      %602 = vrot.lane.b32.xlu0 %v394, 100
      %v603 = vpop.permute.xlu0 %602
      %604 = vrot.lane.b32.xlu0 %v395, 100
      %v605 = vpop.permute.xlu0 %604
      %606 = vrot.lane.b32.xlu0 %v396, 100
      %v607 = vpop.permute.xlu0 %606
      %vm608 = vcmask 818176
      %v609 = vsel %vm608, %v591, %v593
      %v610 = vsel %vm608, %v593, %v595
      %v611 = vsel %vm608, %v595, %v597
      %v612 = vsel %vm608, %v597, %v599
      %v613 = vsel %vm608, %v599, %v601
      %v614 = vsel %vm608, %v601, %v603
      %v615 = vsel %vm608, %v603, %v605
      %v616 = vsel %vm608, %v605, %v607
      %625 = vst [vmem:[#allocation3 + $0x80] sm:$0xf] %v609
      %626 = vst [vmem:[#allocation3 + $0x88] sm:$0xf] %v610
      %627 = vst [vmem:[#allocation3 + $0x90] sm:$0xf] %v611
      %628 = vst [vmem:[#allocation3 + $0x98] sm:$0xf] %v612
      %629 = vst [vmem:[#allocation3 + $0xa0] sm:$0xf] %v613
      %630 = vst [vmem:[#allocation3 + $0xa8] sm:$0xf] %v614
      %631 = vst [vmem:[#allocation3 + $0xb0] sm:$0xf] %v615
      %632 = vst [vmem:[#allocation3 + $0xb8] sm:$0xf] %v616
      %633 = vrot.lane.b32.xlu0 %v452, 99
      %v634 = vpop.permute.xlu0 %633
      %635 = vrot.lane.b32.xlu0 %v453, 99
      %v636 = vpop.permute.xlu0 %635
      %637 = vrot.lane.b32.xlu0 %v454, 99
      %v638 = vpop.permute.xlu0 %637
      %639 = vrot.lane.b32.xlu0 %v455, 99
      %v640 = vpop.permute.xlu0 %639
      %641 = vrot.lane.b32.xlu0 %v456, 99
      %v642 = vpop.permute.xlu0 %641
      %643 = vrot.lane.b32.xlu0 %v457, 99
      %v644 = vpop.permute.xlu0 %643
      %645 = vrot.lane.b32.xlu0 %v458, 99
      %v646 = vpop.permute.xlu0 %645
      %647 = vrot.lane.b32.xlu0 %v459, 99
      %v648 = vpop.permute.xlu0 %647
      %649 = vrot.lane.b32.xlu0 %v460, 99
      %v650 = vpop.permute.xlu0 %649
      %vm651 = vcmask 809984
      %v652 = vsel %vm651, %v634, %v636
      %v653 = vsel %vm651, %v636, %v638
      %v654 = vsel %vm651, %v638, %v640
      %v655 = vsel %vm651, %v640, %v642
      %v656 = vsel %vm651, %v642, %v644
      %v657 = vsel %vm651, %v644, %v646
      %v658 = vsel %vm651, %v646, %v648
      %v659 = vsel %vm651, %v648, %v650
      %668 = vst [vmem:[#allocation3 + $0x80] sm:$0xf0] %v652
      %669 = vst [vmem:[#allocation3 + $0x88] sm:$0xf0] %v653
      %670 = vst [vmem:[#allocation3 + $0x90] sm:$0xf0] %v654
      %671 = vst [vmem:[#allocation3 + $0x98] sm:$0xf0] %v655
      %672 = vst [vmem:[#allocation3 + $0xa0] sm:$0xf0] %v656
      %673 = vst [vmem:[#allocation3 + $0xa8] sm:$0xf0] %v657
      %674 = vst [vmem:[#allocation3 + $0xb0] sm:$0xf0] %v658
      %675 = vst [vmem:[#allocation3 + $0xb8] sm:$0xf0] %v659
      %676 = vrot.lane.b32.xlu0 %v384, 91
      %v677 = vpop.permute.xlu0 %676
      %678 = vrot.lane.b32.xlu0 %v389, 91
      %v679 = vpop.permute.xlu0 %678
      %680 = vrot.lane.b32.xlu0 %v390, 91
      %v681 = vpop.permute.xlu0 %680
      %682 = vrot.lane.b32.xlu0 %v391, 91
      %v683 = vpop.permute.xlu0 %682
      %684 = vrot.lane.b32.xlu0 %v392, 91
      %v685 = vpop.permute.xlu0 %684
      %686 = vrot.lane.b32.xlu0 %v393, 91
      %v687 = vpop.permute.xlu0 %686
      %688 = vrot.lane.b32.xlu0 %v394, 91
      %v689 = vpop.permute.xlu0 %688
      %690 = vrot.lane.b32.xlu0 %v395, 91
      %v691 = vpop.permute.xlu0 %690
      %692 = vrot.lane.b32.xlu0 %v396, 91
      %v693 = vpop.permute.xlu0 %692
      %vm694 = vcmask 744448
      %v695 = vsel %vm694, %v677, %v679
      %v696 = vsel %vm694, %v679, %v681
      %v697 = vsel %vm694, %v681, %v683
      %v698 = vsel %vm694, %v683, %v685
      %v699 = vsel %vm694, %v685, %v687
      %v700 = vsel %vm694, %v687, %v689
      %v701 = vsel %vm694, %v689, %v691
      %v702 = vsel %vm694, %v691, %v693
      %711 = vst [vmem:[#allocation3 + $0xc0] sm:$0xf] %v695
      %712 = vst [vmem:[#allocation3 + $0xc8] sm:$0xf] %v696
      %713 = vst [vmem:[#allocation3 + $0xd0] sm:$0xf] %v697
      %714 = vst [vmem:[#allocation3 + $0xd8] sm:$0xf] %v698
      %715 = vst [vmem:[#allocation3 + $0xe0] sm:$0xf] %v699
      %716 = vst [vmem:[#allocation3 + $0xe8] sm:$0xf] %v700
      %717 = vst [vmem:[#allocation3 + $0xf0] sm:$0xf] %v701
      %718 = vst [vmem:[#allocation3 + $0xf8] sm:$0xf] %v702
      %719 = vrot.lane.b32.xlu0 %v452, 90
      %v720 = vpop.permute.xlu0 %719
      %721 = vrot.lane.b32.xlu0 %v453, 90
      %v722 = vpop.permute.xlu0 %721
      %723 = vrot.lane.b32.xlu0 %v454, 90
      %v724 = vpop.permute.xlu0 %723
      %725 = vrot.lane.b32.xlu0 %v455, 90
      %v726 = vpop.permute.xlu0 %725
      %727 = vrot.lane.b32.xlu0 %v456, 90
      %v728 = vpop.permute.xlu0 %727
      %729 = vrot.lane.b32.xlu0 %v457, 90
      %v730 = vpop.permute.xlu0 %729
      %731 = vrot.lane.b32.xlu0 %v458, 90
      %v732 = vpop.permute.xlu0 %731
      %733 = vrot.lane.b32.xlu0 %v459, 90
      %v734 = vpop.permute.xlu0 %733
      %735 = vrot.lane.b32.xlu0 %v460, 90
      %v736 = vpop.permute.xlu0 %735
      %vm737 = vcmask 736256
      %v738 = vsel %vm737, %v720, %v722
      %v739 = vsel %vm737, %v722, %v724
      %v740 = vsel %vm737, %v724, %v726
      %v741 = vsel %vm737, %v726, %v728
      %v742 = vsel %vm737, %v728, %v730
      %v743 = vsel %vm737, %v730, %v732
      %v744 = vsel %vm737, %v732, %v734
      %v745 = vsel %vm737, %v734, %v736
      %754 = vst [vmem:[#allocation3 + $0xc0] sm:$0xf0] %v738
      %755 = vst [vmem:[#allocation3 + $0xc8] sm:$0xf0] %v739
      %756 = vst [vmem:[#allocation3 + $0xd0] sm:$0xf0] %v740
      %757 = vst [vmem:[#allocation3 + $0xd8] sm:$0xf0] %v741
      %758 = vst [vmem:[#allocation3 + $0xe0] sm:$0xf0] %v742
      %759 = vst [vmem:[#allocation3 + $0xe8] sm:$0xf0] %v743
      %760 = vst [vmem:[#allocation3 + $0xf0] sm:$0xf0] %v744
      %761 = vst [vmem:[#allocation3 + $0xf8] sm:$0xf0] %v745
      %762 = vrot.lane.b32.xlu0 %v384, 89
      %v763 = vpop.permute.xlu0 %762
      %764 = vrot.lane.b32.xlu0 %v389, 89
      %v765 = vpop.permute.xlu0 %764
      %766 = vrot.lane.b32.xlu0 %v390, 89
      %v767 = vpop.permute.xlu0 %766
      %768 = vrot.lane.b32.xlu0 %v391, 89
      %v769 = vpop.permute.xlu0 %768
      %770 = vrot.lane.b32.xlu0 %v392, 89
      %v771 = vpop.permute.xlu0 %770
      %772 = vrot.lane.b32.xlu0 %v393, 89
      %v773 = vpop.permute.xlu0 %772
      %774 = vrot.lane.b32.xlu0 %v394, 89
      %v775 = vpop.permute.xlu0 %774
      %776 = vrot.lane.b32.xlu0 %v395, 89
      %v777 = vpop.permute.xlu0 %776
      %778 = vrot.lane.b32.xlu0 %v396, 89
      %v779 = vpop.permute.xlu0 %778
      %vm780 = vcmask 728064
      %v781 = vsel %vm780, %v763, %v765
      %v782 = vsel %vm780, %v765, %v767
      %v783 = vsel %vm780, %v767, %v769
      %v784 = vsel %vm780, %v769, %v771
      %v785 = vsel %vm780, %v771, %v773
      %v786 = vsel %vm780, %v773, %v775
      %v787 = vsel %vm780, %v775, %v777
      %v788 = vsel %vm780, %v777, %v779
      %797 = vst [vmem:[#allocation3 + $0x100] sm:$0xf] %v781
      %798 = vst [vmem:[#allocation3 + $0x108] sm:$0xf] %v782
      %799 = vst [vmem:[#allocation3 + $0x110] sm:$0xf] %v783
      %800 = vst [vmem:[#allocation3 + $0x118] sm:$0xf] %v784
      %801 = vst [vmem:[#allocation3 + $0x120] sm:$0xf] %v785
      %802 = vst [vmem:[#allocation3 + $0x128] sm:$0xf] %v786
      %803 = vst [vmem:[#allocation3 + $0x130] sm:$0xf] %v787
      %804 = vst [vmem:[#allocation3 + $0x138] sm:$0xf] %v788
      %805 = vrot.lane.b32.xlu0 %v452, 11
      %v806 = vpop.permute.xlu0 %805
      %807 = vrot.lane.b32.xlu0 %v453, 11
      %v808 = vpop.permute.xlu0 %807
      %809 = vrot.lane.b32.xlu0 %v454, 11
      %v810 = vpop.permute.xlu0 %809
      %811 = vrot.lane.b32.xlu0 %v455, 11
      %v812 = vpop.permute.xlu0 %811
      %813 = vrot.lane.b32.xlu0 %v456, 11
      %v814 = vpop.permute.xlu0 %813
      %815 = vrot.lane.b32.xlu0 %v457, 11
      %v816 = vpop.permute.xlu0 %815
      %817 = vrot.lane.b32.xlu0 %v458, 11
      %v818 = vpop.permute.xlu0 %817
      %819 = vrot.lane.b32.xlu0 %v459, 11
      %v820 = vpop.permute.xlu0 %819
      %821 = vrot.lane.b32.xlu0 %v460, 11
      %v822 = vpop.permute.xlu0 %821
      %vm823 = vcmask 89088
      %v824 = vsel %vm823, %v806, %v808
      %v825 = vsel %vm823, %v808, %v810
      %v826 = vsel %vm823, %v810, %v812
      %v827 = vsel %vm823, %v812, %v814
      %v828 = vsel %vm823, %v814, %v816
      %v829 = vsel %vm823, %v816, %v818
      %v830 = vsel %vm823, %v818, %v820
      %v831 = vsel %vm823, %v820, %v822
      %840 = vst [vmem:[#allocation3 + $0x100] sm:$0xf0] %v824
      %841 = vst [vmem:[#allocation3 + $0x108] sm:$0xf0] %v825
      %842 = vst [vmem:[#allocation3 + $0x110] sm:$0xf0] %v826
      %843 = vst [vmem:[#allocation3 + $0x118] sm:$0xf0] %v827
      %844 = vst [vmem:[#allocation3 + $0x120] sm:$0xf0] %v828
      %845 = vst [vmem:[#allocation3 + $0x128] sm:$0xf0] %v829
      %846 = vst [vmem:[#allocation3 + $0x130] sm:$0xf0] %v830
      %847 = vst [vmem:[#allocation3 + $0x138] sm:$0xf0] %v831
      %848 = vrot.lane.b32.xlu0 %v384, 10
      %v849 = vpop.permute.xlu0 %848
      %850 = vrot.lane.b32.xlu0 %v389, 10
      %v851 = vpop.permute.xlu0 %850
      %852 = vrot.lane.b32.xlu0 %v390, 10
      %v853 = vpop.permute.xlu0 %852
      %854 = vrot.lane.b32.xlu0 %v391, 10
      %v855 = vpop.permute.xlu0 %854
      %856 = vrot.lane.b32.xlu0 %v392, 10
      %v857 = vpop.permute.xlu0 %856
      %858 = vrot.lane.b32.xlu0 %v393, 10
      %v859 = vpop.permute.xlu0 %858
      %860 = vrot.lane.b32.xlu0 %v394, 10
      %v861 = vpop.permute.xlu0 %860
      %862 = vrot.lane.b32.xlu0 %v395, 10
      %v863 = vpop.permute.xlu0 %862
      %864 = vrot.lane.b32.xlu0 %v396, 10
      %v865 = vpop.permute.xlu0 %864
      %vm866 = vcmask 80896
      %v867 = vsel %vm866, %v849, %v851
      %v868 = vsel %vm866, %v851, %v853
      %v869 = vsel %vm866, %v853, %v855
      %v870 = vsel %vm866, %v855, %v857
      %v871 = vsel %vm866, %v857, %v859
      %v872 = vsel %vm866, %v859, %v861
      %v873 = vsel %vm866, %v861, %v863
      %v874 = vsel %vm866, %v863, %v865
      %883 = vst [vmem:[#allocation3 + $0x140] sm:$0xf] %v867
      %884 = vst [vmem:[#allocation3 + $0x148] sm:$0xf] %v868
      %885 = vst [vmem:[#allocation3 + $0x150] sm:$0xf] %v869
      %886 = vst [vmem:[#allocation3 + $0x158] sm:$0xf] %v870
      %887 = vst [vmem:[#allocation3 + $0x160] sm:$0xf] %v871
      %888 = vst [vmem:[#allocation3 + $0x168] sm:$0xf] %v872
      %889 = vst [vmem:[#allocation3 + $0x170] sm:$0xf] %v873
      %890 = vst [vmem:[#allocation3 + $0x178] sm:$0xf] %v874
      %891 = vrot.lane.b32.xlu0 %v452, 9
      %v892 = vpop.permute.xlu0 %891
      %893 = vrot.lane.b32.xlu0 %v453, 9
      %v894 = vpop.permute.xlu0 %893
      %895 = vrot.lane.b32.xlu0 %v454, 9
      %v896 = vpop.permute.xlu0 %895
      %897 = vrot.lane.b32.xlu0 %v455, 9
      %v898 = vpop.permute.xlu0 %897
      %899 = vrot.lane.b32.xlu0 %v456, 9
      %v900 = vpop.permute.xlu0 %899
      %901 = vrot.lane.b32.xlu0 %v457, 9
      %v902 = vpop.permute.xlu0 %901
      %903 = vrot.lane.b32.xlu0 %v458, 9
      %v904 = vpop.permute.xlu0 %903
      %905 = vrot.lane.b32.xlu0 %v459, 9
      %v906 = vpop.permute.xlu0 %905
      %907 = vrot.lane.b32.xlu0 %v460, 9
      %v908 = vpop.permute.xlu0 %907
      %vm909 = vcmask 72704
      %v910 = vsel %vm909, %v892, %v894
      %v911 = vsel %vm909, %v894, %v896
      %v912 = vsel %vm909, %v896, %v898
      %v913 = vsel %vm909, %v898, %v900
      %v914 = vsel %vm909, %v900, %v902
      %v915 = vsel %vm909, %v902, %v904
      %v916 = vsel %vm909, %v904, %v906
      %v917 = vsel %vm909, %v906, %v908
      %926 = vst [vmem:[#allocation3 + $0x140] sm:$0xf0] %v910
      %927 = vst [vmem:[#allocation3 + $0x148] sm:$0xf0] %v911
      %928 = vst [vmem:[#allocation3 + $0x150] sm:$0xf0] %v912
      %929 = vst [vmem:[#allocation3 + $0x158] sm:$0xf0] %v913
      %930 = vst [vmem:[#allocation3 + $0x160] sm:$0xf0] %v914
      %931 = vst [vmem:[#allocation3 + $0x168] sm:$0xf0] %v915
      %932 = vst [vmem:[#allocation3 + $0x170] sm:$0xf0] %v916
      %933 = vst [vmem:[#allocation3 + $0x178] sm:$0xf0] %v917
      %934 = vrot.lane.b32.xlu0 %v384, 1
      %v935 = vpop.permute.xlu0 %934
      %936 = vrot.lane.b32.xlu0 %v389, 1
      %v937 = vpop.permute.xlu0 %936
      %938 = vrot.lane.b32.xlu0 %v390, 1
      %v939 = vpop.permute.xlu0 %938
      %940 = vrot.lane.b32.xlu0 %v391, 1
      %v941 = vpop.permute.xlu0 %940
      %942 = vrot.lane.b32.xlu0 %v392, 1
      %v943 = vpop.permute.xlu0 %942
      %944 = vrot.lane.b32.xlu0 %v393, 1
      %v945 = vpop.permute.xlu0 %944
      %946 = vrot.lane.b32.xlu0 %v394, 1
      %v947 = vpop.permute.xlu0 %946
      %948 = vrot.lane.b32.xlu0 %v395, 1
      %v949 = vpop.permute.xlu0 %948
      %950 = vrot.lane.b32.xlu0 %v396, 1
      %v951 = vpop.permute.xlu0 %950
      %vm952 = vcmask 7168
      %v953 = vsel %vm952, %v935, %v937
      %v954 = vsel %vm952, %v937, %v939
      %v955 = vsel %vm952, %v939, %v941
      %v956 = vsel %vm952, %v941, %v943
      %v957 = vsel %vm952, %v943, %v945
      %v958 = vsel %vm952, %v945, %v947
      %v959 = vsel %vm952, %v947, %v949
      %v960 = vsel %vm952, %v949, %v951
      %969 = vst [vmem:[#allocation3 + $0x180] sm:$0xf] %v953
      %970 = vst [vmem:[#allocation3 + $0x188] sm:$0xf] %v954
      %971 = vst [vmem:[#allocation3 + $0x190] sm:$0xf] %v955
      %972 = vst [vmem:[#allocation3 + $0x198] sm:$0xf] %v956
      %973 = vst [vmem:[#allocation3 + $0x1a0] sm:$0xf] %v957
      %974 = vst [vmem:[#allocation3 + $0x1a8] sm:$0xf] %v958
      %975 = vst [vmem:[#allocation3 + $0x1b0] sm:$0xf] %v959
      %976 = vst [vmem:[#allocation3 + $0x1b8] sm:$0xf] %v960
      %985 = vst [vmem:[#allocation3 + $0x180] sm:$0xf0] %v453
      %986 = vst [vmem:[#allocation3 + $0x188] sm:$0xf0] %v454
      %987 = vst [vmem:[#allocation3 + $0x190] sm:$0xf0] %v455
      %988 = vst [vmem:[#allocation3 + $0x198] sm:$0xf0] %v456
      %989 = vst [vmem:[#allocation3 + $0x1a0] sm:$0xf0] %v457
      %990 = vst [vmem:[#allocation3 + $0x1a8] sm:$0xf0] %v458
      %991 = vst [vmem:[#allocation3 + $0x1b0] sm:$0xf0] %v459
      %992 = vst [vmem:[#allocation3 + $0x1b8] sm:$0xf0] %v460
      %993 = vrot.lane.b32.xlu0 %v389, 127
      %v994 = vpop.permute.xlu0 %993
      %995 = vrot.lane.b32.xlu0 %v390, 127
      %v996 = vpop.permute.xlu0 %995
      %997 = vrot.lane.b32.xlu0 %v391, 127
      %v998 = vpop.permute.xlu0 %997
      %999 = vrot.lane.b32.xlu0 %v392, 127
      %v1000 = vpop.permute.xlu0 %999
      %1001 = vrot.lane.b32.xlu0 %v393, 127
      %v1002 = vpop.permute.xlu0 %1001
      %1003 = vrot.lane.b32.xlu0 %v394, 127
      %v1004 = vpop.permute.xlu0 %1003
      %1005 = vrot.lane.b32.xlu0 %v395, 127
      %v1006 = vpop.permute.xlu0 %1005
      %1007 = vrot.lane.b32.xlu0 %v396, 127
      %v1008 = vpop.permute.xlu0 %1007
      %1009 = vrot.lane.b32.xlu0 %v408, 127
      %v1010 = vpop.permute.xlu0 %1009
      %vm1011 = vcmask 1039360
      %v1012 = vsel %vm1011, %v994, %v996
      %v1013 = vsel %vm1011, %v996, %v998
      %v1014 = vsel %vm1011, %v998, %v1000
      %v1015 = vsel %vm1011, %v1000, %v1002
      %v1016 = vsel %vm1011, %v1002, %v1004
      %v1017 = vsel %vm1011, %v1004, %v1006
      %v1018 = vsel %vm1011, %v1006, %v1008
      %v1019 = vsel %vm1011, %v1008, %v1010
      %1028 = vst [vmem:[#allocation3 + $0x1c0] sm:$0xf] %v1012
      %1029 = vst [vmem:[#allocation3 + $0x1c8] sm:$0xf] %v1013
      %1030 = vst [vmem:[#allocation3 + $0x1d0] sm:$0xf] %v1014
      %1031 = vst [vmem:[#allocation3 + $0x1d8] sm:$0xf] %v1015
      %1032 = vst [vmem:[#allocation3 + $0x1e0] sm:$0xf] %v1016
      %1033 = vst [vmem:[#allocation3 + $0x1e8] sm:$0xf] %v1017
      %1034 = vst [vmem:[#allocation3 + $0x1f0] sm:$0xf] %v1018
      %1035 = vst [vmem:[#allocation3 + $0x1f8] sm:$0xf] %v1019
      %v1036 = vrot.slane %v408, 4
      %1037 = vrot.lane.b32.xlu0 %v453, 119
      %v1038 = vpop.permute.xlu0 %1037
      %1039 = vrot.lane.b32.xlu0 %v454, 119
      %v1040 = vpop.permute.xlu0 %1039
      %1041 = vrot.lane.b32.xlu0 %v455, 119
      %v1042 = vpop.permute.xlu0 %1041
      %1043 = vrot.lane.b32.xlu0 %v456, 119
      %v1044 = vpop.permute.xlu0 %1043
      %1045 = vrot.lane.b32.xlu0 %v457, 119
      %v1046 = vpop.permute.xlu0 %1045
      %1047 = vrot.lane.b32.xlu0 %v458, 119
      %v1048 = vpop.permute.xlu0 %1047
      %1049 = vrot.lane.b32.xlu0 %v459, 119
      %v1050 = vpop.permute.xlu0 %1049
      %1051 = vrot.lane.b32.xlu0 %v460, 119
      %v1052 = vpop.permute.xlu0 %1051
      %1053 = vrot.lane.b32.xlu0 %v1036, 119
      %v1054 = vpop.permute.xlu0 %1053
      %vm1055 = vcmask 973824
      %v1056 = vsel %vm1055, %v1038, %v1040
      %v1057 = vsel %vm1055, %v1040, %v1042
      %v1058 = vsel %vm1055, %v1042, %v1044
      %v1059 = vsel %vm1055, %v1044, %v1046
      %v1060 = vsel %vm1055, %v1046, %v1048
      %v1061 = vsel %vm1055, %v1048, %v1050
      %v1062 = vsel %vm1055, %v1050, %v1052
      %v1063 = vsel %vm1055, %v1052, %v1054
      %1072 = vst [vmem:[#allocation3 + $0x1c0] sm:$0xf0] %v1056
      %1073 = vst [vmem:[#allocation3 + $0x1c8] sm:$0xf0] %v1057
      %1074 = vst [vmem:[#allocation3 + $0x1d0] sm:$0xf0] %v1058
      %1075 = vst [vmem:[#allocation3 + $0x1d8] sm:$0xf0] %v1059
      %1076 = vst [vmem:[#allocation3 + $0x1e0] sm:$0xf0] %v1060
      %1077 = vst [vmem:[#allocation3 + $0x1e8] sm:$0xf0] %v1061
      %1078 = vst [vmem:[#allocation3 + $0x1f0] sm:$0xf0] %v1062
      %1079 = vst [vmem:[#allocation3 + $0x1f8] sm:$0xf0] %v1063
      %1080 = vrot.lane.b32.xlu0 %v389, 118
      %v1081 = vpop.permute.xlu0 %1080
      %1082 = vrot.lane.b32.xlu0 %v390, 118
      %v1083 = vpop.permute.xlu0 %1082
      %1084 = vrot.lane.b32.xlu0 %v391, 118
      %v1085 = vpop.permute.xlu0 %1084
      %1086 = vrot.lane.b32.xlu0 %v392, 118
      %v1087 = vpop.permute.xlu0 %1086
      %1088 = vrot.lane.b32.xlu0 %v393, 118
      %v1089 = vpop.permute.xlu0 %1088
      %1090 = vrot.lane.b32.xlu0 %v394, 118
      %v1091 = vpop.permute.xlu0 %1090
      %1092 = vrot.lane.b32.xlu0 %v395, 118
      %v1093 = vpop.permute.xlu0 %1092
      %1094 = vrot.lane.b32.xlu0 %v396, 118
      %v1095 = vpop.permute.xlu0 %1094
      %1096 = vrot.lane.b32.xlu0 %v408, 118
      %v1097 = vpop.permute.xlu0 %1096
      %vm1098 = vcmask 965632
      %v1099 = vsel %vm1098, %v1081, %v1083
      %v1100 = vsel %vm1098, %v1083, %v1085
      %v1101 = vsel %vm1098, %v1085, %v1087
      %v1102 = vsel %vm1098, %v1087, %v1089
      %v1103 = vsel %vm1098, %v1089, %v1091
      %v1104 = vsel %vm1098, %v1091, %v1093
      %v1105 = vsel %vm1098, %v1093, %v1095
      %v1106 = vsel %vm1098, %v1095, %v1097
      %1115 = vst [vmem:[#allocation3 + $0x200] sm:$0xf] %v1099
      %1116 = vst [vmem:[#allocation3 + $0x208] sm:$0xf] %v1100
      %1117 = vst [vmem:[#allocation3 + $0x210] sm:$0xf] %v1101
      %1118 = vst [vmem:[#allocation3 + $0x218] sm:$0xf] %v1102
      %1119 = vst [vmem:[#allocation3 + $0x220] sm:$0xf] %v1103
      %1120 = vst [vmem:[#allocation3 + $0x228] sm:$0xf] %v1104
      %1121 = vst [vmem:[#allocation3 + $0x230] sm:$0xf] %v1105
      %1122 = vst [vmem:[#allocation3 + $0x238] sm:$0xf] %v1106
      %1123 = vrot.lane.b32.xlu0 %v453, 117
      %v1124 = vpop.permute.xlu0 %1123
      %1125 = vrot.lane.b32.xlu0 %v454, 117
      %v1126 = vpop.permute.xlu0 %1125
      %1127 = vrot.lane.b32.xlu0 %v455, 117
      %v1128 = vpop.permute.xlu0 %1127
      %1129 = vrot.lane.b32.xlu0 %v456, 117
      %v1130 = vpop.permute.xlu0 %1129
      %1131 = vrot.lane.b32.xlu0 %v457, 117
      %v1132 = vpop.permute.xlu0 %1131
      %1133 = vrot.lane.b32.xlu0 %v458, 117
      %v1134 = vpop.permute.xlu0 %1133
      %1135 = vrot.lane.b32.xlu0 %v459, 117
      %v1136 = vpop.permute.xlu0 %1135
      %1137 = vrot.lane.b32.xlu0 %v460, 117
      %v1138 = vpop.permute.xlu0 %1137
      %1139 = vrot.lane.b32.xlu0 %v1036, 117
      %v1140 = vpop.permute.xlu0 %1139
      %vm1141 = vcmask 957440
      %v1142 = vsel %vm1141, %v1124, %v1126
      %v1143 = vsel %vm1141, %v1126, %v1128
      %v1144 = vsel %vm1141, %v1128, %v1130
      %v1145 = vsel %vm1141, %v1130, %v1132
      %v1146 = vsel %vm1141, %v1132, %v1134
      %v1147 = vsel %vm1141, %v1134, %v1136
      %v1148 = vsel %vm1141, %v1136, %v1138
      %v1149 = vsel %vm1141, %v1138, %v1140
      %1158 = vst [vmem:[#allocation3 + $0x200] sm:$0xf0] %v1142
      %1159 = vst [vmem:[#allocation3 + $0x208] sm:$0xf0] %v1143
      %1160 = vst [vmem:[#allocation3 + $0x210] sm:$0xf0] %v1144
      %1161 = vst [vmem:[#allocation3 + $0x218] sm:$0xf0] %v1145
      %1162 = vst [vmem:[#allocation3 + $0x220] sm:$0xf0] %v1146
      %1163 = vst [vmem:[#allocation3 + $0x228] sm:$0xf0] %v1147
      %1164 = vst [vmem:[#allocation3 + $0x230] sm:$0xf0] %v1148
      %1165 = vst [vmem:[#allocation3 + $0x238] sm:$0xf0] %v1149
      %1166 = vrot.lane.b32.xlu0 %v389, 39
      %v1167 = vpop.permute.xlu0 %1166
      %1168 = vrot.lane.b32.xlu0 %v390, 39
      %v1169 = vpop.permute.xlu0 %1168
      %1170 = vrot.lane.b32.xlu0 %v391, 39
      %v1171 = vpop.permute.xlu0 %1170
      %1172 = vrot.lane.b32.xlu0 %v392, 39
      %v1173 = vpop.permute.xlu0 %1172
      %1174 = vrot.lane.b32.xlu0 %v393, 39
      %v1175 = vpop.permute.xlu0 %1174
      %1176 = vrot.lane.b32.xlu0 %v394, 39
      %v1177 = vpop.permute.xlu0 %1176
      %1178 = vrot.lane.b32.xlu0 %v395, 39
      %v1179 = vpop.permute.xlu0 %1178
      %1180 = vrot.lane.b32.xlu0 %v396, 39
      %v1181 = vpop.permute.xlu0 %1180
      %1182 = vrot.lane.b32.xlu0 %v408, 39
      %v1183 = vpop.permute.xlu0 %1182
      %vm1184 = vcmask 318464
      %v1185 = vsel %vm1184, %v1167, %v1169
      %v1186 = vsel %vm1184, %v1169, %v1171
      %v1187 = vsel %vm1184, %v1171, %v1173
      %v1188 = vsel %vm1184, %v1173, %v1175
      %v1189 = vsel %vm1184, %v1175, %v1177
      %v1190 = vsel %vm1184, %v1177, %v1179
      %v1191 = vsel %vm1184, %v1179, %v1181
      %v1192 = vsel %vm1184, %v1181, %v1183
      %1201 = vst [vmem:[#allocation3 + $0x240] sm:$0xf] %v1185
      %1202 = vst [vmem:[#allocation3 + $0x248] sm:$0xf] %v1186
      %1203 = vst [vmem:[#allocation3 + $0x250] sm:$0xf] %v1187
      %1204 = vst [vmem:[#allocation3 + $0x258] sm:$0xf] %v1188
      %1205 = vst [vmem:[#allocation3 + $0x260] sm:$0xf] %v1189
      %1206 = vst [vmem:[#allocation3 + $0x268] sm:$0xf] %v1190
      %1207 = vst [vmem:[#allocation3 + $0x270] sm:$0xf] %v1191
      %1208 = vst [vmem:[#allocation3 + $0x278] sm:$0xf] %v1192
      %1209 = vrot.lane.b32.xlu0 %v453, 38
      %v1210 = vpop.permute.xlu0 %1209
      %1211 = vrot.lane.b32.xlu0 %v454, 38
      %v1212 = vpop.permute.xlu0 %1211
      %1213 = vrot.lane.b32.xlu0 %v455, 38
      %v1214 = vpop.permute.xlu0 %1213
      %1215 = vrot.lane.b32.xlu0 %v456, 38
      %v1216 = vpop.permute.xlu0 %1215
      %1217 = vrot.lane.b32.xlu0 %v457, 38
      %v1218 = vpop.permute.xlu0 %1217
      %1219 = vrot.lane.b32.xlu0 %v458, 38
      %v1220 = vpop.permute.xlu0 %1219
      %1221 = vrot.lane.b32.xlu0 %v459, 38
      %v1222 = vpop.permute.xlu0 %1221
      %1223 = vrot.lane.b32.xlu0 %v460, 38
      %v1224 = vpop.permute.xlu0 %1223
      %1225 = vrot.lane.b32.xlu0 %v1036, 38
      %v1226 = vpop.permute.xlu0 %1225
      %vm1227 = vcmask 310272
      %v1228 = vsel %vm1227, %v1210, %v1212
      %v1229 = vsel %vm1227, %v1212, %v1214
      %v1230 = vsel %vm1227, %v1214, %v1216
      %v1231 = vsel %vm1227, %v1216, %v1218
      %v1232 = vsel %vm1227, %v1218, %v1220
      %v1233 = vsel %vm1227, %v1220, %v1222
      %v1234 = vsel %vm1227, %v1222, %v1224
      %v1235 = vsel %vm1227, %v1224, %v1226
      %1244 = vst [vmem:[#allocation3 + $0x240] sm:$0xf0] %v1228
      %1245 = vst [vmem:[#allocation3 + $0x248] sm:$0xf0] %v1229
      %1246 = vst [vmem:[#allocation3 + $0x250] sm:$0xf0] %v1230
      %1247 = vst [vmem:[#allocation3 + $0x258] sm:$0xf0] %v1231
      %1248 = vst [vmem:[#allocation3 + $0x260] sm:$0xf0] %v1232
      %1249 = vst [vmem:[#allocation3 + $0x268] sm:$0xf0] %v1233
      %1250 = vst [vmem:[#allocation3 + $0x270] sm:$0xf0] %v1234
      %1251 = vst [vmem:[#allocation3 + $0x278] sm:$0xf0] %v1235
      %1252 = vrot.lane.b32.xlu0 %v389, 37
      %v1253 = vpop.permute.xlu0 %1252
      %1254 = vrot.lane.b32.xlu0 %v390, 37
      %v1255 = vpop.permute.xlu0 %1254
      %1256 = vrot.lane.b32.xlu0 %v391, 37
      %v1257 = vpop.permute.xlu0 %1256
      %1258 = vrot.lane.b32.xlu0 %v392, 37
      %v1259 = vpop.permute.xlu0 %1258
      %1260 = vrot.lane.b32.xlu0 %v393, 37
      %v1261 = vpop.permute.xlu0 %1260
      %1262 = vrot.lane.b32.xlu0 %v394, 37
      %v1263 = vpop.permute.xlu0 %1262
      %1264 = vrot.lane.b32.xlu0 %v395, 37
      %v1265 = vpop.permute.xlu0 %1264
      %1266 = vrot.lane.b32.xlu0 %v396, 37
      %v1267 = vpop.permute.xlu0 %1266
      %1268 = vrot.lane.b32.xlu0 %v408, 37
      %v1269 = vpop.permute.xlu0 %1268
      %vm1270 = vcmask 302080
      %v1271 = vsel %vm1270, %v1253, %v1255
      %v1272 = vsel %vm1270, %v1255, %v1257
      %v1273 = vsel %vm1270, %v1257, %v1259
      %v1274 = vsel %vm1270, %v1259, %v1261
      %v1275 = vsel %vm1270, %v1261, %v1263
      %v1276 = vsel %vm1270, %v1263, %v1265
      %v1277 = vsel %vm1270, %v1265, %v1267
      %v1278 = vsel %vm1270, %v1267, %v1269
      %1287 = vst [vmem:[#allocation3 + $0x280] sm:$0xf] %v1271
      %1288 = vst [vmem:[#allocation3 + $0x288] sm:$0xf] %v1272
      %1289 = vst [vmem:[#allocation3 + $0x290] sm:$0xf] %v1273
      %1290 = vst [vmem:[#allocation3 + $0x298] sm:$0xf] %v1274
      %1291 = vst [vmem:[#allocation3 + $0x2a0] sm:$0xf] %v1275
      %1292 = vst [vmem:[#allocation3 + $0x2a8] sm:$0xf] %v1276
      %1293 = vst [vmem:[#allocation3 + $0x2b0] sm:$0xf] %v1277
      %1294 = vst [vmem:[#allocation3 + $0x2b8] sm:$0xf] %v1278
      %1295 = vrot.lane.b32.xlu0 %v453, 29
      %v1296 = vpop.permute.xlu0 %1295
      %1297 = vrot.lane.b32.xlu0 %v454, 29
      %v1298 = vpop.permute.xlu0 %1297
      %1299 = vrot.lane.b32.xlu0 %v455, 29
      %v1300 = vpop.permute.xlu0 %1299
      %1301 = vrot.lane.b32.xlu0 %v456, 29
      %v1302 = vpop.permute.xlu0 %1301
      %1303 = vrot.lane.b32.xlu0 %v457, 29
      %v1304 = vpop.permute.xlu0 %1303
      %1305 = vrot.lane.b32.xlu0 %v458, 29
      %v1306 = vpop.permute.xlu0 %1305
      %1307 = vrot.lane.b32.xlu0 %v459, 29
      %v1308 = vpop.permute.xlu0 %1307
      %1309 = vrot.lane.b32.xlu0 %v460, 29
      %v1310 = vpop.permute.xlu0 %1309
      %1311 = vrot.lane.b32.xlu0 %v1036, 29
      %v1312 = vpop.permute.xlu0 %1311
      %vm1313 = vcmask 236544
      %v1314 = vsel %vm1313, %v1296, %v1298
      %v1315 = vsel %vm1313, %v1298, %v1300
      %v1316 = vsel %vm1313, %v1300, %v1302
      %v1317 = vsel %vm1313, %v1302, %v1304
      %v1318 = vsel %vm1313, %v1304, %v1306
      %v1319 = vsel %vm1313, %v1306, %v1308
      %v1320 = vsel %vm1313, %v1308, %v1310
      %v1321 = vsel %vm1313, %v1310, %v1312
      %1330 = vst [vmem:[#allocation3 + $0x280] sm:$0xf0] %v1314
      %1331 = vst [vmem:[#allocation3 + $0x288] sm:$0xf0] %v1315
      %1332 = vst [vmem:[#allocation3 + $0x290] sm:$0xf0] %v1316
      %1333 = vst [vmem:[#allocation3 + $0x298] sm:$0xf0] %v1317
      %1334 = vst [vmem:[#allocation3 + $0x2a0] sm:$0xf0] %v1318
      %1335 = vst [vmem:[#allocation3 + $0x2a8] sm:$0xf0] %v1319
      %1336 = vst [vmem:[#allocation3 + $0x2b0] sm:$0xf0] %v1320
      %1337 = vst [vmem:[#allocation3 + $0x2b8] sm:$0xf0] %v1321
      %1338 = vrot.lane.b32.xlu0 %v389, 28
      %v1339 = vpop.permute.xlu0 %1338
      %1340 = vrot.lane.b32.xlu0 %v390, 28
      %v1341 = vpop.permute.xlu0 %1340
      %1342 = vrot.lane.b32.xlu0 %v391, 28
      %v1343 = vpop.permute.xlu0 %1342
      %1344 = vrot.lane.b32.xlu0 %v392, 28
      %v1345 = vpop.permute.xlu0 %1344
      %1346 = vrot.lane.b32.xlu0 %v393, 28
      %v1347 = vpop.permute.xlu0 %1346
      %1348 = vrot.lane.b32.xlu0 %v394, 28
      %v1349 = vpop.permute.xlu0 %1348
      %1350 = vrot.lane.b32.xlu0 %v395, 28
      %v1351 = vpop.permute.xlu0 %1350
      %1352 = vrot.lane.b32.xlu0 %v396, 28
      %v1353 = vpop.permute.xlu0 %1352
      %1354 = vrot.lane.b32.xlu0 %v408, 28
      %v1355 = vpop.permute.xlu0 %1354
      %vm1356 = vcmask 228352
      %v1357 = vsel %vm1356, %v1339, %v1341
      %v1358 = vsel %vm1356, %v1341, %v1343
      %v1359 = vsel %vm1356, %v1343, %v1345
      %v1360 = vsel %vm1356, %v1345, %v1347
      %v1361 = vsel %vm1356, %v1347, %v1349
      %v1362 = vsel %vm1356, %v1349, %v1351
      %v1363 = vsel %vm1356, %v1351, %v1353
      %v1364 = vsel %vm1356, %v1353, %v1355
      %1373 = vst [vmem:[#allocation3 + $0x2c0] sm:$0xf] %v1357
      %1374 = vst [vmem:[#allocation3 + $0x2c8] sm:$0xf] %v1358
      %1375 = vst [vmem:[#allocation3 + $0x2d0] sm:$0xf] %v1359
      %1376 = vst [vmem:[#allocation3 + $0x2d8] sm:$0xf] %v1360
      %1377 = vst [vmem:[#allocation3 + $0x2e0] sm:$0xf] %v1361
      %1378 = vst [vmem:[#allocation3 + $0x2e8] sm:$0xf] %v1362
      %1379 = vst [vmem:[#allocation3 + $0x2f0] sm:$0xf] %v1363
      %1380 = vst [vmem:[#allocation3 + $0x2f8] sm:$0xf] %v1364
      %1381 = vrot.lane.b32.xlu0 %v453, 27
      %v1382 = vpop.permute.xlu0 %1381
      %1383 = vrot.lane.b32.xlu0 %v454, 27
      %v1384 = vpop.permute.xlu0 %1383
      %1385 = vrot.lane.b32.xlu0 %v455, 27
      %v1386 = vpop.permute.xlu0 %1385
      %1387 = vrot.lane.b32.xlu0 %v456, 27
      %v1388 = vpop.permute.xlu0 %1387
      %1389 = vrot.lane.b32.xlu0 %v457, 27
      %v1390 = vpop.permute.xlu0 %1389
      %1391 = vrot.lane.b32.xlu0 %v458, 27
      %v1392 = vpop.permute.xlu0 %1391
      %1393 = vrot.lane.b32.xlu0 %v459, 27
      %v1394 = vpop.permute.xlu0 %1393
      %1395 = vrot.lane.b32.xlu0 %v460, 27
      %v1396 = vpop.permute.xlu0 %1395
      %1397 = vrot.lane.b32.xlu0 %v1036, 27
      %v1398 = vpop.permute.xlu0 %1397
      %vm1399 = vcmask 220160
      %v1400 = vsel %vm1399, %v1382, %v1384
      %v1401 = vsel %vm1399, %v1384, %v1386
      %v1402 = vsel %vm1399, %v1386, %v1388
      %v1403 = vsel %vm1399, %v1388, %v1390
      %v1404 = vsel %vm1399, %v1390, %v1392
      %v1405 = vsel %vm1399, %v1392, %v1394
      %v1406 = vsel %vm1399, %v1394, %v1396
      %v1407 = vsel %vm1399, %v1396, %v1398
      %1416 = vst [vmem:[#allocation3 + $0x2c0] sm:$0xf0] %v1400
      %1417 = vst [vmem:[#allocation3 + $0x2c8] sm:$0xf0] %v1401
      %1418 = vst [vmem:[#allocation3 + $0x2d0] sm:$0xf0] %v1402
      %1419 = vst [vmem:[#allocation3 + $0x2d8] sm:$0xf0] %v1403
      %1420 = vst [vmem:[#allocation3 + $0x2e0] sm:$0xf0] %v1404
      %1421 = vst [vmem:[#allocation3 + $0x2e8] sm:$0xf0] %v1405
      %1422 = vst [vmem:[#allocation3 + $0x2f0] sm:$0xf0] %v1406
      %1423 = vst [vmem:[#allocation3 + $0x2f8] sm:$0xf0] %v1407
      %1424 = vrot.lane.b32.xlu0 %v389, 19
      %v1425 = vpop.permute.xlu0 %1424
      %1426 = vrot.lane.b32.xlu0 %v390, 19
      %v1427 = vpop.permute.xlu0 %1426
      %1428 = vrot.lane.b32.xlu0 %v391, 19
      %v1429 = vpop.permute.xlu0 %1428
      %1430 = vrot.lane.b32.xlu0 %v392, 19
      %v1431 = vpop.permute.xlu0 %1430
      %1432 = vrot.lane.b32.xlu0 %v393, 19
      %v1433 = vpop.permute.xlu0 %1432
      %1434 = vrot.lane.b32.xlu0 %v394, 19
      %v1435 = vpop.permute.xlu0 %1434
      %1436 = vrot.lane.b32.xlu0 %v395, 19
      %v1437 = vpop.permute.xlu0 %1436
      %1438 = vrot.lane.b32.xlu0 %v396, 19
      %v1439 = vpop.permute.xlu0 %1438
      %1440 = vrot.lane.b32.xlu0 %v408, 19
      %v1441 = vpop.permute.xlu0 %1440
      %vm1442 = vcmask 154624
      %v1443 = vsel %vm1442, %v1425, %v1427
      %v1444 = vsel %vm1442, %v1427, %v1429
      %v1445 = vsel %vm1442, %v1429, %v1431
      %v1446 = vsel %vm1442, %v1431, %v1433
      %v1447 = vsel %vm1442, %v1433, %v1435
      %v1448 = vsel %vm1442, %v1435, %v1437
      %v1449 = vsel %vm1442, %v1437, %v1439
      %v1450 = vsel %vm1442, %v1439, %v1441
      %1459 = vst [vmem:[#allocation3 + $0x300] sm:$0xf] %v1443
      %1460 = vst [vmem:[#allocation3 + $0x308] sm:$0xf] %v1444
      %1461 = vst [vmem:[#allocation3 + $0x310] sm:$0xf] %v1445
      %1462 = vst [vmem:[#allocation3 + $0x318] sm:$0xf] %v1446
      %1463 = vst [vmem:[#allocation3 + $0x320] sm:$0xf] %v1447
      %1464 = vst [vmem:[#allocation3 + $0x328] sm:$0xf] %v1448
      %1465 = vst [vmem:[#allocation3 + $0x330] sm:$0xf] %v1449
      %1466 = vst [vmem:[#allocation3 + $0x338] sm:$0xf] %v1450
      %1467 = vrot.lane.b32.xlu0 %v453, 18
      %v1468 = vpop.permute.xlu0 %1467
      %1469 = vrot.lane.b32.xlu0 %v454, 18
      %v1470 = vpop.permute.xlu0 %1469
      %1471 = vrot.lane.b32.xlu0 %v455, 18
      %v1472 = vpop.permute.xlu0 %1471
      %1473 = vrot.lane.b32.xlu0 %v456, 18
      %v1474 = vpop.permute.xlu0 %1473
      %1475 = vrot.lane.b32.xlu0 %v457, 18
      %v1476 = vpop.permute.xlu0 %1475
      %1477 = vrot.lane.b32.xlu0 %v458, 18
      %v1478 = vpop.permute.xlu0 %1477
      %1479 = vrot.lane.b32.xlu0 %v459, 18
      %v1480 = vpop.permute.xlu0 %1479
      %1481 = vrot.lane.b32.xlu0 %v460, 18
      %v1482 = vpop.permute.xlu0 %1481
      %1483 = vrot.lane.b32.xlu0 %v1036, 18
      %v1484 = vpop.permute.xlu0 %1483
      %vm1485 = vcmask 146432
      %v1486 = vsel %vm1485, %v1468, %v1470
      %v1487 = vsel %vm1485, %v1470, %v1472
      %v1488 = vsel %vm1485, %v1472, %v1474
      %v1489 = vsel %vm1485, %v1474, %v1476
      %v1490 = vsel %vm1485, %v1476, %v1478
      %v1491 = vsel %vm1485, %v1478, %v1480
      %v1492 = vsel %vm1485, %v1480, %v1482
      %v1493 = vsel %vm1485, %v1482, %v1484
      %1502 = vst [vmem:[#allocation3 + $0x300] sm:$0xf0] %v1486
      %1503 = vst [vmem:[#allocation3 + $0x308] sm:$0xf0] %v1487
      %1504 = vst [vmem:[#allocation3 + $0x310] sm:$0xf0] %v1488
      %1505 = vst [vmem:[#allocation3 + $0x318] sm:$0xf0] %v1489
      %1506 = vst [vmem:[#allocation3 + $0x320] sm:$0xf0] %v1490
      %1507 = vst [vmem:[#allocation3 + $0x328] sm:$0xf0] %v1491
      %1508 = vst [vmem:[#allocation3 + $0x330] sm:$0xf0] %v1492
      %1509 = vst [vmem:[#allocation3 + $0x338] sm:$0xf0] %v1493
      %1510 = vrot.lane.b32.xlu0 %v389, 17
      %v1511 = vpop.permute.xlu0 %1510
      %1512 = vrot.lane.b32.xlu0 %v390, 17
      %v1513 = vpop.permute.xlu0 %1512
      %1514 = vrot.lane.b32.xlu0 %v391, 17
      %v1515 = vpop.permute.xlu0 %1514
      %1516 = vrot.lane.b32.xlu0 %v392, 17
      %v1517 = vpop.permute.xlu0 %1516
      %1518 = vrot.lane.b32.xlu0 %v393, 17
      %v1519 = vpop.permute.xlu0 %1518
      %1520 = vrot.lane.b32.xlu0 %v394, 17
      %v1521 = vpop.permute.xlu0 %1520
      %1522 = vrot.lane.b32.xlu0 %v395, 17
      %v1523 = vpop.permute.xlu0 %1522
      %1524 = vrot.lane.b32.xlu0 %v396, 17
      %v1525 = vpop.permute.xlu0 %1524
      %1526 = vrot.lane.b32.xlu0 %v408, 17
      %v1527 = vpop.permute.xlu0 %1526
      %vm1528 = vcmask 138240
      %v1529 = vsel %vm1528, %v1511, %v1513
      %v1530 = vsel %vm1528, %v1513, %v1515
      %v1531 = vsel %vm1528, %v1515, %v1517
      %v1532 = vsel %vm1528, %v1517, %v1519
      %v1533 = vsel %vm1528, %v1519, %v1521
      %v1534 = vsel %vm1528, %v1521, %v1523
      %v1535 = vsel %vm1528, %v1523, %v1525
      %v1536 = vsel %vm1528, %v1525, %v1527
      %1545 = vst [vmem:[#allocation3 + $0x340] sm:$0xf] %v1529
      %1546 = vst [vmem:[#allocation3 + $0x348] sm:$0xf] %v1530
      %1547 = vst [vmem:[#allocation3 + $0x350] sm:$0xf] %v1531
      %1548 = vst [vmem:[#allocation3 + $0x358] sm:$0xf] %v1532
      %1549 = vst [vmem:[#allocation3 + $0x360] sm:$0xf] %v1533
      %1550 = vst [vmem:[#allocation3 + $0x368] sm:$0xf] %v1534
      %1551 = vst [vmem:[#allocation3 + $0x370] sm:$0xf] %v1535
      %1552 = vst [vmem:[#allocation3 + $0x378] sm:$0xf] %v1536
      %v1553 = vld [vmem:[%s2] sm:$0xf]
      %v1554 = vld [vmem:[#allocation3] sm:$0xff]
      %v1555 = vld [vmem:[#allocation3 + $0x8] sm:$0xff]
      %v1556 = vld [vmem:[#allocation3 + $0x10] sm:$0xff]
      %v1557 = vld [vmem:[#allocation3 + $0x18] sm:$0xff]
      %v1558 = vld [vmem:[#allocation3 + $0x20] sm:$0xff]
      %v1559 = vld [vmem:[#allocation3 + $0x28] sm:$0xff]
      %v1560 = vld [vmem:[#allocation3 + $0x30] sm:$0xff]
      %v1561 = vld [vmem:[#allocation3 + $0x38] sm:$0xff]
      %v1562 = vld [vmem:[#allocation3 + $0x40] sm:$0xff]
      %v1563 = vld [vmem:[#allocation3 + $0x48] sm:$0xff]
      %v1564 = vld [vmem:[#allocation3 + $0x50] sm:$0xff]
      %v1565 = vld [vmem:[#allocation3 + $0x58] sm:$0xff]
      %v1566 = vld [vmem:[#allocation3 + $0x60] sm:$0xff]
      %v1567 = vld [vmem:[#allocation3 + $0x68] sm:$0xff]
      %v1568 = vld [vmem:[#allocation3 + $0x70] sm:$0xff]
      %v1569 = vld [vmem:[#allocation3 + $0x78] sm:$0xff]
      %v1570 = vld [vmem:[#allocation3 + $0x80] sm:$0xff]
      %v1571 = vld [vmem:[#allocation3 + $0x88] sm:$0xff]
      %v1572 = vld [vmem:[#allocation3 + $0x90] sm:$0xff]
      %v1573 = vld [vmem:[#allocation3 + $0x98] sm:$0xff]
      %v1574 = vld [vmem:[#allocation3 + $0xa0] sm:$0xff]
      %v1575 = vld [vmem:[#allocation3 + $0xa8] sm:$0xff]
      %v1576 = vld [vmem:[#allocation3 + $0xb0] sm:$0xff]
      %v1577 = vld [vmem:[#allocation3 + $0xb8] sm:$0xff]
      %v1578 = vld [vmem:[#allocation3 + $0xc0] sm:$0xff]
      %v1579 = vld [vmem:[#allocation3 + $0xc8] sm:$0xff]
      %v1580 = vld [vmem:[#allocation3 + $0xd0] sm:$0xff]
      %v1581 = vld [vmem:[#allocation3 + $0xd8] sm:$0xff]
      %v1582 = vld [vmem:[#allocation3 + $0xe0] sm:$0xff]
      %v1583 = vld [vmem:[#allocation3 + $0xe8] sm:$0xff]
      %v1584 = vld [vmem:[#allocation3 + $0xf0] sm:$0xff]
      %v1585 = vld [vmem:[#allocation3 + $0xf8] sm:$0xff]
      %v1586 = vld [vmem:[#allocation3 + $0x100] sm:$0xff]
      %v1587 = vld [vmem:[#allocation3 + $0x108] sm:$0xff]
      %v1588 = vld [vmem:[#allocation3 + $0x110] sm:$0xff]
      %v1589 = vld [vmem:[#allocation3 + $0x118] sm:$0xff]
      %v1590 = vld [vmem:[#allocation3 + $0x120] sm:$0xff]
      %v1591 = vld [vmem:[#allocation3 + $0x128] sm:$0xff]
      %v1592 = vld [vmem:[#allocation3 + $0x130] sm:$0xff]
      %v1593 = vld [vmem:[#allocation3 + $0x138] sm:$0xff]
      %v1594 = vld [vmem:[#allocation3 + $0x140] sm:$0xff]
      %v1595 = vld [vmem:[#allocation3 + $0x148] sm:$0xff]
      %v1596 = vld [vmem:[#allocation3 + $0x150] sm:$0xff]
      %v1597 = vld [vmem:[#allocation3 + $0x158] sm:$0xff]
      %v1598 = vld [vmem:[#allocation3 + $0x160] sm:$0xff]
      %v1599 = vld [vmem:[#allocation3 + $0x168] sm:$0xff]
      %v1600 = vld [vmem:[#allocation3 + $0x170] sm:$0xff]
      %v1601 = vld [vmem:[#allocation3 + $0x178] sm:$0xff]
      %v1602 = vld [vmem:[#allocation3 + $0x180] sm:$0xff]
      %v1603 = vld [vmem:[#allocation3 + $0x188] sm:$0xff]
      %v1604 = vld [vmem:[#allocation3 + $0x190] sm:$0xff]
      %v1605 = vld [vmem:[#allocation3 + $0x198] sm:$0xff]
      %v1606 = vld [vmem:[#allocation3 + $0x1a0] sm:$0xff]
      %v1607 = vld [vmem:[#allocation3 + $0x1a8] sm:$0xff]
      %v1608 = vld [vmem:[#allocation3 + $0x1b0] sm:$0xff]
      %v1609 = vld [vmem:[#allocation3 + $0x1b8] sm:$0xff]
      %v1610 = vld [vmem:[#allocation3 + $0x1c0] sm:$0xff]
      %v1611 = vld [vmem:[#allocation3 + $0x1c8] sm:$0xff]
      %v1612 = vld [vmem:[#allocation3 + $0x1d0] sm:$0xff]
      %v1613 = vld [vmem:[#allocation3 + $0x1d8] sm:$0xff]
      %v1614 = vld [vmem:[#allocation3 + $0x1e0] sm:$0xff]
      %v1615 = vld [vmem:[#allocation3 + $0x1e8] sm:$0xff]
      %v1616 = vld [vmem:[#allocation3 + $0x1f0] sm:$0xff]
      %v1617 = vld [vmem:[#allocation3 + $0x1f8] sm:$0xff]
      %v1618 = vld [vmem:[#allocation3 + $0x200] sm:$0xff]
      %v1619 = vld [vmem:[#allocation3 + $0x208] sm:$0xff]
      %v1620 = vld [vmem:[#allocation3 + $0x210] sm:$0xff]
      %v1621 = vld [vmem:[#allocation3 + $0x218] sm:$0xff]
      %v1622 = vld [vmem:[#allocation3 + $0x220] sm:$0xff]
      %v1623 = vld [vmem:[#allocation3 + $0x228] sm:$0xff]
      %v1624 = vld [vmem:[#allocation3 + $0x230] sm:$0xff]
      %v1625 = vld [vmem:[#allocation3 + $0x238] sm:$0xff]
      %v1626 = vld [vmem:[#allocation3 + $0x240] sm:$0xff]
      %v1627 = vld [vmem:[#allocation3 + $0x248] sm:$0xff]
      %v1628 = vld [vmem:[#allocation3 + $0x250] sm:$0xff]
      %v1629 = vld [vmem:[#allocation3 + $0x258] sm:$0xff]
      %v1630 = vld [vmem:[#allocation3 + $0x260] sm:$0xff]
      %v1631 = vld [vmem:[#allocation3 + $0x268] sm:$0xff]
      %v1632 = vld [vmem:[#allocation3 + $0x270] sm:$0xff]
      %v1633 = vld [vmem:[#allocation3 + $0x278] sm:$0xff]
      %v1634 = vld [vmem:[#allocation3 + $0x280] sm:$0xff]
      %v1635 = vld [vmem:[#allocation3 + $0x288] sm:$0xff]
      %v1636 = vld [vmem:[#allocation3 + $0x290] sm:$0xff]
      %v1637 = vld [vmem:[#allocation3 + $0x298] sm:$0xff]
      %v1638 = vld [vmem:[#allocation3 + $0x2a0] sm:$0xff]
      %v1639 = vld [vmem:[#allocation3 + $0x2a8] sm:$0xff]
      %v1640 = vld [vmem:[#allocation3 + $0x2b0] sm:$0xff]
      %v1641 = vld [vmem:[#allocation3 + $0x2b8] sm:$0xff]
      %v1642 = vld [vmem:[#allocation3 + $0x2c0] sm:$0xff]
      %v1643 = vld [vmem:[#allocation3 + $0x2c8] sm:$0xff]
      %v1644 = vld [vmem:[#allocation3 + $0x2d0] sm:$0xff]
      %v1645 = vld [vmem:[#allocation3 + $0x2d8] sm:$0xff]
      %v1646 = vld [vmem:[#allocation3 + $0x2e0] sm:$0xff]
      %v1647 = vld [vmem:[#allocation3 + $0x2e8] sm:$0xff]
      %v1648 = vld [vmem:[#allocation3 + $0x2f0] sm:$0xff]
      %v1649 = vld [vmem:[#allocation3 + $0x2f8] sm:$0xff]
      %v1650 = vld [vmem:[#allocation3 + $0x300] sm:$0xff]
      %v1651 = vld [vmem:[#allocation3 + $0x308] sm:$0xff]
      %v1652 = vld [vmem:[#allocation3 + $0x310] sm:$0xff]
      %v1653 = vld [vmem:[#allocation3 + $0x318] sm:$0xff]
      %v1654 = vld [vmem:[#allocation3 + $0x320] sm:$0xff]
      %v1655 = vld [vmem:[#allocation3 + $0x328] sm:$0xff]
      %v1656 = vld [vmem:[#allocation3 + $0x330] sm:$0xff]
      %v1657 = vld [vmem:[#allocation3 + $0x338] sm:$0xff]
      %v1658 = vld [vmem:[#allocation3 + $0x340] sm:$0xf]
      %v1659 = vld [vmem:[#allocation3 + $0x348] sm:$0xf]
      %v1660 = vld [vmem:[#allocation3 + $0x350] sm:$0xf]
      %v1661 = vld [vmem:[#allocation3 + $0x358] sm:$0xf]
      %v1662 = vld [vmem:[#allocation3 + $0x360] sm:$0xf]
      %v1663 = vld [vmem:[#allocation3 + $0x368] sm:$0xf]
      %v1664 = vld [vmem:[#allocation3 + $0x370] sm:$0xf]
      %v1665 = vld [vmem:[#allocation3 + $0x378] sm:$0xf]
      %vm1666 = vcmask 883712
      %v1668 = vsel %vm1666, %v1553, 0
      %vm1670 = vcmask 1043456
      %v1672 = vsel %vm1670, %v1658, 0
      %v1675 = vsel %vm1670, %v1659, 0
      %v1678 = vsel %vm1670, %v1660, 0
      %v1681 = vsel %vm1670, %v1661, 0
      %v1684 = vsel %vm1670, %v1662, 0
      %v1687 = vsel %vm1670, %v1663, 0
      %v1690 = vsel %vm1670, %v1664, 0
      %v1693 = vsel %vm1670, %v1665, 0
      %1695 = vmatpush.msra.mxu0 0.0
      %1696 = vmatpush.msra.mxu0 0.0
      %1697 = vmatpush.msra.mxu0 %v1672
      %1698 = vmatpush.msra.mxu0 %v1650
      %1699 = vmatpush.msra.mxu0 %v1642
      %1700 = vmatpush.msra.mxu0 %v1634
      %1701 = vmatpush.msra.mxu0 %v1626
      %1702 = vmatpush.msra.mxu0 %v1618
      %1703 = vmatpush.msra.mxu0 %v1610
      %1704 = vmatpush.msra.mxu0 %v1602
      %1705 = vmatpush.msra.mxu0 %v1594
      %1706 = vmatpush.msra.mxu0 %v1586
      %1707 = vmatpush.msra.mxu0 %v1578
      %1708 = vmatpush.msra.mxu0 %v1570
      %1709 = vmatpush.msra.mxu0 %v1562
      %1710 = vmatpush.msra.mxu0 %v1554
      %1711 = vmatmul.f32.gmra.mxu0 %v1668
      %v1712 = vpop.f32.mrf.mxu0
      %v1713 = vadd.f32 0.0, %v1712
      %1714 = vdwg.mxu0
      %1715 = vmatpush.msra.mxu0 0.0
      %1716 = vmatpush.msra.mxu0 0.0
      %1717 = vmatpush.msra.mxu0 %v1675
      %1718 = vmatpush.msra.mxu0 %v1651
      %1719 = vmatpush.msra.mxu0 %v1643
      %1720 = vmatpush.msra.mxu0 %v1635
      %1721 = vmatpush.msra.mxu0 %v1627
      %1722 = vmatpush.msra.mxu0 %v1619
      %1723 = vmatpush.msra.mxu0 %v1611
      %1724 = vmatpush.msra.mxu0 %v1603
      %1725 = vmatpush.msra.mxu0 %v1595
      %1726 = vmatpush.msra.mxu0 %v1587
      %1727 = vmatpush.msra.mxu0 %v1579
      %1728 = vmatpush.msra.mxu0 %v1571
      %1729 = vmatpush.msra.mxu0 %v1563
      %1730 = vmatpush.msra.mxu0 %v1555
      %1731 = vmatmul.f32.gmra.mxu0 %v1668
      %v1732 = vpop.f32.mrf.mxu0
      %v1733 = vadd.f32 0.0, %v1732
      %1734 = vdwg.mxu0
      %1735 = vmatpush.msra.mxu0 0.0
      %1736 = vmatpush.msra.mxu0 0.0
      %1737 = vmatpush.msra.mxu0 %v1678
      %1738 = vmatpush.msra.mxu0 %v1652
      %1739 = vmatpush.msra.mxu0 %v1644
      %1740 = vmatpush.msra.mxu0 %v1636
      %1741 = vmatpush.msra.mxu0 %v1628
      %1742 = vmatpush.msra.mxu0 %v1620
      %1743 = vmatpush.msra.mxu0 %v1612
      %1744 = vmatpush.msra.mxu0 %v1604
      %1745 = vmatpush.msra.mxu0 %v1596
      %1746 = vmatpush.msra.mxu0 %v1588
      %1747 = vmatpush.msra.mxu0 %v1580
      %1748 = vmatpush.msra.mxu0 %v1572
      %1749 = vmatpush.msra.mxu0 %v1564
      %1750 = vmatpush.msra.mxu0 %v1556
      %1751 = vmatmul.f32.gmra.mxu0 %v1668
      %v1752 = vpop.f32.mrf.mxu0
      %v1753 = vadd.f32 0.0, %v1752
      %1754 = vdwg.mxu0
      %1755 = vmatpush.msra.mxu0 0.0
      %1756 = vmatpush.msra.mxu0 0.0
      %1757 = vmatpush.msra.mxu0 %v1681
      %1758 = vmatpush.msra.mxu0 %v1653
      %1759 = vmatpush.msra.mxu0 %v1645
      %1760 = vmatpush.msra.mxu0 %v1637
      %1761 = vmatpush.msra.mxu0 %v1629
      %1762 = vmatpush.msra.mxu0 %v1621
      %1763 = vmatpush.msra.mxu0 %v1613
      %1764 = vmatpush.msra.mxu0 %v1605
      %1765 = vmatpush.msra.mxu0 %v1597
      %1766 = vmatpush.msra.mxu0 %v1589
      %1767 = vmatpush.msra.mxu0 %v1581
      %1768 = vmatpush.msra.mxu0 %v1573
      %1769 = vmatpush.msra.mxu0 %v1565
      %1770 = vmatpush.msra.mxu0 %v1557
      %1771 = vmatmul.f32.gmra.mxu0 %v1668
      %v1772 = vpop.f32.mrf.mxu0
      %v1773 = vadd.f32 0.0, %v1772
      %1774 = vdwg.mxu0
      %1775 = vmatpush.msra.mxu0 0.0
      %1776 = vmatpush.msra.mxu0 0.0
      %1777 = vmatpush.msra.mxu0 %v1684
      %1778 = vmatpush.msra.mxu0 %v1654
      %1779 = vmatpush.msra.mxu0 %v1646
      %1780 = vmatpush.msra.mxu0 %v1638
      %1781 = vmatpush.msra.mxu0 %v1630
      %1782 = vmatpush.msra.mxu0 %v1622
      %1783 = vmatpush.msra.mxu0 %v1614
      %1784 = vmatpush.msra.mxu0 %v1606
      %1785 = vmatpush.msra.mxu0 %v1598
      %1786 = vmatpush.msra.mxu0 %v1590
      %1787 = vmatpush.msra.mxu0 %v1582
      %1788 = vmatpush.msra.mxu0 %v1574
      %1789 = vmatpush.msra.mxu0 %v1566
      %1790 = vmatpush.msra.mxu0 %v1558
      %1791 = vmatmul.f32.gmra.mxu0 %v1668
      %v1792 = vpop.f32.mrf.mxu0
      %v1793 = vadd.f32 0.0, %v1792
      %1794 = vdwg.mxu0
      %1795 = vmatpush.msra.mxu0 0.0
      %1796 = vmatpush.msra.mxu0 0.0
      %1797 = vmatpush.msra.mxu0 %v1687
      %1798 = vmatpush.msra.mxu0 %v1655
      %1799 = vmatpush.msra.mxu0 %v1647
      %1800 = vmatpush.msra.mxu0 %v1639
      %1801 = vmatpush.msra.mxu0 %v1631
      %1802 = vmatpush.msra.mxu0 %v1623
      %1803 = vmatpush.msra.mxu0 %v1615
      %1804 = vmatpush.msra.mxu0 %v1607
      %1805 = vmatpush.msra.mxu0 %v1599
      %1806 = vmatpush.msra.mxu0 %v1591
      %1807 = vmatpush.msra.mxu0 %v1583
      %1808 = vmatpush.msra.mxu0 %v1575
      %1809 = vmatpush.msra.mxu0 %v1567
      %1810 = vmatpush.msra.mxu0 %v1559
      %1811 = vmatmul.f32.gmra.mxu0 %v1668
      %v1812 = vpop.f32.mrf.mxu0
      %v1813 = vadd.f32 0.0, %v1812
      %1814 = vdwg.mxu0
      %1815 = vmatpush.msra.mxu0 0.0
      %1816 = vmatpush.msra.mxu0 0.0
      %1817 = vmatpush.msra.mxu0 %v1690
      %1818 = vmatpush.msra.mxu0 %v1656
      %1819 = vmatpush.msra.mxu0 %v1648
      %1820 = vmatpush.msra.mxu0 %v1640
      %1821 = vmatpush.msra.mxu0 %v1632
      %1822 = vmatpush.msra.mxu0 %v1624
      %1823 = vmatpush.msra.mxu0 %v1616
      %1824 = vmatpush.msra.mxu0 %v1608
      %1825 = vmatpush.msra.mxu0 %v1600
      %1826 = vmatpush.msra.mxu0 %v1592
      %1827 = vmatpush.msra.mxu0 %v1584
      %1828 = vmatpush.msra.mxu0 %v1576
      %1829 = vmatpush.msra.mxu0 %v1568
      %1830 = vmatpush.msra.mxu0 %v1560
      %1831 = vmatmul.f32.gmra.mxu0 %v1668
      %v1832 = vpop.f32.mrf.mxu0
      %v1833 = vadd.f32 0.0, %v1832
      %1834 = vdwg.mxu0
      %1835 = vmatpush.msra.mxu0 0.0
      %1836 = vmatpush.msra.mxu0 0.0
      %1837 = vmatpush.msra.mxu0 %v1693
      %1838 = vmatpush.msra.mxu0 %v1657
      %1839 = vmatpush.msra.mxu0 %v1649
      %1840 = vmatpush.msra.mxu0 %v1641
      %1841 = vmatpush.msra.mxu0 %v1633
      %1842 = vmatpush.msra.mxu0 %v1625
      %1843 = vmatpush.msra.mxu0 %v1617
      %1844 = vmatpush.msra.mxu0 %v1609
      %1845 = vmatpush.msra.mxu0 %v1601
      %1846 = vmatpush.msra.mxu0 %v1593
      %1847 = vmatpush.msra.mxu0 %v1585
      %1848 = vmatpush.msra.mxu0 %v1577
      %1849 = vmatpush.msra.mxu0 %v1569
      %1850 = vmatpush.msra.mxu0 %v1561
      %1851 = vmatmul.f32.gmra.mxu0 %v1668
      %v1852 = vpop.f32.mrf.mxu0
      %v1853 = vadd.f32 0.0, %v1852
      %1854 = vdwg.mxu0
      %v1855 = vld [vmem:[%s3] sm:$0xf]
      %1857 = vset.pattern.permute.xlu0 0
      %1858 = vperm.xlu0 %1857, %v1855
      %v1859 = vpop.permute.xlu0 %1858
      %v1861 = vmul.f32 %v1713, %v1859
      %v1862 = vmul.f32 %v1733, %v1859
      %v1863 = vmul.f32 %v1753, %v1859
      %v1864 = vmul.f32 %v1773, %v1859
      %v1865 = vmul.f32 %v1793, %v1859
      %v1866 = vmul.f32 %v1813, %v1859
      %v1867 = vmul.f32 %v1833, %v1859
      %v1868 = vmul.f32 %v1853, %v1859
      %v1869 = vld [vmem:[%s4] sm:$0xf]
      %1871 = vset.pattern.permute.xlu0 0
      %1872 = vperm.xlu0 %1871, %v1869
      %v1873 = vpop.permute.xlu0 %1872
      %v1875 = vadd.f32 %v1861, %v1873
      %v1876 = vadd.f32 %v1862, %v1873
      %v1877 = vadd.f32 %v1863, %v1873
      %v1878 = vadd.f32 %v1864, %v1873
      %v1879 = vadd.f32 %v1865, %v1873
      %v1880 = vadd.f32 %v1866, %v1873
      %v1881 = vadd.f32 %v1867, %v1873
      %v1882 = vadd.f32 %v1868, %v1873
      %v1883 = vmax.f32 %v1875, 0.0
      %v1884 = vmax.f32 %v1876, 0.0
      %v1885 = vmax.f32 %v1877, 0.0
      %v1886 = vmax.f32 %v1878, 0.0
      %v1887 = vmax.f32 %v1879, 0.0
      %v1888 = vmax.f32 %v1880, 0.0
      %v1889 = vmax.f32 %v1881, 0.0
      %v1890 = vmax.f32 %v1882, 0.0
      %v1891 = vld [vmem:[%s325] sm:$0xff]
      %v1892 = vunpack.c.l.bf16 %v1891
      %v1893 = vunpack.c.h.bf16 %v1891
      %vm1894 = vcmp.gt.f32.partialorder %v1892, 0.0
      %vm1895 = vcmp.gt.f32.partialorder %v1893, 0.0
      %v1896 = vsel %vm1894, 1, 0
      %v1897 = vsel %vm1895, 1, 0
      %v1898 = vperm.slane %v1896, 0
      %v1899 = vperm.slane %v1896, 2
      %v1900 = vperm.slane %v1896, 4
      %v1901 = vperm.slane %v1896, 6
      %v1902 = vperm.slane %v1897, 0
      %v1903 = vperm.slane %v1897, 2
      %v1904 = vperm.slane %v1897, 4
      %v1905 = vperm.slane %v1897, 6
      %v1906 = vperm.slane %v1898, 0
      %v1907 = vperm.slane %v1899, 0
      %v1908 = vperm.slane %v1900, 0
      %v1909 = vperm.slane %v1901, 0
      %v1910 = vperm.slane %v1902, 0
      %v1911 = vperm.slane %v1903, 0
      %v1912 = vperm.slane %v1904, 0
      %v1913 = vperm.slane %v1905, 0
      %vm1914 = vcmp.eq.s32.totalorder %v1906, 1
      %vm1915 = vcmp.eq.s32.totalorder %v1907, 1
      %vm1916 = vcmp.eq.s32.totalorder %v1908, 1
      %vm1917 = vcmp.eq.s32.totalorder %v1909, 1
      %vm1918 = vcmp.eq.s32.totalorder %v1910, 1
      %vm1919 = vcmp.eq.s32.totalorder %v1911, 1
      %vm1920 = vcmp.eq.s32.totalorder %v1912, 1
      %vm1921 = vcmp.eq.s32.totalorder %v1913, 1
      %v1922 = vsel %vm1914, %v1883, 0.0
      %v1923 = vsel %vm1915, %v1884, 0.0
      %v1924 = vsel %vm1916, %v1885, 0.0
      %v1925 = vsel %vm1917, %v1886, 0.0
      %v1926 = vsel %vm1918, %v1887, 0.0
      %v1927 = vsel %vm1919, %v1888, 0.0
      %v1928 = vsel %vm1920, %v1889, 0.0
      %v1929 = vsel %vm1921, %v1890, 0.0
      %v1930 = vpack.c.bf16 %v1923, %v1922
      %v1931 = vpack.c.bf16 %v1925, %v1924
      %v1932 = vpack.c.bf16 %v1927, %v1926
      %v1933 = vpack.c.bf16 %v1929, %v1928
      %v1938 = vrot.slane %v1930, 2
      %v1939 = vrot.slane %v1931, 4
      %v1940 = vrot.slane %v1931, 6
      %v1941 = vrot.slane %v1932, 2
      %v1942 = vrot.slane %v1933, 4
      %v1943 = vrot.slane %v1933, 6
      %vm1944 = vcmask 1041408
      %v1947 = vsel %vm1944, %v1930, %v1938
      %vm1948 = vcmask 1045508
      %v1951 = vsel %vm1948, %v1939, %v1940
      %v1952 = vsel %vm1670, %v1947, %v1951
      %v1955 = vsel %vm1944, %v1932, %v1941
      %v1958 = vsel %vm1948, %v1942, %v1943
      %v1959 = vsel %vm1670, %v1955, %v1958
      %1962 = vst [vmem:[%s335] sm:$0xff] %v1952
      %1963 = vst [vmem:[%s335 + $0x8] sm:$0xff] %v1959
      %v1964 = vld [vmem:[#allocation2 + $0x20] sm:$0xff]
      %v1965 = vld [vmem:[#allocation2 + $0x28] sm:$0xff]
      %v1966 = vld [vmem:[#allocation2 + $0x30] sm:$0xff]
      %v1967 = vld [vmem:[#allocation2 + $0x38] sm:$0xff]
      %1968 = vst [vmem:[#allocation2] sm:$0xff] %v1964
      %1969 = vst [vmem:[#allocation2 + $0x8] sm:$0xff] %v1965
      %1970 = vst [vmem:[#allocation2 + $0x10] sm:$0xff] %v1966
      %1971 = vst [vmem:[#allocation2 + $0x18] sm:$0xff] %v1967
      %1972 = vst [vmem:[#allocation2 + $0x20] sm:$0xff] %v357
      %1973 = vst [vmem:[#allocation2 + $0x28] sm:$0xff] %v358
      %1974 = vst [vmem:[#allocation2 + $0x30] sm:$0xff] %v359
      %1975 = vst [vmem:[#allocation2 + $0x38] sm:$0xff] %v360
      %s1976 = smul.u32 8, %s22
      %p1977 = scmp.lt.s32.totalorder %s21, 1
      %s1978 = scalar_select %p1977, %s21, 1
      %p1979 = scmp.lt.s32.totalorder %s1976, 15
      %s1980 = scalar_select %p1979, %s1976, 15
      %s1981 = smul.addr %s1978, 16
      %s1982 = sadd.s32 %s1980, %s1981
      %s1983 = smul.addr %s1982, 2
      %s1984 = scalar_lea.vmem %s6, %s1983
      // Predicated region
      $region49: #{block_forward.2} parent=43 // pred_check
        %p1985 = pneg %p194
      $region50: #{block_forward.2} parent=43 // pred_check_branch
        %1987 = sbr.rel (%p1985) target = $region52
      $region51: #{block_forward.2} parent=43 // pred_region
        %s1988 = smul.u32 8, %s22
      $region52: #{block_forward.2} parent=43 // pred_fallthru
        _
    $region44: #{block_forward.2} parent=5 // pred_fallthru
      _
    %p1989 = scmp.le.s32.totalorder 2, %s12
    // Predicated region
    $region53: #{block_forward.2} parent=5 // pred_check
      %p1990 = pneg %p1989
    $region54: #{block_forward.2} parent=5 // pred_check_branch
      %1992 = sbr.rel (%p1990) target = $region56
    $region55: #{block_forward.2} parent=5 // pred_region
      %s1993 = ssub.s32 %s12, 2
      // Predicated region
      $region57: #{block_forward.2} parent=55 // pred_check
        %p1994 = pneg %p200
      $region58: #{block_forward.2} parent=55 // pred_check_branch
        %1996 = sbr.rel (%p1994) target = $region60
      $region59: #{block_forward.2} parent=55 // pred_region
        %s1997 = smul.u32 8, %s24
        %p1998 = scmp.lt.s32.totalorder %s23, 1
        %s1999 = scalar_select %p1998, %s23, 1
        %p2000 = scmp.lt.s32.totalorder %s1997, 15
        %s2001 = scalar_select %p2000, %s1997, 15
        %s2002 = smul.addr %s1999, 16
        %s2003 = sadd.s32 %s2001, %s2002
        %s2004 = smul.addr %s2003, 2
        %s2005 = scalar_lea.vmem %s6, %s2004
      $region60: #{block_forward.2} parent=55 // pred_fallthru
        _
    $region56: #{block_forward.2} parent=5 // pred_fallthru
      _
  $region6: #{block_forward.2} parent=0 // loop_footer
    %s16 = sadd.s32 1, %s12
  $region7: #{block_forward.2} parent=0 // loop_footer_branch
    %11 = sbr.rel target = $region3
  $region8: #{block_forward.2} parent=0 // loop_exit
    _

// kernel: block_forward.3
$region0: #{block_forward.3}
  #allocation0 [shape = 'u32[]', space=smem, size = 0x4, offset = 0x4, fixed_abs, tag = 'smem constant byte address 0x4 - core index']
  #allocation1 [shape = 'u32[72,128]{1,0:T(1,128)}', space=vmem, size = 0x9000, scoped, tag = 'internal scratch']
  #allocation2 [shape = 'f32[4,2048]{1,0:T(4,128)}', space=vmem, size = 0x8000, scoped, tag = 'scratch operand']
  #allocation3 [shape = 'f32[108,1024]{1,0:T(8,128)}', space=vmem, size = 0x70000, scoped, tag = 'scratch operand']
  %s0 = inlined_call_operand.vmem [shape: bf16[2,4,2048], index: 0, kind: input, shape index: {}, may-alias: {0,1}]
  %s1 = inlined_call_operand.vmem [shape: bf16[2,4,2048], index: 1, kind: input, shape index: {}, may-alias: {0,1}]
  %s2 = inlined_call_operand.vmem [shape: f32[4,108], index: 2, kind: input, shape index: {}]
  %s3 = inlined_call_operand.vmem [shape: f32[4,1], index: 3, kind: input, shape index: {}]
  %s4 = inlined_call_operand.vmem [shape: f32[4,1], index: 4, kind: input, shape index: {}]
  %s5 = inlined_call_operand.vmem [shape: bf16[1,1024], index: 5, kind: input, shape index: {}]
  %s6 = inlined_call_operand.vmem [shape: bf16[2,4,2048], index: 6, kind: input, shape index: {}]
  %s7 = inlined_call_operand.vmem [shape: f32[2,4,2048], index: 7, kind: output, shape index: {}]
  %s8 = sld [smem:[#allocation0]]
  $region65: #{block_forward.3} parent=0
    _
  %s10 = ssub.s32 1, %s8
  %s11 = scalar_select 0, %s10, %s8
  loop: start=0, step=1, limit=4
  $region2: #{block_forward.3} parent=0 // loop_pre_header
    _
  $region3: #{block_forward.3} parent=0 // loop_header
    %s13 = sphi 0, %s17
    %p14 = scmp.ge.s32.totalorder %s13, 4
    %s20 = sphi 0, %s32
    %s21 = sphi 0, %s28
    %s22 = sphi 0, %s20
    %s23 = sphi 0, %s21
    %s24 = sphi 0, %s22
    %s25 = sphi 0, %s23
    %s35 = sphi 0, %s37
    %s38 = sphi 0, %s35
    %s39 = sphi 0, %s38
    %s55 = sphi 0, %s39
    %s65 = sphi 0, %s67
    %s68 = sphi 0, %s65
    %s69 = sphi 0, %s68
    %s85 = sphi 0, %s69
    %s89 = sphi 0, %s89
    %s91 = sphi 0, %s89
    %s92 = sphi 0, %s91
    %s106 = sphi 0, %s92
    %s110 = sphi 0, %s110
    %s112 = sphi 0, %s110
    %s113 = sphi 0, %s112
    %s127 = sphi 0, %s113
    %s131 = sphi 0, %s131
    %s133 = sphi 0, %s131
    %s134 = sphi 0, %s133
    %s148 = sphi 0, %s134
    %s154 = sphi 0, %s156
    %s157 = sphi 0, %s154
    %s158 = sphi 0, %s157
    %s174 = sphi 0, %s158
    %s182 = sphi 0, %s184
    %s185 = sphi 0, %s182
    %s186 = sphi 0, %s185
    %s202 = sphi 0, %s186
    %s210 = sphi 0, %s212
    %s213 = sphi 0, %s210
    %s214 = sphi 0, %s213
    %s230 = sphi 0, %s214
  $region4: #{block_forward.3} parent=0 // loop_header_branch
    %16 = sbr.rel (%p14) target = $region8
  $region5: #{block_forward.3} parent=0 // loop_body
    %s18 = ssub.s32 %s13, 1
    %s19 = ssub.s32 %s13, 2
    %s26 = sadd.s32 1, %s21
    %p27 = scmp.ge.s32.totalorder %s26, 1
    %s28 = scalar_select %p27, 0, %s26
    %s29 = sadd.s32 1, %s20
    %s30 = scalar_select %p27, %s29, %s20
    %p31 = scmp.ge.s32.totalorder %s30, 2
    %s32 = scalar_select %p31, 0, %s30
    %s33 = ssub.s32 %s20, %s32
    %p34 = scmp.eq.s32.totalorder %s33, 0
    %s36 = sadd.s32 %s35, 1
    %s37 = scalar_select %p34, %s35, %s36
    %p40 = pneg %p34
    %p41 = scmp.eq.s32.totalorder %s13, 1
    %p42 = por %p40, %p41
    %p43 = scmp.ne.s32.totalorder %s35, %s38
    %p44 = scmp.eq.s32.totalorder %s13, 0
    %p45 = por %p43, %p44
    %p46 = scmp.ne.s32.totalorder %s35, %s38
    %p47 = scmp.eq.s32.totalorder %s18, 1
    %p48 = por %p46, %p47
    %p49 = scmp.ne.s32.totalorder %s38, %s39
    %p50 = scmp.eq.s32.totalorder %s18, 0
    %p51 = por %p49, %p50
    %p52 = scmp.ne.s32.totalorder %s38, %s39
    %p53 = scmp.eq.s32.totalorder %s19, 1
    %p54 = por %p52, %p53
    %p56 = scmp.ne.s32.totalorder %s39, %s55
    %p57 = scmp.eq.s32.totalorder %s19, 0
    %p58 = por %p56, %p57
    %s59 = sadd.s32 %s21, 1
    %s60 = sadd.s32 %s28, 1
    %s61 = ssub.s32 %s20, %s32
    %s62 = ssub.s32 %s59, %s60
    %s63 = sor.u32 %s61, %s62
    %p64 = scmp.eq.s32.totalorder %s63, 0
    %s66 = sadd.s32 %s65, 1
    %s67 = scalar_select %p64, %s65, %s66
    %p70 = pneg %p64
    %p71 = scmp.eq.s32.totalorder %s13, 1
    %p72 = por %p70, %p71
    %p73 = scmp.ne.s32.totalorder %s65, %s68
    %p74 = scmp.eq.s32.totalorder %s13, 0
    %p75 = por %p73, %p74
    %p76 = scmp.ne.s32.totalorder %s65, %s68
    %p77 = scmp.eq.s32.totalorder %s18, 1
    %p78 = por %p76, %p77
    %p79 = scmp.ne.s32.totalorder %s68, %s69
    %p80 = scmp.eq.s32.totalorder %s18, 0
    %p81 = por %p79, %p80
    %p82 = scmp.ne.s32.totalorder %s68, %s69
    %p83 = scmp.eq.s32.totalorder %s19, 1
    %p84 = por %p82, %p83
    %p86 = scmp.ne.s32.totalorder %s69, %s85
    %p87 = scmp.eq.s32.totalorder %s19, 0
    %p88 = por %p86, %p87
    %s90 = sadd.s32 %s89, 1
    %p93 = scmp.eq.s32.totalorder %s13, 1
    %p94 = scmp.ne.s32.totalorder %s89, %s91
    %p95 = scmp.eq.s32.totalorder %s13, 0
    %p96 = por %p94, %p95
    %p97 = scmp.ne.s32.totalorder %s89, %s91
    %p98 = scmp.eq.s32.totalorder %s18, 1
    %p99 = por %p97, %p98
    %p100 = scmp.ne.s32.totalorder %s91, %s92
    %p101 = scmp.eq.s32.totalorder %s18, 0
    %p102 = por %p100, %p101
    %p103 = scmp.ne.s32.totalorder %s91, %s92
    %p104 = scmp.eq.s32.totalorder %s19, 1
    %p105 = por %p103, %p104
    %p107 = scmp.ne.s32.totalorder %s92, %s106
    %p108 = scmp.eq.s32.totalorder %s19, 0
    %p109 = por %p107, %p108
    %s111 = sadd.s32 %s110, 1
    %p114 = scmp.eq.s32.totalorder %s13, 1
    %p115 = scmp.ne.s32.totalorder %s110, %s112
    %p116 = scmp.eq.s32.totalorder %s13, 0
    %p117 = por %p115, %p116
    %p118 = scmp.ne.s32.totalorder %s110, %s112
    %p119 = scmp.eq.s32.totalorder %s18, 1
    %p120 = por %p118, %p119
    %p121 = scmp.ne.s32.totalorder %s112, %s113
    %p122 = scmp.eq.s32.totalorder %s18, 0
    %p123 = por %p121, %p122
    %p124 = scmp.ne.s32.totalorder %s112, %s113
    %p125 = scmp.eq.s32.totalorder %s19, 1
    %p126 = por %p124, %p125
    %p128 = scmp.ne.s32.totalorder %s113, %s127
    %p129 = scmp.eq.s32.totalorder %s19, 0
    %p130 = por %p128, %p129
    %s132 = sadd.s32 %s131, 1
    %p135 = scmp.eq.s32.totalorder %s13, 1
    %p136 = scmp.ne.s32.totalorder %s131, %s133
    %p137 = scmp.eq.s32.totalorder %s13, 0
    %p138 = por %p136, %p137
    %p139 = scmp.ne.s32.totalorder %s131, %s133
    %p140 = scmp.eq.s32.totalorder %s18, 1
    %p141 = por %p139, %p140
    %p142 = scmp.ne.s32.totalorder %s133, %s134
    %p143 = scmp.eq.s32.totalorder %s18, 0
    %p144 = por %p142, %p143
    %p145 = scmp.ne.s32.totalorder %s133, %s134
    %p146 = scmp.eq.s32.totalorder %s19, 1
    %p147 = por %p145, %p146
    %p149 = scmp.ne.s32.totalorder %s134, %s148
    %p150 = scmp.eq.s32.totalorder %s19, 0
    %p151 = por %p149, %p150
    %s152 = ssub.s32 %s21, %s28
    %p153 = scmp.eq.s32.totalorder %s152, 0
    %s155 = sadd.s32 %s154, 1
    %s156 = scalar_select %p153, %s154, %s155
    %p159 = pneg %p153
    %p160 = scmp.eq.s32.totalorder %s13, 1
    %p161 = por %p159, %p160
    %p162 = scmp.ne.s32.totalorder %s154, %s157
    %p163 = scmp.eq.s32.totalorder %s13, 0
    %p164 = por %p162, %p163
    %p165 = scmp.ne.s32.totalorder %s154, %s157
    %p166 = scmp.eq.s32.totalorder %s18, 1
    %p167 = por %p165, %p166
    %p168 = scmp.ne.s32.totalorder %s157, %s158
    %p169 = scmp.eq.s32.totalorder %s18, 0
    %p170 = por %p168, %p169
    %p171 = scmp.ne.s32.totalorder %s157, %s158
    %p172 = scmp.eq.s32.totalorder %s19, 1
    %p173 = por %p171, %p172
    %p175 = scmp.ne.s32.totalorder %s158, %s174
    %p176 = scmp.eq.s32.totalorder %s19, 0
    %p177 = por %p175, %p176
    %s178 = ssub.s32 %s20, %s32
    %s179 = ssub.s32 %s21, %s28
    %s180 = sor.u32 %s178, %s179
    %p181 = scmp.eq.s32.totalorder %s180, 0
    %s183 = sadd.s32 %s182, 1
    %s184 = scalar_select %p181, %s182, %s183
    %p187 = pneg %p181
    %p188 = scmp.eq.s32.totalorder %s13, 1
    %p189 = por %p187, %p188
    %p190 = scmp.ne.s32.totalorder %s182, %s185
    %p191 = scmp.eq.s32.totalorder %s13, 0
    %p192 = por %p190, %p191
    %p193 = scmp.ne.s32.totalorder %s182, %s185
    %p194 = scmp.eq.s32.totalorder %s18, 1
    %p195 = por %p193, %p194
    %p196 = scmp.ne.s32.totalorder %s185, %s186
    %p197 = scmp.eq.s32.totalorder %s18, 0
    %p198 = por %p196, %p197
    %p199 = scmp.ne.s32.totalorder %s185, %s186
    %p200 = scmp.eq.s32.totalorder %s19, 1
    %p201 = por %p199, %p200
    %p203 = scmp.ne.s32.totalorder %s186, %s202
    %p204 = scmp.eq.s32.totalorder %s19, 0
    %p205 = por %p203, %p204
    %s206 = ssub.s32 %s20, %s32
    %s207 = ssub.s32 %s21, %s28
    %s208 = sor.u32 %s206, %s207
    %p209 = scmp.eq.s32.totalorder %s208, 0
    %s211 = sadd.s32 %s210, 1
    %s212 = scalar_select %p209, %s210, %s211
    %p215 = pneg %p209
    %p216 = scmp.eq.s32.totalorder %s13, 1
    %p217 = por %p215, %p216
    %p218 = scmp.ne.s32.totalorder %s210, %s213
    %p219 = scmp.eq.s32.totalorder %s13, 0
    %p220 = por %p218, %p219
    %p221 = scmp.ne.s32.totalorder %s210, %s213
    %p222 = scmp.eq.s32.totalorder %s18, 1
    %p223 = por %p221, %p222
    %p224 = scmp.ne.s32.totalorder %s213, %s214
    %p225 = scmp.eq.s32.totalorder %s18, 0
    %p226 = por %p224, %p225
    %p227 = scmp.ne.s32.totalorder %s213, %s214
    %p228 = scmp.eq.s32.totalorder %s19, 1
    %p229 = por %p227, %p228
    %p231 = scmp.ne.s32.totalorder %s214, %s230
    %p232 = scmp.eq.s32.totalorder %s19, 0
    %p233 = por %p231, %p232
    %p234 = scmp.le.s32.totalorder 1, %s13
    %p235 = scmp.lt.s32.totalorder %s13, 3
    %p236 = pnand %p234, %p235
    %p237 = pneg %p236
    // Predicated region
    $region9: #{block_forward.3} parent=5 // pred_check
      _
    $region10: #{block_forward.3} parent=5 // pred_check_branch
      %239 = sbr.rel (%p236) target = $region12
    $region11: #{block_forward.3} parent=5 // pred_region
      %s240 = ssub.s32 %s13, 1
      // Predicated region
      $region13: #{block_forward.3} parent=11 // pred_check
        %p241 = pneg %p102
      $region14: #{block_forward.3} parent=11 // pred_check_branch
        %243 = sbr.rel (%p241) target = $region16
      $region15: #{block_forward.3} parent=11 // pred_region
        _
      $region16: #{block_forward.3} parent=11 // pred_fallthru
        _
      // Predicated region
      $region17: #{block_forward.3} parent=11 // pred_check
        %p244 = pneg %p123
      $region18: #{block_forward.3} parent=11 // pred_check_branch
        %246 = sbr.rel (%p244) target = $region20
      $region19: #{block_forward.3} parent=11 // pred_region
        _
      $region20: #{block_forward.3} parent=11 // pred_fallthru
        _
      // Predicated region
      $region21: #{block_forward.3} parent=11 // pred_check
        %p247 = pneg %p144
      $region22: #{block_forward.3} parent=11 // pred_check_branch
        %249 = sbr.rel (%p247) target = $region24
      $region23: #{block_forward.3} parent=11 // pred_region
        _
      $region24: #{block_forward.3} parent=11 // pred_fallthru
        _
      // Predicated region
      $region25: #{block_forward.3} parent=11 // pred_check
        %p250 = pneg %p170
      $region26: #{block_forward.3} parent=11 // pred_check_branch
        %252 = sbr.rel (%p250) target = $region28
      $region27: #{block_forward.3} parent=11 // pred_region
        %s253 = smul.u32 8, %s23
        %p254 = scmp.lt.s32.totalorder %s253, 7
        %s255 = scalar_select %p254, %s253, 7
        %s256 = scalar_lea.vmem %s5, %s255
        %s257 = smul.u32 8, %s23
      $region28: #{block_forward.3} parent=11 // pred_fallthru
        _
    $region12: #{block_forward.3} parent=5 // pred_fallthru
      _
    %p258 = scmp.lt.s32.totalorder %s13, 2
    // Predicated region
    $region29: #{block_forward.3} parent=5 // pred_check
      %p259 = pneg %p258
    $region30: #{block_forward.3} parent=5 // pred_check_branch
      %261 = sbr.rel (%p259) target = $region32
    $region31: #{block_forward.3} parent=5 // pred_region
      // Predicated region
      $region33: #{block_forward.3} parent=31 // pred_check
        %p262 = pneg %p45
      $region34: #{block_forward.3} parent=31 // pred_check_branch
        %264 = sbr.rel (%p262) target = $region36
      $region35: #{block_forward.3} parent=31 // pred_region
        %p265 = scmp.lt.s32.totalorder %s20, 1
        %s266 = scalar_select %p265, %s20, 1
        %s267 = smul.addr %s266, 16
        %s268 = smul.addr %s267, 2
        %s269 = scalar_lea.vmem %s0, %s268
      $region36: #{block_forward.3} parent=31 // pred_fallthru
        _
      // Predicated region
      $region37: #{block_forward.3} parent=31 // pred_check
        %p270 = pneg %p75
      $region38: #{block_forward.3} parent=31 // pred_check_branch
        %272 = sbr.rel (%p270) target = $region40
      $region39: #{block_forward.3} parent=31 // pred_region
        %s273 = sadd.s32 %s21, 1
        %s274 = smul.u32 8, %s273
        %p275 = scmp.lt.s32.totalorder %s20, 1
        %s276 = scalar_select %p275, %s20, 1
        %p277 = scmp.lt.s32.totalorder %s274, 15
        %s278 = scalar_select %p277, %s274, 15
        %s279 = smul.addr %s276, 16
        %s280 = sadd.s32 %s278, %s279
        %s281 = smul.addr %s280, 2
        %s282 = scalar_lea.vmem %s1, %s281
        %s283 = sadd.s32 %s21, 1
        %s284 = smul.u32 8, %s283
      $region40: #{block_forward.3} parent=31 // pred_fallthru
        _
      // Predicated region
      $region41: #{block_forward.3} parent=31 // pred_check
        %p285 = pneg %p192
      $region42: #{block_forward.3} parent=31 // pred_check_branch
        %287 = sbr.rel (%p285) target = $region44
      $region43: #{block_forward.3} parent=31 // pred_region
        %s288 = smul.u32 8, %s21
        %p289 = scmp.lt.s32.totalorder %s20, 1
        %s290 = scalar_select %p289, %s20, 1
        %p291 = scmp.lt.s32.totalorder %s288, 15
        %s292 = scalar_select %p291, %s288, 15
        %s293 = smul.addr %s290, 16
        %s294 = sadd.s32 %s292, %s293
        %s295 = smul.addr %s294, 2
        %s296 = scalar_lea.vmem %s6, %s295
        %s297 = smul.u32 8, %s21
      $region44: #{block_forward.3} parent=31 // pred_fallthru
        _
    $region32: #{block_forward.3} parent=5 // pred_fallthru
      _
    %p298 = scmp.le.s32.totalorder 1, %s13
    %p299 = scmp.lt.s32.totalorder %s13, 3
    %p300 = pnand %p298, %p299
    %p301 = pneg %p300
    // Predicated region
    $region45: #{block_forward.3} parent=5 // pred_check
      _
    $region46: #{block_forward.3} parent=5 // pred_check_branch
      %303 = sbr.rel (%p300) target = $region48
    $region47: #{block_forward.3} parent=5 // pred_region
      %s304 = ssub.s32 %s13, 1
      %p305 = scmp.lt.s32.totalorder %s22, 1
      %s306 = scalar_select %p305, %s22, 1
      %s307 = smul.addr %s306, 16
      %s308 = smul.addr %s307, 2
      %s309 = scalar_lea.vmem %s0, %s308
      %p310 = pneg %p51
      %p311 = pneg %p48
      %s312 = sadd.s32 %s23, 1
      %s313 = smul.u32 8, %s312
      %p314 = scmp.lt.s32.totalorder %s22, 1
      %s315 = scalar_select %p314, %s22, 1
      %p316 = scmp.lt.s32.totalorder %s313, 15
      %s317 = scalar_select %p316, %s313, 15
      %s318 = smul.addr %s315, 16
      %s319 = sadd.s32 %s317, %s318
      %s320 = smul.addr %s319, 2
      %s321 = scalar_lea.vmem %s1, %s320
      %p322 = pneg %p81
      %p323 = pneg %p78
      %p324 = pneg %p102
      %p325 = pneg %p99
      %p326 = pneg %p123
      %p327 = pneg %p120
      %p328 = pneg %p144
      %p329 = pneg %p141
      %s330 = smul.u32 8, %s23
      %p331 = scmp.lt.s32.totalorder %s330, 7
      %s332 = scalar_select %p331, %s330, 7
      %s333 = scalar_lea.vmem %s5, %s332
      %p334 = pneg %p170
      %p335 = pneg %p167
      %s336 = smul.u32 8, %s23
      %p337 = scmp.lt.s32.totalorder %s22, 1
      %s338 = scalar_select %p337, %s22, 1
      %p339 = scmp.lt.s32.totalorder %s336, 15
      %s340 = scalar_select %p339, %s336, 15
      %s341 = smul.addr %s338, 16
      %s342 = sadd.s32 %s340, %s341
      %s343 = smul.addr %s342, 2
      %s344 = scalar_lea.vmem %s6, %s343
      %p345 = pneg %p198
      %p346 = pneg %p195
      %p347 = pneg %p226
      %p348 = pneg %p223
      %s349 = smul.u32 8, %s23
      %p350 = scmp.lt.s32.totalorder %s22, 1
      %s351 = scalar_select %p350, %s22, 1
      %p352 = scmp.lt.s32.totalorder %s349, 15
      %s353 = scalar_select %p352, %s349, 15
      %s354 = smul.addr %s351, 16
      %s355 = sadd.s32 %s353, %s354
      %s356 = smul.addr %s355, 4
      %s357 = scalar_lea.vmem %s7, %s356
      %p358 = scmp.lt.s32.totalorder %s22, 1
      %s359 = scalar_select %p358, %s22, 1
      %s360 = smul.addr %s359, 16
      %s361 = smul.addr %s360, 2
      %s362 = scalar_lea.vmem %s0, %s361
      %s363 = sadd.s32 %s23, 1
      %s364 = smul.u32 8, %s363
      %p365 = scmp.lt.s32.totalorder %s22, 1
      %s366 = scalar_select %p365, %s22, 1
      %p367 = scmp.lt.s32.totalorder %s364, 15
      %s368 = scalar_select %p367, %s364, 15
      %s369 = smul.addr %s366, 16
      %s370 = sadd.s32 %s368, %s369
      %s371 = smul.addr %s370, 2
      %s372 = scalar_lea.vmem %s1, %s371
      %s373 = sadd.s32 %s23, 1
      %s374 = smul.u32 8, %s373
      %s375 = smul.u32 8, %s23
      %p376 = scmp.lt.s32.totalorder %s375, 7
      %s377 = scalar_select %p376, %s375, 7
      %s378 = scalar_lea.vmem %s5, %s377
      %s379 = smul.u32 8, %s23
      %s380 = smul.u32 8, %s23
      %p381 = scmp.lt.s32.totalorder %s22, 1
      %s382 = scalar_select %p381, %s22, 1
      %p383 = scmp.lt.s32.totalorder %s380, 15
      %s384 = scalar_select %p383, %s380, 15
      %s385 = smul.addr %s382, 16
      %s386 = sadd.s32 %s384, %s385
      %s387 = smul.addr %s386, 2
      %s388 = scalar_lea.vmem %s6, %s387
      %s389 = smul.u32 8, %s23
      %s390 = smul.u32 8, %s23
      %p391 = scmp.lt.s32.totalorder %s22, 1
      %s392 = scalar_select %p391, %s22, 1
      %p393 = scmp.lt.s32.totalorder %s390, 15
      %s394 = scalar_select %p393, %s390, 15
      %s395 = smul.addr %s392, 16
      %s396 = sadd.s32 %s394, %s395
      %s397 = smul.addr %s396, 4
      %s398 = scalar_lea.vmem %s7, %s397
      %s399 = smul.u32 8, %s23
      %p400 = scmp.eq.s32.totalorder %s23, 0
      // Predicated region
      $region49: #{block_forward.3} parent=47 // pred_check
        %p401 = pneg %p400
      $region50: #{block_forward.3} parent=47 // pred_check_branch
        %403 = sbr.rel (%p401) target = $region52
      $region51: #{block_forward.3} parent=47 // pred_region
        %404 = vst [vmem:[#allocation2] sm:$0xff] 0.0
        %405 = vst [vmem:[#allocation2 + $0x8] sm:$0xff] 0.0
        %406 = vst [vmem:[#allocation2 + $0x10] sm:$0xff] 0.0
        %407 = vst [vmem:[#allocation2 + $0x18] sm:$0xff] 0.0
        %v408 = vld [vmem:[%s362] sm:$0xff]
        %v409 = vld [vmem:[%s362 + $0x8] sm:$0xff]
        %v410 = vunpack.c.l.bf16 %v408
        %v411 = vunpack.c.h.bf16 %v408
        %v412 = vunpack.c.l.bf16 %v409
        %v413 = vunpack.c.h.bf16 %v409
        %414 = vst [vmem:[#allocation2 + $0x20] sm:$0xff] %v410
        %415 = vst [vmem:[#allocation2 + $0x28] sm:$0xff] %v411
        %416 = vst [vmem:[#allocation2 + $0x30] sm:$0xff] %v412
        %417 = vst [vmem:[#allocation2 + $0x38] sm:$0xff] %v413
      $region52: #{block_forward.3} parent=47 // pred_fallthru
        _
      %v418 = vld [vmem:[%s372] sm:$0xff]
      %v419 = vld [vmem:[%s372 + $0x8] sm:$0xff]
      %v420 = vunpack.c.l.bf16 %v418
      %v421 = vunpack.c.h.bf16 %v418
      %v422 = vunpack.c.l.bf16 %v419
      %v423 = vunpack.c.h.bf16 %v419
      %v424 = vld [vmem:[#allocation2] sm:$0xff]
      %v425 = vld [vmem:[#allocation2 + $0x8] sm:$0xff]
      %v426 = vld [vmem:[#allocation2 + $0x10] sm:$0xff]
      %v427 = vld [vmem:[#allocation2 + $0x18] sm:$0xff]
      %v428 = vld [vmem:[#allocation2 + $0x20] sm:$0xff]
      %v429 = vld [vmem:[#allocation2 + $0x28] sm:$0xff]
      %v430 = vld [vmem:[#allocation2 + $0x30] sm:$0xff]
      %v431 = vld [vmem:[#allocation2 + $0x38] sm:$0xff]
      %440 = vst [vmem:[#allocation1] ss:$2 sm:$0xff] %v424
      %s441 = scalar_lea.vmem [#allocation1], 16
      %442 = vst [vmem:[%s441] ss:$2 sm:$0xff] %v425
      %s443 = scalar_lea.vmem [#allocation1], 32
      %444 = vst [vmem:[%s443] ss:$2 sm:$0xff] %v426
      %s445 = scalar_lea.vmem [#allocation1], 48
      %446 = vst [vmem:[%s445] ss:$2 sm:$0xff] %v427
      %v447 = vld.sshfl [vmem:[#allocation1 + $0x38] sm:$0xff pattern:$0x75316420]
      %448 = vst [vmem:[#allocation1] ss:$2 sm:$0xff] %v428
      %449 = vst [vmem:[%s441] ss:$2 sm:$0xff] %v429
      %450 = vst [vmem:[%s443] ss:$2 sm:$0xff] %v430
      %451 = vst [vmem:[%s445] ss:$2 sm:$0xff] %v431
      %v452 = vld.sshfl [vmem:[#allocation1] sm:$0xff pattern:$0x75316420]
      %v453 = vld.sshfl [vmem:[#allocation1 + $0x8] sm:$0xff pattern:$0x75316420]
      %v454 = vld.sshfl [vmem:[#allocation1 + $0x10] sm:$0xff pattern:$0x75316420]
      %v455 = vld.sshfl [vmem:[#allocation1 + $0x18] sm:$0xff pattern:$0x75316420]
      %v456 = vld.sshfl [vmem:[#allocation1 + $0x20] sm:$0xff pattern:$0x75316420]
      %v457 = vld.sshfl [vmem:[#allocation1 + $0x28] sm:$0xff pattern:$0x75316420]
      %v458 = vld.sshfl [vmem:[#allocation1 + $0x30] sm:$0xff pattern:$0x75316420]
      %v459 = vld.sshfl [vmem:[#allocation1 + $0x38] sm:$0xff pattern:$0x75316420]
      %464 = vst [vmem:[#allocation1] ss:$2 sm:$0xff] %v420
      %s465 = scalar_lea.vmem [#allocation1], 16
      %466 = vst [vmem:[%s465] ss:$2 sm:$0xff] %v421
      %s467 = scalar_lea.vmem [#allocation1], 32
      %468 = vst [vmem:[%s467] ss:$2 sm:$0xff] %v422
      %s469 = scalar_lea.vmem [#allocation1], 48
      %470 = vst [vmem:[%s469] ss:$2 sm:$0xff] %v423
      %v471 = vld.sshfl [vmem:[#allocation1] sm:$0xff pattern:$0x75316420]
      %472 = vrot.lane.b32.xlu0 %v447, 111
      %v473 = vpop.permute.xlu0 %472
      %474 = vrot.lane.b32.xlu0 %v452, 111
      %v475 = vpop.permute.xlu0 %474
      %476 = vrot.lane.b32.xlu0 %v453, 111
      %v477 = vpop.permute.xlu0 %476
      %478 = vrot.lane.b32.xlu0 %v454, 111
      %v479 = vpop.permute.xlu0 %478
      %480 = vrot.lane.b32.xlu0 %v455, 111
      %v481 = vpop.permute.xlu0 %480
      %482 = vrot.lane.b32.xlu0 %v456, 111
      %v483 = vpop.permute.xlu0 %482
      %484 = vrot.lane.b32.xlu0 %v457, 111
      %v485 = vpop.permute.xlu0 %484
      %486 = vrot.lane.b32.xlu0 %v458, 111
      %v487 = vpop.permute.xlu0 %486
      %488 = vrot.lane.b32.xlu0 %v459, 111
      %v489 = vpop.permute.xlu0 %488
      %vm490 = vcmask 908288
      %v491 = vsel %vm490, %v473, %v475
      %v492 = vsel %vm490, %v475, %v477
      %v493 = vsel %vm490, %v477, %v479
      %v494 = vsel %vm490, %v479, %v481
      %v495 = vsel %vm490, %v481, %v483
      %v496 = vsel %vm490, %v483, %v485
      %v497 = vsel %vm490, %v485, %v487
      %v498 = vsel %vm490, %v487, %v489
      %507 = vst [vmem:[#allocation3] sm:$0xf] %v491
      %508 = vst [vmem:[#allocation3 + $0x8] sm:$0xf] %v492
      %509 = vst [vmem:[#allocation3 + $0x10] sm:$0xf] %v493
      %510 = vst [vmem:[#allocation3 + $0x18] sm:$0xf] %v494
      %511 = vst [vmem:[#allocation3 + $0x20] sm:$0xf] %v495
      %512 = vst [vmem:[#allocation3 + $0x28] sm:$0xf] %v496
      %513 = vst [vmem:[#allocation3 + $0x30] sm:$0xf] %v497
      %514 = vst [vmem:[#allocation3 + $0x38] sm:$0xf] %v498
      %v515 = vrot.slane %v447, 4
      %v516 = vrot.slane %v452, 4
      %v517 = vrot.slane %v453, 4
      %v518 = vrot.slane %v454, 4
      %v519 = vrot.slane %v455, 4
      %v520 = vrot.slane %v456, 4
      %v521 = vrot.slane %v457, 4
      %v522 = vrot.slane %v458, 4
      %v523 = vrot.slane %v459, 4
      %524 = vrot.lane.b32.xlu0 %v515, 110
      %v525 = vpop.permute.xlu0 %524
      %526 = vrot.lane.b32.xlu0 %v516, 110
      %v527 = vpop.permute.xlu0 %526
      %528 = vrot.lane.b32.xlu0 %v517, 110
      %v529 = vpop.permute.xlu0 %528
      %530 = vrot.lane.b32.xlu0 %v518, 110
      %v531 = vpop.permute.xlu0 %530
      %532 = vrot.lane.b32.xlu0 %v519, 110
      %v533 = vpop.permute.xlu0 %532
      %534 = vrot.lane.b32.xlu0 %v520, 110
      %v535 = vpop.permute.xlu0 %534
      %536 = vrot.lane.b32.xlu0 %v521, 110
      %v537 = vpop.permute.xlu0 %536
      %538 = vrot.lane.b32.xlu0 %v522, 110
      %v539 = vpop.permute.xlu0 %538
      %540 = vrot.lane.b32.xlu0 %v523, 110
      %v541 = vpop.permute.xlu0 %540
      %vm542 = vcmask 900096
      %v543 = vsel %vm542, %v525, %v527
      %v544 = vsel %vm542, %v527, %v529
      %v545 = vsel %vm542, %v529, %v531
      %v546 = vsel %vm542, %v531, %v533
      %v547 = vsel %vm542, %v533, %v535
      %v548 = vsel %vm542, %v535, %v537
      %v549 = vsel %vm542, %v537, %v539
      %v550 = vsel %vm542, %v539, %v541
      %559 = vst [vmem:[#allocation3] sm:$0xf0] %v543
      %560 = vst [vmem:[#allocation3 + $0x8] sm:$0xf0] %v544
      %561 = vst [vmem:[#allocation3 + $0x10] sm:$0xf0] %v545
      %562 = vst [vmem:[#allocation3 + $0x18] sm:$0xf0] %v546
      %563 = vst [vmem:[#allocation3 + $0x20] sm:$0xf0] %v547
      %564 = vst [vmem:[#allocation3 + $0x28] sm:$0xf0] %v548
      %565 = vst [vmem:[#allocation3 + $0x30] sm:$0xf0] %v549
      %566 = vst [vmem:[#allocation3 + $0x38] sm:$0xf0] %v550
      %567 = vrot.lane.b32.xlu0 %v447, 109
      %v568 = vpop.permute.xlu0 %567
      %569 = vrot.lane.b32.xlu0 %v452, 109
      %v570 = vpop.permute.xlu0 %569
      %571 = vrot.lane.b32.xlu0 %v453, 109
      %v572 = vpop.permute.xlu0 %571
      %573 = vrot.lane.b32.xlu0 %v454, 109
      %v574 = vpop.permute.xlu0 %573
      %575 = vrot.lane.b32.xlu0 %v455, 109
      %v576 = vpop.permute.xlu0 %575
      %577 = vrot.lane.b32.xlu0 %v456, 109
      %v578 = vpop.permute.xlu0 %577
      %579 = vrot.lane.b32.xlu0 %v457, 109
      %v580 = vpop.permute.xlu0 %579
      %581 = vrot.lane.b32.xlu0 %v458, 109
      %v582 = vpop.permute.xlu0 %581
      %583 = vrot.lane.b32.xlu0 %v459, 109
      %v584 = vpop.permute.xlu0 %583
      %vm585 = vcmask 891904
      %v586 = vsel %vm585, %v568, %v570
      %v587 = vsel %vm585, %v570, %v572
      %v588 = vsel %vm585, %v572, %v574
      %v589 = vsel %vm585, %v574, %v576
      %v590 = vsel %vm585, %v576, %v578
      %v591 = vsel %vm585, %v578, %v580
      %v592 = vsel %vm585, %v580, %v582
      %v593 = vsel %vm585, %v582, %v584
      %602 = vst [vmem:[#allocation3 + $0x40] sm:$0xf] %v586
      %603 = vst [vmem:[#allocation3 + $0x48] sm:$0xf] %v587
      %604 = vst [vmem:[#allocation3 + $0x50] sm:$0xf] %v588
      %605 = vst [vmem:[#allocation3 + $0x58] sm:$0xf] %v589
      %606 = vst [vmem:[#allocation3 + $0x60] sm:$0xf] %v590
      %607 = vst [vmem:[#allocation3 + $0x68] sm:$0xf] %v591
      %608 = vst [vmem:[#allocation3 + $0x70] sm:$0xf] %v592
      %609 = vst [vmem:[#allocation3 + $0x78] sm:$0xf] %v593
      %610 = vrot.lane.b32.xlu0 %v515, 101
      %v611 = vpop.permute.xlu0 %610
      %612 = vrot.lane.b32.xlu0 %v516, 101
      %v613 = vpop.permute.xlu0 %612
      %614 = vrot.lane.b32.xlu0 %v517, 101
      %v615 = vpop.permute.xlu0 %614
      %616 = vrot.lane.b32.xlu0 %v518, 101
      %v617 = vpop.permute.xlu0 %616
      %618 = vrot.lane.b32.xlu0 %v519, 101
      %v619 = vpop.permute.xlu0 %618
      %620 = vrot.lane.b32.xlu0 %v520, 101
      %v621 = vpop.permute.xlu0 %620
      %622 = vrot.lane.b32.xlu0 %v521, 101
      %v623 = vpop.permute.xlu0 %622
      %624 = vrot.lane.b32.xlu0 %v522, 101
      %v625 = vpop.permute.xlu0 %624
      %626 = vrot.lane.b32.xlu0 %v523, 101
      %v627 = vpop.permute.xlu0 %626
      %vm628 = vcmask 826368
      %v629 = vsel %vm628, %v611, %v613
      %v630 = vsel %vm628, %v613, %v615
      %v631 = vsel %vm628, %v615, %v617
      %v632 = vsel %vm628, %v617, %v619
      %v633 = vsel %vm628, %v619, %v621
      %v634 = vsel %vm628, %v621, %v623
      %v635 = vsel %vm628, %v623, %v625
      %v636 = vsel %vm628, %v625, %v627
      %645 = vst [vmem:[#allocation3 + $0x40] sm:$0xf0] %v629
      %646 = vst [vmem:[#allocation3 + $0x48] sm:$0xf0] %v630
      %647 = vst [vmem:[#allocation3 + $0x50] sm:$0xf0] %v631
      %648 = vst [vmem:[#allocation3 + $0x58] sm:$0xf0] %v632
      %649 = vst [vmem:[#allocation3 + $0x60] sm:$0xf0] %v633
      %650 = vst [vmem:[#allocation3 + $0x68] sm:$0xf0] %v634
      %651 = vst [vmem:[#allocation3 + $0x70] sm:$0xf0] %v635
      %652 = vst [vmem:[#allocation3 + $0x78] sm:$0xf0] %v636
      %653 = vrot.lane.b32.xlu0 %v447, 100
      %v654 = vpop.permute.xlu0 %653
      %655 = vrot.lane.b32.xlu0 %v452, 100
      %v656 = vpop.permute.xlu0 %655
      %657 = vrot.lane.b32.xlu0 %v453, 100
      %v658 = vpop.permute.xlu0 %657
      %659 = vrot.lane.b32.xlu0 %v454, 100
      %v660 = vpop.permute.xlu0 %659
      %661 = vrot.lane.b32.xlu0 %v455, 100
      %v662 = vpop.permute.xlu0 %661
      %663 = vrot.lane.b32.xlu0 %v456, 100
      %v664 = vpop.permute.xlu0 %663
      %665 = vrot.lane.b32.xlu0 %v457, 100
      %v666 = vpop.permute.xlu0 %665
      %667 = vrot.lane.b32.xlu0 %v458, 100
      %v668 = vpop.permute.xlu0 %667
      %669 = vrot.lane.b32.xlu0 %v459, 100
      %v670 = vpop.permute.xlu0 %669
      %vm671 = vcmask 818176
      %v672 = vsel %vm671, %v654, %v656
      %v673 = vsel %vm671, %v656, %v658
      %v674 = vsel %vm671, %v658, %v660
      %v675 = vsel %vm671, %v660, %v662
      %v676 = vsel %vm671, %v662, %v664
      %v677 = vsel %vm671, %v664, %v666
      %v678 = vsel %vm671, %v666, %v668
      %v679 = vsel %vm671, %v668, %v670
      %688 = vst [vmem:[#allocation3 + $0x80] sm:$0xf] %v672
      %689 = vst [vmem:[#allocation3 + $0x88] sm:$0xf] %v673
      %690 = vst [vmem:[#allocation3 + $0x90] sm:$0xf] %v674
      %691 = vst [vmem:[#allocation3 + $0x98] sm:$0xf] %v675
      %692 = vst [vmem:[#allocation3 + $0xa0] sm:$0xf] %v676
      %693 = vst [vmem:[#allocation3 + $0xa8] sm:$0xf] %v677
      %694 = vst [vmem:[#allocation3 + $0xb0] sm:$0xf] %v678
      %695 = vst [vmem:[#allocation3 + $0xb8] sm:$0xf] %v679
      %696 = vrot.lane.b32.xlu0 %v515, 99
      %v697 = vpop.permute.xlu0 %696
      %698 = vrot.lane.b32.xlu0 %v516, 99
      %v699 = vpop.permute.xlu0 %698
      %700 = vrot.lane.b32.xlu0 %v517, 99
      %v701 = vpop.permute.xlu0 %700
      %702 = vrot.lane.b32.xlu0 %v518, 99
      %v703 = vpop.permute.xlu0 %702
      %704 = vrot.lane.b32.xlu0 %v519, 99
      %v705 = vpop.permute.xlu0 %704
      %706 = vrot.lane.b32.xlu0 %v520, 99
      %v707 = vpop.permute.xlu0 %706
      %708 = vrot.lane.b32.xlu0 %v521, 99
      %v709 = vpop.permute.xlu0 %708
      %710 = vrot.lane.b32.xlu0 %v522, 99
      %v711 = vpop.permute.xlu0 %710
      %712 = vrot.lane.b32.xlu0 %v523, 99
      %v713 = vpop.permute.xlu0 %712
      %vm714 = vcmask 809984
      %v715 = vsel %vm714, %v697, %v699
      %v716 = vsel %vm714, %v699, %v701
      %v717 = vsel %vm714, %v701, %v703
      %v718 = vsel %vm714, %v703, %v705
      %v719 = vsel %vm714, %v705, %v707
      %v720 = vsel %vm714, %v707, %v709
      %v721 = vsel %vm714, %v709, %v711
      %v722 = vsel %vm714, %v711, %v713
      %731 = vst [vmem:[#allocation3 + $0x80] sm:$0xf0] %v715
      %732 = vst [vmem:[#allocation3 + $0x88] sm:$0xf0] %v716
      %733 = vst [vmem:[#allocation3 + $0x90] sm:$0xf0] %v717
      %734 = vst [vmem:[#allocation3 + $0x98] sm:$0xf0] %v718
      %735 = vst [vmem:[#allocation3 + $0xa0] sm:$0xf0] %v719
      %736 = vst [vmem:[#allocation3 + $0xa8] sm:$0xf0] %v720
      %737 = vst [vmem:[#allocation3 + $0xb0] sm:$0xf0] %v721
      %738 = vst [vmem:[#allocation3 + $0xb8] sm:$0xf0] %v722
      %739 = vrot.lane.b32.xlu0 %v447, 91
      %v740 = vpop.permute.xlu0 %739
      %741 = vrot.lane.b32.xlu0 %v452, 91
      %v742 = vpop.permute.xlu0 %741
      %743 = vrot.lane.b32.xlu0 %v453, 91
      %v744 = vpop.permute.xlu0 %743
      %745 = vrot.lane.b32.xlu0 %v454, 91
      %v746 = vpop.permute.xlu0 %745
      %747 = vrot.lane.b32.xlu0 %v455, 91
      %v748 = vpop.permute.xlu0 %747
      %749 = vrot.lane.b32.xlu0 %v456, 91
      %v750 = vpop.permute.xlu0 %749
      %751 = vrot.lane.b32.xlu0 %v457, 91
      %v752 = vpop.permute.xlu0 %751
      %753 = vrot.lane.b32.xlu0 %v458, 91
      %v754 = vpop.permute.xlu0 %753
      %755 = vrot.lane.b32.xlu0 %v459, 91
      %v756 = vpop.permute.xlu0 %755
      %vm757 = vcmask 744448
      %v758 = vsel %vm757, %v740, %v742
      %v759 = vsel %vm757, %v742, %v744
      %v760 = vsel %vm757, %v744, %v746
      %v761 = vsel %vm757, %v746, %v748
      %v762 = vsel %vm757, %v748, %v750
      %v763 = vsel %vm757, %v750, %v752
      %v764 = vsel %vm757, %v752, %v754
      %v765 = vsel %vm757, %v754, %v756
      %774 = vst [vmem:[#allocation3 + $0xc0] sm:$0xf] %v758
      %775 = vst [vmem:[#allocation3 + $0xc8] sm:$0xf] %v759
      %776 = vst [vmem:[#allocation3 + $0xd0] sm:$0xf] %v760
      %777 = vst [vmem:[#allocation3 + $0xd8] sm:$0xf] %v761
      %778 = vst [vmem:[#allocation3 + $0xe0] sm:$0xf] %v762
      %779 = vst [vmem:[#allocation3 + $0xe8] sm:$0xf] %v763
      %780 = vst [vmem:[#allocation3 + $0xf0] sm:$0xf] %v764
      %781 = vst [vmem:[#allocation3 + $0xf8] sm:$0xf] %v765
      %782 = vrot.lane.b32.xlu0 %v515, 90
      %v783 = vpop.permute.xlu0 %782
      %784 = vrot.lane.b32.xlu0 %v516, 90
      %v785 = vpop.permute.xlu0 %784
      %786 = vrot.lane.b32.xlu0 %v517, 90
      %v787 = vpop.permute.xlu0 %786
      %788 = vrot.lane.b32.xlu0 %v518, 90
      %v789 = vpop.permute.xlu0 %788
      %790 = vrot.lane.b32.xlu0 %v519, 90
      %v791 = vpop.permute.xlu0 %790
      %792 = vrot.lane.b32.xlu0 %v520, 90
      %v793 = vpop.permute.xlu0 %792
      %794 = vrot.lane.b32.xlu0 %v521, 90
      %v795 = vpop.permute.xlu0 %794
      %796 = vrot.lane.b32.xlu0 %v522, 90
      %v797 = vpop.permute.xlu0 %796
      %798 = vrot.lane.b32.xlu0 %v523, 90
      %v799 = vpop.permute.xlu0 %798
      %vm800 = vcmask 736256
      %v801 = vsel %vm800, %v783, %v785
      %v802 = vsel %vm800, %v785, %v787
      %v803 = vsel %vm800, %v787, %v789
      %v804 = vsel %vm800, %v789, %v791
      %v805 = vsel %vm800, %v791, %v793
      %v806 = vsel %vm800, %v793, %v795
      %v807 = vsel %vm800, %v795, %v797
      %v808 = vsel %vm800, %v797, %v799
      %817 = vst [vmem:[#allocation3 + $0xc0] sm:$0xf0] %v801
      %818 = vst [vmem:[#allocation3 + $0xc8] sm:$0xf0] %v802
      %819 = vst [vmem:[#allocation3 + $0xd0] sm:$0xf0] %v803
      %820 = vst [vmem:[#allocation3 + $0xd8] sm:$0xf0] %v804
      %821 = vst [vmem:[#allocation3 + $0xe0] sm:$0xf0] %v805
      %822 = vst [vmem:[#allocation3 + $0xe8] sm:$0xf0] %v806
      %823 = vst [vmem:[#allocation3 + $0xf0] sm:$0xf0] %v807
      %824 = vst [vmem:[#allocation3 + $0xf8] sm:$0xf0] %v808
      %825 = vrot.lane.b32.xlu0 %v447, 89
      %v826 = vpop.permute.xlu0 %825
      %827 = vrot.lane.b32.xlu0 %v452, 89
      %v828 = vpop.permute.xlu0 %827
      %829 = vrot.lane.b32.xlu0 %v453, 89
      %v830 = vpop.permute.xlu0 %829
      %831 = vrot.lane.b32.xlu0 %v454, 89
      %v832 = vpop.permute.xlu0 %831
      %833 = vrot.lane.b32.xlu0 %v455, 89
      %v834 = vpop.permute.xlu0 %833
      %835 = vrot.lane.b32.xlu0 %v456, 89
      %v836 = vpop.permute.xlu0 %835
      %837 = vrot.lane.b32.xlu0 %v457, 89
      %v838 = vpop.permute.xlu0 %837
      %839 = vrot.lane.b32.xlu0 %v458, 89
      %v840 = vpop.permute.xlu0 %839
      %841 = vrot.lane.b32.xlu0 %v459, 89
      %v842 = vpop.permute.xlu0 %841
      %vm843 = vcmask 728064
      %v844 = vsel %vm843, %v826, %v828
      %v845 = vsel %vm843, %v828, %v830
      %v846 = vsel %vm843, %v830, %v832
      %v847 = vsel %vm843, %v832, %v834
      %v848 = vsel %vm843, %v834, %v836
      %v849 = vsel %vm843, %v836, %v838
      %v850 = vsel %vm843, %v838, %v840
      %v851 = vsel %vm843, %v840, %v842
      %860 = vst [vmem:[#allocation3 + $0x100] sm:$0xf] %v844
      %861 = vst [vmem:[#allocation3 + $0x108] sm:$0xf] %v845
      %862 = vst [vmem:[#allocation3 + $0x110] sm:$0xf] %v846
      %863 = vst [vmem:[#allocation3 + $0x118] sm:$0xf] %v847
      %864 = vst [vmem:[#allocation3 + $0x120] sm:$0xf] %v848
      %865 = vst [vmem:[#allocation3 + $0x128] sm:$0xf] %v849
      %866 = vst [vmem:[#allocation3 + $0x130] sm:$0xf] %v850
      %867 = vst [vmem:[#allocation3 + $0x138] sm:$0xf] %v851
      %868 = vrot.lane.b32.xlu0 %v515, 11
      %v869 = vpop.permute.xlu0 %868
      %870 = vrot.lane.b32.xlu0 %v516, 11
      %v871 = vpop.permute.xlu0 %870
      %872 = vrot.lane.b32.xlu0 %v517, 11
      %v873 = vpop.permute.xlu0 %872
      %874 = vrot.lane.b32.xlu0 %v518, 11
      %v875 = vpop.permute.xlu0 %874
      %876 = vrot.lane.b32.xlu0 %v519, 11
      %v877 = vpop.permute.xlu0 %876
      %878 = vrot.lane.b32.xlu0 %v520, 11
      %v879 = vpop.permute.xlu0 %878
      %880 = vrot.lane.b32.xlu0 %v521, 11
      %v881 = vpop.permute.xlu0 %880
      %882 = vrot.lane.b32.xlu0 %v522, 11
      %v883 = vpop.permute.xlu0 %882
      %884 = vrot.lane.b32.xlu0 %v523, 11
      %v885 = vpop.permute.xlu0 %884
      %vm886 = vcmask 89088
      %v887 = vsel %vm886, %v869, %v871
      %v888 = vsel %vm886, %v871, %v873
      %v889 = vsel %vm886, %v873, %v875
      %v890 = vsel %vm886, %v875, %v877
      %v891 = vsel %vm886, %v877, %v879
      %v892 = vsel %vm886, %v879, %v881
      %v893 = vsel %vm886, %v881, %v883
      %v894 = vsel %vm886, %v883, %v885
      %903 = vst [vmem:[#allocation3 + $0x100] sm:$0xf0] %v887
      %904 = vst [vmem:[#allocation3 + $0x108] sm:$0xf0] %v888
      %905 = vst [vmem:[#allocation3 + $0x110] sm:$0xf0] %v889
      %906 = vst [vmem:[#allocation3 + $0x118] sm:$0xf0] %v890
      %907 = vst [vmem:[#allocation3 + $0x120] sm:$0xf0] %v891
      %908 = vst [vmem:[#allocation3 + $0x128] sm:$0xf0] %v892
      %909 = vst [vmem:[#allocation3 + $0x130] sm:$0xf0] %v893
      %910 = vst [vmem:[#allocation3 + $0x138] sm:$0xf0] %v894
      %911 = vrot.lane.b32.xlu0 %v447, 10
      %v912 = vpop.permute.xlu0 %911
      %913 = vrot.lane.b32.xlu0 %v452, 10
      %v914 = vpop.permute.xlu0 %913
      %915 = vrot.lane.b32.xlu0 %v453, 10
      %v916 = vpop.permute.xlu0 %915
      %917 = vrot.lane.b32.xlu0 %v454, 10
      %v918 = vpop.permute.xlu0 %917
      %919 = vrot.lane.b32.xlu0 %v455, 10
      %v920 = vpop.permute.xlu0 %919
      %921 = vrot.lane.b32.xlu0 %v456, 10
      %v922 = vpop.permute.xlu0 %921
      %923 = vrot.lane.b32.xlu0 %v457, 10
      %v924 = vpop.permute.xlu0 %923
      %925 = vrot.lane.b32.xlu0 %v458, 10
      %v926 = vpop.permute.xlu0 %925
      %927 = vrot.lane.b32.xlu0 %v459, 10
      %v928 = vpop.permute.xlu0 %927
      %vm929 = vcmask 80896
      %v930 = vsel %vm929, %v912, %v914
      %v931 = vsel %vm929, %v914, %v916
      %v932 = vsel %vm929, %v916, %v918
      %v933 = vsel %vm929, %v918, %v920
      %v934 = vsel %vm929, %v920, %v922
      %v935 = vsel %vm929, %v922, %v924
      %v936 = vsel %vm929, %v924, %v926
      %v937 = vsel %vm929, %v926, %v928
      %946 = vst [vmem:[#allocation3 + $0x140] sm:$0xf] %v930
      %947 = vst [vmem:[#allocation3 + $0x148] sm:$0xf] %v931
      %948 = vst [vmem:[#allocation3 + $0x150] sm:$0xf] %v932
      %949 = vst [vmem:[#allocation3 + $0x158] sm:$0xf] %v933
      %950 = vst [vmem:[#allocation3 + $0x160] sm:$0xf] %v934
      %951 = vst [vmem:[#allocation3 + $0x168] sm:$0xf] %v935
      %952 = vst [vmem:[#allocation3 + $0x170] sm:$0xf] %v936
      %953 = vst [vmem:[#allocation3 + $0x178] sm:$0xf] %v937
      %954 = vrot.lane.b32.xlu0 %v515, 9
      %v955 = vpop.permute.xlu0 %954
      %956 = vrot.lane.b32.xlu0 %v516, 9
      %v957 = vpop.permute.xlu0 %956
      %958 = vrot.lane.b32.xlu0 %v517, 9
      %v959 = vpop.permute.xlu0 %958
      %960 = vrot.lane.b32.xlu0 %v518, 9
      %v961 = vpop.permute.xlu0 %960
      %962 = vrot.lane.b32.xlu0 %v519, 9
      %v963 = vpop.permute.xlu0 %962
      %964 = vrot.lane.b32.xlu0 %v520, 9
      %v965 = vpop.permute.xlu0 %964
      %966 = vrot.lane.b32.xlu0 %v521, 9
      %v967 = vpop.permute.xlu0 %966
      %968 = vrot.lane.b32.xlu0 %v522, 9
      %v969 = vpop.permute.xlu0 %968
      %970 = vrot.lane.b32.xlu0 %v523, 9
      %v971 = vpop.permute.xlu0 %970
      %vm972 = vcmask 72704
      %v973 = vsel %vm972, %v955, %v957
      %v974 = vsel %vm972, %v957, %v959
      %v975 = vsel %vm972, %v959, %v961
      %v976 = vsel %vm972, %v961, %v963
      %v977 = vsel %vm972, %v963, %v965
      %v978 = vsel %vm972, %v965, %v967
      %v979 = vsel %vm972, %v967, %v969
      %v980 = vsel %vm972, %v969, %v971
      %989 = vst [vmem:[#allocation3 + $0x140] sm:$0xf0] %v973
      %990 = vst [vmem:[#allocation3 + $0x148] sm:$0xf0] %v974
      %991 = vst [vmem:[#allocation3 + $0x150] sm:$0xf0] %v975
      %992 = vst [vmem:[#allocation3 + $0x158] sm:$0xf0] %v976
      %993 = vst [vmem:[#allocation3 + $0x160] sm:$0xf0] %v977
      %994 = vst [vmem:[#allocation3 + $0x168] sm:$0xf0] %v978
      %995 = vst [vmem:[#allocation3 + $0x170] sm:$0xf0] %v979
      %996 = vst [vmem:[#allocation3 + $0x178] sm:$0xf0] %v980
      %997 = vrot.lane.b32.xlu0 %v447, 1
      %v998 = vpop.permute.xlu0 %997
      %999 = vrot.lane.b32.xlu0 %v452, 1
      %v1000 = vpop.permute.xlu0 %999
      %1001 = vrot.lane.b32.xlu0 %v453, 1
      %v1002 = vpop.permute.xlu0 %1001
      %1003 = vrot.lane.b32.xlu0 %v454, 1
      %v1004 = vpop.permute.xlu0 %1003
      %1005 = vrot.lane.b32.xlu0 %v455, 1
      %v1006 = vpop.permute.xlu0 %1005
      %1007 = vrot.lane.b32.xlu0 %v456, 1
      %v1008 = vpop.permute.xlu0 %1007
      %1009 = vrot.lane.b32.xlu0 %v457, 1
      %v1010 = vpop.permute.xlu0 %1009
      %1011 = vrot.lane.b32.xlu0 %v458, 1
      %v1012 = vpop.permute.xlu0 %1011
      %1013 = vrot.lane.b32.xlu0 %v459, 1
      %v1014 = vpop.permute.xlu0 %1013
      %vm1015 = vcmask 7168
      %v1016 = vsel %vm1015, %v998, %v1000
      %v1017 = vsel %vm1015, %v1000, %v1002
      %v1018 = vsel %vm1015, %v1002, %v1004
      %v1019 = vsel %vm1015, %v1004, %v1006
      %v1020 = vsel %vm1015, %v1006, %v1008
      %v1021 = vsel %vm1015, %v1008, %v1010
      %v1022 = vsel %vm1015, %v1010, %v1012
      %v1023 = vsel %vm1015, %v1012, %v1014
      %1032 = vst [vmem:[#allocation3 + $0x180] sm:$0xf] %v1016
      %1033 = vst [vmem:[#allocation3 + $0x188] sm:$0xf] %v1017
      %1034 = vst [vmem:[#allocation3 + $0x190] sm:$0xf] %v1018
      %1035 = vst [vmem:[#allocation3 + $0x198] sm:$0xf] %v1019
      %1036 = vst [vmem:[#allocation3 + $0x1a0] sm:$0xf] %v1020
      %1037 = vst [vmem:[#allocation3 + $0x1a8] sm:$0xf] %v1021
      %1038 = vst [vmem:[#allocation3 + $0x1b0] sm:$0xf] %v1022
      %1039 = vst [vmem:[#allocation3 + $0x1b8] sm:$0xf] %v1023
      %1048 = vst [vmem:[#allocation3 + $0x180] sm:$0xf0] %v516
      %1049 = vst [vmem:[#allocation3 + $0x188] sm:$0xf0] %v517
      %1050 = vst [vmem:[#allocation3 + $0x190] sm:$0xf0] %v518
      %1051 = vst [vmem:[#allocation3 + $0x198] sm:$0xf0] %v519
      %1052 = vst [vmem:[#allocation3 + $0x1a0] sm:$0xf0] %v520
      %1053 = vst [vmem:[#allocation3 + $0x1a8] sm:$0xf0] %v521
      %1054 = vst [vmem:[#allocation3 + $0x1b0] sm:$0xf0] %v522
      %1055 = vst [vmem:[#allocation3 + $0x1b8] sm:$0xf0] %v523
      %1056 = vrot.lane.b32.xlu0 %v452, 127
      %v1057 = vpop.permute.xlu0 %1056
      %1058 = vrot.lane.b32.xlu0 %v453, 127
      %v1059 = vpop.permute.xlu0 %1058
      %1060 = vrot.lane.b32.xlu0 %v454, 127
      %v1061 = vpop.permute.xlu0 %1060
      %1062 = vrot.lane.b32.xlu0 %v455, 127
      %v1063 = vpop.permute.xlu0 %1062
      %1064 = vrot.lane.b32.xlu0 %v456, 127
      %v1065 = vpop.permute.xlu0 %1064
      %1066 = vrot.lane.b32.xlu0 %v457, 127
      %v1067 = vpop.permute.xlu0 %1066
      %1068 = vrot.lane.b32.xlu0 %v458, 127
      %v1069 = vpop.permute.xlu0 %1068
      %1070 = vrot.lane.b32.xlu0 %v459, 127
      %v1071 = vpop.permute.xlu0 %1070
      %1072 = vrot.lane.b32.xlu0 %v471, 127
      %v1073 = vpop.permute.xlu0 %1072
      %vm1074 = vcmask 1039360
      %v1075 = vsel %vm1074, %v1057, %v1059
      %v1076 = vsel %vm1074, %v1059, %v1061
      %v1077 = vsel %vm1074, %v1061, %v1063
      %v1078 = vsel %vm1074, %v1063, %v1065
      %v1079 = vsel %vm1074, %v1065, %v1067
      %v1080 = vsel %vm1074, %v1067, %v1069
      %v1081 = vsel %vm1074, %v1069, %v1071
      %v1082 = vsel %vm1074, %v1071, %v1073
      %1091 = vst [vmem:[#allocation3 + $0x1c0] sm:$0xf] %v1075
      %1092 = vst [vmem:[#allocation3 + $0x1c8] sm:$0xf] %v1076
      %1093 = vst [vmem:[#allocation3 + $0x1d0] sm:$0xf] %v1077
      %1094 = vst [vmem:[#allocation3 + $0x1d8] sm:$0xf] %v1078
      %1095 = vst [vmem:[#allocation3 + $0x1e0] sm:$0xf] %v1079
      %1096 = vst [vmem:[#allocation3 + $0x1e8] sm:$0xf] %v1080
      %1097 = vst [vmem:[#allocation3 + $0x1f0] sm:$0xf] %v1081
      %1098 = vst [vmem:[#allocation3 + $0x1f8] sm:$0xf] %v1082
      %v1099 = vrot.slane %v471, 4
      %1100 = vrot.lane.b32.xlu0 %v516, 119
      %v1101 = vpop.permute.xlu0 %1100
      %1102 = vrot.lane.b32.xlu0 %v517, 119
      %v1103 = vpop.permute.xlu0 %1102
      %1104 = vrot.lane.b32.xlu0 %v518, 119
      %v1105 = vpop.permute.xlu0 %1104
      %1106 = vrot.lane.b32.xlu0 %v519, 119
      %v1107 = vpop.permute.xlu0 %1106
      %1108 = vrot.lane.b32.xlu0 %v520, 119
      %v1109 = vpop.permute.xlu0 %1108
      %1110 = vrot.lane.b32.xlu0 %v521, 119
      %v1111 = vpop.permute.xlu0 %1110
      %1112 = vrot.lane.b32.xlu0 %v522, 119
      %v1113 = vpop.permute.xlu0 %1112
      %1114 = vrot.lane.b32.xlu0 %v523, 119
      %v1115 = vpop.permute.xlu0 %1114
      %1116 = vrot.lane.b32.xlu0 %v1099, 119
      %v1117 = vpop.permute.xlu0 %1116
      %vm1118 = vcmask 973824
      %v1119 = vsel %vm1118, %v1101, %v1103
      %v1120 = vsel %vm1118, %v1103, %v1105
      %v1121 = vsel %vm1118, %v1105, %v1107
      %v1122 = vsel %vm1118, %v1107, %v1109
      %v1123 = vsel %vm1118, %v1109, %v1111
      %v1124 = vsel %vm1118, %v1111, %v1113
      %v1125 = vsel %vm1118, %v1113, %v1115
      %v1126 = vsel %vm1118, %v1115, %v1117
      %1135 = vst [vmem:[#allocation3 + $0x1c0] sm:$0xf0] %v1119
      %1136 = vst [vmem:[#allocation3 + $0x1c8] sm:$0xf0] %v1120
      %1137 = vst [vmem:[#allocation3 + $0x1d0] sm:$0xf0] %v1121
      %1138 = vst [vmem:[#allocation3 + $0x1d8] sm:$0xf0] %v1122
      %1139 = vst [vmem:[#allocation3 + $0x1e0] sm:$0xf0] %v1123
      %1140 = vst [vmem:[#allocation3 + $0x1e8] sm:$0xf0] %v1124
      %1141 = vst [vmem:[#allocation3 + $0x1f0] sm:$0xf0] %v1125
      %1142 = vst [vmem:[#allocation3 + $0x1f8] sm:$0xf0] %v1126
      %1143 = vrot.lane.b32.xlu0 %v452, 118
      %v1144 = vpop.permute.xlu0 %1143
      %1145 = vrot.lane.b32.xlu0 %v453, 118
      %v1146 = vpop.permute.xlu0 %1145
      %1147 = vrot.lane.b32.xlu0 %v454, 118
      %v1148 = vpop.permute.xlu0 %1147
      %1149 = vrot.lane.b32.xlu0 %v455, 118
      %v1150 = vpop.permute.xlu0 %1149
      %1151 = vrot.lane.b32.xlu0 %v456, 118
      %v1152 = vpop.permute.xlu0 %1151
      %1153 = vrot.lane.b32.xlu0 %v457, 118
      %v1154 = vpop.permute.xlu0 %1153
      %1155 = vrot.lane.b32.xlu0 %v458, 118
      %v1156 = vpop.permute.xlu0 %1155
      %1157 = vrot.lane.b32.xlu0 %v459, 118
      %v1158 = vpop.permute.xlu0 %1157
      %1159 = vrot.lane.b32.xlu0 %v471, 118
      %v1160 = vpop.permute.xlu0 %1159
      %vm1161 = vcmask 965632
      %v1162 = vsel %vm1161, %v1144, %v1146
      %v1163 = vsel %vm1161, %v1146, %v1148
      %v1164 = vsel %vm1161, %v1148, %v1150
      %v1165 = vsel %vm1161, %v1150, %v1152
      %v1166 = vsel %vm1161, %v1152, %v1154
      %v1167 = vsel %vm1161, %v1154, %v1156
      %v1168 = vsel %vm1161, %v1156, %v1158
      %v1169 = vsel %vm1161, %v1158, %v1160
      %1178 = vst [vmem:[#allocation3 + $0x200] sm:$0xf] %v1162
      %1179 = vst [vmem:[#allocation3 + $0x208] sm:$0xf] %v1163
      %1180 = vst [vmem:[#allocation3 + $0x210] sm:$0xf] %v1164
      %1181 = vst [vmem:[#allocation3 + $0x218] sm:$0xf] %v1165
      %1182 = vst [vmem:[#allocation3 + $0x220] sm:$0xf] %v1166
      %1183 = vst [vmem:[#allocation3 + $0x228] sm:$0xf] %v1167
      %1184 = vst [vmem:[#allocation3 + $0x230] sm:$0xf] %v1168
      %1185 = vst [vmem:[#allocation3 + $0x238] sm:$0xf] %v1169
      %1186 = vrot.lane.b32.xlu0 %v516, 117
      %v1187 = vpop.permute.xlu0 %1186
      %1188 = vrot.lane.b32.xlu0 %v517, 117
      %v1189 = vpop.permute.xlu0 %1188
      %1190 = vrot.lane.b32.xlu0 %v518, 117
      %v1191 = vpop.permute.xlu0 %1190
      %1192 = vrot.lane.b32.xlu0 %v519, 117
      %v1193 = vpop.permute.xlu0 %1192
      %1194 = vrot.lane.b32.xlu0 %v520, 117
      %v1195 = vpop.permute.xlu0 %1194
      %1196 = vrot.lane.b32.xlu0 %v521, 117
      %v1197 = vpop.permute.xlu0 %1196
      %1198 = vrot.lane.b32.xlu0 %v522, 117
      %v1199 = vpop.permute.xlu0 %1198
      %1200 = vrot.lane.b32.xlu0 %v523, 117
      %v1201 = vpop.permute.xlu0 %1200
      %1202 = vrot.lane.b32.xlu0 %v1099, 117
      %v1203 = vpop.permute.xlu0 %1202
      %vm1204 = vcmask 957440
      %v1205 = vsel %vm1204, %v1187, %v1189
      %v1206 = vsel %vm1204, %v1189, %v1191
      %v1207 = vsel %vm1204, %v1191, %v1193
      %v1208 = vsel %vm1204, %v1193, %v1195
      %v1209 = vsel %vm1204, %v1195, %v1197
      %v1210 = vsel %vm1204, %v1197, %v1199
      %v1211 = vsel %vm1204, %v1199, %v1201
      %v1212 = vsel %vm1204, %v1201, %v1203
      %1221 = vst [vmem:[#allocation3 + $0x200] sm:$0xf0] %v1205
      %1222 = vst [vmem:[#allocation3 + $0x208] sm:$0xf0] %v1206
      %1223 = vst [vmem:[#allocation3 + $0x210] sm:$0xf0] %v1207
      %1224 = vst [vmem:[#allocation3 + $0x218] sm:$0xf0] %v1208
      %1225 = vst [vmem:[#allocation3 + $0x220] sm:$0xf0] %v1209
      %1226 = vst [vmem:[#allocation3 + $0x228] sm:$0xf0] %v1210
      %1227 = vst [vmem:[#allocation3 + $0x230] sm:$0xf0] %v1211
      %1228 = vst [vmem:[#allocation3 + $0x238] sm:$0xf0] %v1212
      %1229 = vrot.lane.b32.xlu0 %v452, 39
      %v1230 = vpop.permute.xlu0 %1229
      %1231 = vrot.lane.b32.xlu0 %v453, 39
      %v1232 = vpop.permute.xlu0 %1231
      %1233 = vrot.lane.b32.xlu0 %v454, 39
      %v1234 = vpop.permute.xlu0 %1233
      %1235 = vrot.lane.b32.xlu0 %v455, 39
      %v1236 = vpop.permute.xlu0 %1235
      %1237 = vrot.lane.b32.xlu0 %v456, 39
      %v1238 = vpop.permute.xlu0 %1237
      %1239 = vrot.lane.b32.xlu0 %v457, 39
      %v1240 = vpop.permute.xlu0 %1239
      %1241 = vrot.lane.b32.xlu0 %v458, 39
      %v1242 = vpop.permute.xlu0 %1241
      %1243 = vrot.lane.b32.xlu0 %v459, 39
      %v1244 = vpop.permute.xlu0 %1243
      %1245 = vrot.lane.b32.xlu0 %v471, 39
      %v1246 = vpop.permute.xlu0 %1245
      %vm1247 = vcmask 318464
      %v1248 = vsel %vm1247, %v1230, %v1232
      %v1249 = vsel %vm1247, %v1232, %v1234
      %v1250 = vsel %vm1247, %v1234, %v1236
      %v1251 = vsel %vm1247, %v1236, %v1238
      %v1252 = vsel %vm1247, %v1238, %v1240
      %v1253 = vsel %vm1247, %v1240, %v1242
      %v1254 = vsel %vm1247, %v1242, %v1244
      %v1255 = vsel %vm1247, %v1244, %v1246
      %1264 = vst [vmem:[#allocation3 + $0x240] sm:$0xf] %v1248
      %1265 = vst [vmem:[#allocation3 + $0x248] sm:$0xf] %v1249
      %1266 = vst [vmem:[#allocation3 + $0x250] sm:$0xf] %v1250
      %1267 = vst [vmem:[#allocation3 + $0x258] sm:$0xf] %v1251
      %1268 = vst [vmem:[#allocation3 + $0x260] sm:$0xf] %v1252
      %1269 = vst [vmem:[#allocation3 + $0x268] sm:$0xf] %v1253
      %1270 = vst [vmem:[#allocation3 + $0x270] sm:$0xf] %v1254
      %1271 = vst [vmem:[#allocation3 + $0x278] sm:$0xf] %v1255
      %1272 = vrot.lane.b32.xlu0 %v516, 38
      %v1273 = vpop.permute.xlu0 %1272
      %1274 = vrot.lane.b32.xlu0 %v517, 38
      %v1275 = vpop.permute.xlu0 %1274
      %1276 = vrot.lane.b32.xlu0 %v518, 38
      %v1277 = vpop.permute.xlu0 %1276
      %1278 = vrot.lane.b32.xlu0 %v519, 38
      %v1279 = vpop.permute.xlu0 %1278
      %1280 = vrot.lane.b32.xlu0 %v520, 38
      %v1281 = vpop.permute.xlu0 %1280
      %1282 = vrot.lane.b32.xlu0 %v521, 38
      %v1283 = vpop.permute.xlu0 %1282
      %1284 = vrot.lane.b32.xlu0 %v522, 38
      %v1285 = vpop.permute.xlu0 %1284
      %1286 = vrot.lane.b32.xlu0 %v523, 38
      %v1287 = vpop.permute.xlu0 %1286
      %1288 = vrot.lane.b32.xlu0 %v1099, 38
      %v1289 = vpop.permute.xlu0 %1288
      %vm1290 = vcmask 310272
      %v1291 = vsel %vm1290, %v1273, %v1275
      %v1292 = vsel %vm1290, %v1275, %v1277
      %v1293 = vsel %vm1290, %v1277, %v1279
      %v1294 = vsel %vm1290, %v1279, %v1281
      %v1295 = vsel %vm1290, %v1281, %v1283
      %v1296 = vsel %vm1290, %v1283, %v1285
      %v1297 = vsel %vm1290, %v1285, %v1287
      %v1298 = vsel %vm1290, %v1287, %v1289
      %1307 = vst [vmem:[#allocation3 + $0x240] sm:$0xf0] %v1291
      %1308 = vst [vmem:[#allocation3 + $0x248] sm:$0xf0] %v1292
      %1309 = vst [vmem:[#allocation3 + $0x250] sm:$0xf0] %v1293
      %1310 = vst [vmem:[#allocation3 + $0x258] sm:$0xf0] %v1294
      %1311 = vst [vmem:[#allocation3 + $0x260] sm:$0xf0] %v1295
      %1312 = vst [vmem:[#allocation3 + $0x268] sm:$0xf0] %v1296
      %1313 = vst [vmem:[#allocation3 + $0x270] sm:$0xf0] %v1297
      %1314 = vst [vmem:[#allocation3 + $0x278] sm:$0xf0] %v1298
      %1315 = vrot.lane.b32.xlu0 %v452, 37
      %v1316 = vpop.permute.xlu0 %1315
      %1317 = vrot.lane.b32.xlu0 %v453, 37
      %v1318 = vpop.permute.xlu0 %1317
      %1319 = vrot.lane.b32.xlu0 %v454, 37
      %v1320 = vpop.permute.xlu0 %1319
      %1321 = vrot.lane.b32.xlu0 %v455, 37
      %v1322 = vpop.permute.xlu0 %1321
      %1323 = vrot.lane.b32.xlu0 %v456, 37
      %v1324 = vpop.permute.xlu0 %1323
      %1325 = vrot.lane.b32.xlu0 %v457, 37
      %v1326 = vpop.permute.xlu0 %1325
      %1327 = vrot.lane.b32.xlu0 %v458, 37
      %v1328 = vpop.permute.xlu0 %1327
      %1329 = vrot.lane.b32.xlu0 %v459, 37
      %v1330 = vpop.permute.xlu0 %1329
      %1331 = vrot.lane.b32.xlu0 %v471, 37
      %v1332 = vpop.permute.xlu0 %1331
      %vm1333 = vcmask 302080
      %v1334 = vsel %vm1333, %v1316, %v1318
      %v1335 = vsel %vm1333, %v1318, %v1320
      %v1336 = vsel %vm1333, %v1320, %v1322
      %v1337 = vsel %vm1333, %v1322, %v1324
      %v1338 = vsel %vm1333, %v1324, %v1326
      %v1339 = vsel %vm1333, %v1326, %v1328
      %v1340 = vsel %vm1333, %v1328, %v1330
      %v1341 = vsel %vm1333, %v1330, %v1332
      %1350 = vst [vmem:[#allocation3 + $0x280] sm:$0xf] %v1334
      %1351 = vst [vmem:[#allocation3 + $0x288] sm:$0xf] %v1335
      %1352 = vst [vmem:[#allocation3 + $0x290] sm:$0xf] %v1336
      %1353 = vst [vmem:[#allocation3 + $0x298] sm:$0xf] %v1337
      %1354 = vst [vmem:[#allocation3 + $0x2a0] sm:$0xf] %v1338
      %1355 = vst [vmem:[#allocation3 + $0x2a8] sm:$0xf] %v1339
      %1356 = vst [vmem:[#allocation3 + $0x2b0] sm:$0xf] %v1340
      %1357 = vst [vmem:[#allocation3 + $0x2b8] sm:$0xf] %v1341
      %1358 = vrot.lane.b32.xlu0 %v516, 29
      %v1359 = vpop.permute.xlu0 %1358
      %1360 = vrot.lane.b32.xlu0 %v517, 29
      %v1361 = vpop.permute.xlu0 %1360
      %1362 = vrot.lane.b32.xlu0 %v518, 29
      %v1363 = vpop.permute.xlu0 %1362
      %1364 = vrot.lane.b32.xlu0 %v519, 29
      %v1365 = vpop.permute.xlu0 %1364
      %1366 = vrot.lane.b32.xlu0 %v520, 29
      %v1367 = vpop.permute.xlu0 %1366
      %1368 = vrot.lane.b32.xlu0 %v521, 29
      %v1369 = vpop.permute.xlu0 %1368
      %1370 = vrot.lane.b32.xlu0 %v522, 29
      %v1371 = vpop.permute.xlu0 %1370
      %1372 = vrot.lane.b32.xlu0 %v523, 29
      %v1373 = vpop.permute.xlu0 %1372
      %1374 = vrot.lane.b32.xlu0 %v1099, 29
      %v1375 = vpop.permute.xlu0 %1374
      %vm1376 = vcmask 236544
      %v1377 = vsel %vm1376, %v1359, %v1361
      %v1378 = vsel %vm1376, %v1361, %v1363
      %v1379 = vsel %vm1376, %v1363, %v1365
      %v1380 = vsel %vm1376, %v1365, %v1367
      %v1381 = vsel %vm1376, %v1367, %v1369
      %v1382 = vsel %vm1376, %v1369, %v1371
      %v1383 = vsel %vm1376, %v1371, %v1373
      %v1384 = vsel %vm1376, %v1373, %v1375
      %1393 = vst [vmem:[#allocation3 + $0x280] sm:$0xf0] %v1377
      %1394 = vst [vmem:[#allocation3 + $0x288] sm:$0xf0] %v1378
      %1395 = vst [vmem:[#allocation3 + $0x290] sm:$0xf0] %v1379
      %1396 = vst [vmem:[#allocation3 + $0x298] sm:$0xf0] %v1380
      %1397 = vst [vmem:[#allocation3 + $0x2a0] sm:$0xf0] %v1381
      %1398 = vst [vmem:[#allocation3 + $0x2a8] sm:$0xf0] %v1382
      %1399 = vst [vmem:[#allocation3 + $0x2b0] sm:$0xf0] %v1383
      %1400 = vst [vmem:[#allocation3 + $0x2b8] sm:$0xf0] %v1384
      %1401 = vrot.lane.b32.xlu0 %v452, 28
      %v1402 = vpop.permute.xlu0 %1401
      %1403 = vrot.lane.b32.xlu0 %v453, 28
      %v1404 = vpop.permute.xlu0 %1403
      %1405 = vrot.lane.b32.xlu0 %v454, 28
      %v1406 = vpop.permute.xlu0 %1405
      %1407 = vrot.lane.b32.xlu0 %v455, 28
      %v1408 = vpop.permute.xlu0 %1407
      %1409 = vrot.lane.b32.xlu0 %v456, 28
      %v1410 = vpop.permute.xlu0 %1409
      %1411 = vrot.lane.b32.xlu0 %v457, 28
      %v1412 = vpop.permute.xlu0 %1411
      %1413 = vrot.lane.b32.xlu0 %v458, 28
      %v1414 = vpop.permute.xlu0 %1413
      %1415 = vrot.lane.b32.xlu0 %v459, 28
      %v1416 = vpop.permute.xlu0 %1415
      %1417 = vrot.lane.b32.xlu0 %v471, 28
      %v1418 = vpop.permute.xlu0 %1417
      %vm1419 = vcmask 228352
      %v1420 = vsel %vm1419, %v1402, %v1404
      %v1421 = vsel %vm1419, %v1404, %v1406
      %v1422 = vsel %vm1419, %v1406, %v1408
      %v1423 = vsel %vm1419, %v1408, %v1410
      %v1424 = vsel %vm1419, %v1410, %v1412
      %v1425 = vsel %vm1419, %v1412, %v1414
      %v1426 = vsel %vm1419, %v1414, %v1416
      %v1427 = vsel %vm1419, %v1416, %v1418
      %1436 = vst [vmem:[#allocation3 + $0x2c0] sm:$0xf] %v1420
      %1437 = vst [vmem:[#allocation3 + $0x2c8] sm:$0xf] %v1421
      %1438 = vst [vmem:[#allocation3 + $0x2d0] sm:$0xf] %v1422
      %1439 = vst [vmem:[#allocation3 + $0x2d8] sm:$0xf] %v1423
      %1440 = vst [vmem:[#allocation3 + $0x2e0] sm:$0xf] %v1424
      %1441 = vst [vmem:[#allocation3 + $0x2e8] sm:$0xf] %v1425
      %1442 = vst [vmem:[#allocation3 + $0x2f0] sm:$0xf] %v1426
      %1443 = vst [vmem:[#allocation3 + $0x2f8] sm:$0xf] %v1427
      %1444 = vrot.lane.b32.xlu0 %v516, 27
      %v1445 = vpop.permute.xlu0 %1444
      %1446 = vrot.lane.b32.xlu0 %v517, 27
      %v1447 = vpop.permute.xlu0 %1446
      %1448 = vrot.lane.b32.xlu0 %v518, 27
      %v1449 = vpop.permute.xlu0 %1448
      %1450 = vrot.lane.b32.xlu0 %v519, 27
      %v1451 = vpop.permute.xlu0 %1450
      %1452 = vrot.lane.b32.xlu0 %v520, 27
      %v1453 = vpop.permute.xlu0 %1452
      %1454 = vrot.lane.b32.xlu0 %v521, 27
      %v1455 = vpop.permute.xlu0 %1454
      %1456 = vrot.lane.b32.xlu0 %v522, 27
      %v1457 = vpop.permute.xlu0 %1456
      %1458 = vrot.lane.b32.xlu0 %v523, 27
      %v1459 = vpop.permute.xlu0 %1458
      %1460 = vrot.lane.b32.xlu0 %v1099, 27
      %v1461 = vpop.permute.xlu0 %1460
      %vm1462 = vcmask 220160
      %v1463 = vsel %vm1462, %v1445, %v1447
      %v1464 = vsel %vm1462, %v1447, %v1449
      %v1465 = vsel %vm1462, %v1449, %v1451
      %v1466 = vsel %vm1462, %v1451, %v1453
      %v1467 = vsel %vm1462, %v1453, %v1455
      %v1468 = vsel %vm1462, %v1455, %v1457
      %v1469 = vsel %vm1462, %v1457, %v1459
      %v1470 = vsel %vm1462, %v1459, %v1461
      %1479 = vst [vmem:[#allocation3 + $0x2c0] sm:$0xf0] %v1463
      %1480 = vst [vmem:[#allocation3 + $0x2c8] sm:$0xf0] %v1464
      %1481 = vst [vmem:[#allocation3 + $0x2d0] sm:$0xf0] %v1465
      %1482 = vst [vmem:[#allocation3 + $0x2d8] sm:$0xf0] %v1466
      %1483 = vst [vmem:[#allocation3 + $0x2e0] sm:$0xf0] %v1467
      %1484 = vst [vmem:[#allocation3 + $0x2e8] sm:$0xf0] %v1468
      %1485 = vst [vmem:[#allocation3 + $0x2f0] sm:$0xf0] %v1469
      %1486 = vst [vmem:[#allocation3 + $0x2f8] sm:$0xf0] %v1470
      %1487 = vrot.lane.b32.xlu0 %v452, 19
      %v1488 = vpop.permute.xlu0 %1487
      %1489 = vrot.lane.b32.xlu0 %v453, 19
      %v1490 = vpop.permute.xlu0 %1489
      %1491 = vrot.lane.b32.xlu0 %v454, 19
      %v1492 = vpop.permute.xlu0 %1491
      %1493 = vrot.lane.b32.xlu0 %v455, 19
      %v1494 = vpop.permute.xlu0 %1493
      %1495 = vrot.lane.b32.xlu0 %v456, 19
      %v1496 = vpop.permute.xlu0 %1495
      %1497 = vrot.lane.b32.xlu0 %v457, 19
      %v1498 = vpop.permute.xlu0 %1497
      %1499 = vrot.lane.b32.xlu0 %v458, 19
      %v1500 = vpop.permute.xlu0 %1499
      %1501 = vrot.lane.b32.xlu0 %v459, 19
      %v1502 = vpop.permute.xlu0 %1501
      %1503 = vrot.lane.b32.xlu0 %v471, 19
      %v1504 = vpop.permute.xlu0 %1503
      %vm1505 = vcmask 154624
      %v1506 = vsel %vm1505, %v1488, %v1490
      %v1507 = vsel %vm1505, %v1490, %v1492
      %v1508 = vsel %vm1505, %v1492, %v1494
      %v1509 = vsel %vm1505, %v1494, %v1496
      %v1510 = vsel %vm1505, %v1496, %v1498
      %v1511 = vsel %vm1505, %v1498, %v1500
      %v1512 = vsel %vm1505, %v1500, %v1502
      %v1513 = vsel %vm1505, %v1502, %v1504
      %1522 = vst [vmem:[#allocation3 + $0x300] sm:$0xf] %v1506
      %1523 = vst [vmem:[#allocation3 + $0x308] sm:$0xf] %v1507
      %1524 = vst [vmem:[#allocation3 + $0x310] sm:$0xf] %v1508
      %1525 = vst [vmem:[#allocation3 + $0x318] sm:$0xf] %v1509
      %1526 = vst [vmem:[#allocation3 + $0x320] sm:$0xf] %v1510
      %1527 = vst [vmem:[#allocation3 + $0x328] sm:$0xf] %v1511
      %1528 = vst [vmem:[#allocation3 + $0x330] sm:$0xf] %v1512
      %1529 = vst [vmem:[#allocation3 + $0x338] sm:$0xf] %v1513
      %1530 = vrot.lane.b32.xlu0 %v516, 18
      %v1531 = vpop.permute.xlu0 %1530
      %1532 = vrot.lane.b32.xlu0 %v517, 18
      %v1533 = vpop.permute.xlu0 %1532
      %1534 = vrot.lane.b32.xlu0 %v518, 18
      %v1535 = vpop.permute.xlu0 %1534
      %1536 = vrot.lane.b32.xlu0 %v519, 18
      %v1537 = vpop.permute.xlu0 %1536
      %1538 = vrot.lane.b32.xlu0 %v520, 18
      %v1539 = vpop.permute.xlu0 %1538
      %1540 = vrot.lane.b32.xlu0 %v521, 18
      %v1541 = vpop.permute.xlu0 %1540
      %1542 = vrot.lane.b32.xlu0 %v522, 18
      %v1543 = vpop.permute.xlu0 %1542
      %1544 = vrot.lane.b32.xlu0 %v523, 18
      %v1545 = vpop.permute.xlu0 %1544
      %1546 = vrot.lane.b32.xlu0 %v1099, 18
      %v1547 = vpop.permute.xlu0 %1546
      %vm1548 = vcmask 146432
      %v1549 = vsel %vm1548, %v1531, %v1533
      %v1550 = vsel %vm1548, %v1533, %v1535
      %v1551 = vsel %vm1548, %v1535, %v1537
      %v1552 = vsel %vm1548, %v1537, %v1539
      %v1553 = vsel %vm1548, %v1539, %v1541
      %v1554 = vsel %vm1548, %v1541, %v1543
      %v1555 = vsel %vm1548, %v1543, %v1545
      %v1556 = vsel %vm1548, %v1545, %v1547
      %1565 = vst [vmem:[#allocation3 + $0x300] sm:$0xf0] %v1549
      %1566 = vst [vmem:[#allocation3 + $0x308] sm:$0xf0] %v1550
      %1567 = vst [vmem:[#allocation3 + $0x310] sm:$0xf0] %v1551
      %1568 = vst [vmem:[#allocation3 + $0x318] sm:$0xf0] %v1552
      %1569 = vst [vmem:[#allocation3 + $0x320] sm:$0xf0] %v1553
      %1570 = vst [vmem:[#allocation3 + $0x328] sm:$0xf0] %v1554
      %1571 = vst [vmem:[#allocation3 + $0x330] sm:$0xf0] %v1555
      %1572 = vst [vmem:[#allocation3 + $0x338] sm:$0xf0] %v1556
      %1573 = vrot.lane.b32.xlu0 %v452, 17
      %v1574 = vpop.permute.xlu0 %1573
      %1575 = vrot.lane.b32.xlu0 %v453, 17
      %v1576 = vpop.permute.xlu0 %1575
      %1577 = vrot.lane.b32.xlu0 %v454, 17
      %v1578 = vpop.permute.xlu0 %1577
      %1579 = vrot.lane.b32.xlu0 %v455, 17
      %v1580 = vpop.permute.xlu0 %1579
      %1581 = vrot.lane.b32.xlu0 %v456, 17
      %v1582 = vpop.permute.xlu0 %1581
      %1583 = vrot.lane.b32.xlu0 %v457, 17
      %v1584 = vpop.permute.xlu0 %1583
      %1585 = vrot.lane.b32.xlu0 %v458, 17
      %v1586 = vpop.permute.xlu0 %1585
      %1587 = vrot.lane.b32.xlu0 %v459, 17
      %v1588 = vpop.permute.xlu0 %1587
      %1589 = vrot.lane.b32.xlu0 %v471, 17
      %v1590 = vpop.permute.xlu0 %1589
      %vm1591 = vcmask 138240
      %v1592 = vsel %vm1591, %v1574, %v1576
      %v1593 = vsel %vm1591, %v1576, %v1578
      %v1594 = vsel %vm1591, %v1578, %v1580
      %v1595 = vsel %vm1591, %v1580, %v1582
      %v1596 = vsel %vm1591, %v1582, %v1584
      %v1597 = vsel %vm1591, %v1584, %v1586
      %v1598 = vsel %vm1591, %v1586, %v1588
      %v1599 = vsel %vm1591, %v1588, %v1590
      %1608 = vst [vmem:[#allocation3 + $0x340] sm:$0xf] %v1592
      %1609 = vst [vmem:[#allocation3 + $0x348] sm:$0xf] %v1593
      %1610 = vst [vmem:[#allocation3 + $0x350] sm:$0xf] %v1594
      %1611 = vst [vmem:[#allocation3 + $0x358] sm:$0xf] %v1595
      %1612 = vst [vmem:[#allocation3 + $0x360] sm:$0xf] %v1596
      %1613 = vst [vmem:[#allocation3 + $0x368] sm:$0xf] %v1597
      %1614 = vst [vmem:[#allocation3 + $0x370] sm:$0xf] %v1598
      %1615 = vst [vmem:[#allocation3 + $0x378] sm:$0xf] %v1599
      %v1616 = vld [vmem:[%s2] sm:$0xf]
      %v1617 = vld [vmem:[#allocation3] sm:$0xff]
      %v1618 = vld [vmem:[#allocation3 + $0x8] sm:$0xff]
      %v1619 = vld [vmem:[#allocation3 + $0x10] sm:$0xff]
      %v1620 = vld [vmem:[#allocation3 + $0x18] sm:$0xff]
      %v1621 = vld [vmem:[#allocation3 + $0x20] sm:$0xff]
      %v1622 = vld [vmem:[#allocation3 + $0x28] sm:$0xff]
      %v1623 = vld [vmem:[#allocation3 + $0x30] sm:$0xff]
      %v1624 = vld [vmem:[#allocation3 + $0x38] sm:$0xff]
      %v1625 = vld [vmem:[#allocation3 + $0x40] sm:$0xff]
      %v1626 = vld [vmem:[#allocation3 + $0x48] sm:$0xff]
      %v1627 = vld [vmem:[#allocation3 + $0x50] sm:$0xff]
      %v1628 = vld [vmem:[#allocation3 + $0x58] sm:$0xff]
      %v1629 = vld [vmem:[#allocation3 + $0x60] sm:$0xff]
      %v1630 = vld [vmem:[#allocation3 + $0x68] sm:$0xff]
      %v1631 = vld [vmem:[#allocation3 + $0x70] sm:$0xff]
      %v1632 = vld [vmem:[#allocation3 + $0x78] sm:$0xff]
      %v1633 = vld [vmem:[#allocation3 + $0x80] sm:$0xff]
      %v1634 = vld [vmem:[#allocation3 + $0x88] sm:$0xff]
      %v1635 = vld [vmem:[#allocation3 + $0x90] sm:$0xff]
      %v1636 = vld [vmem:[#allocation3 + $0x98] sm:$0xff]
      %v1637 = vld [vmem:[#allocation3 + $0xa0] sm:$0xff]
      %v1638 = vld [vmem:[#allocation3 + $0xa8] sm:$0xff]
      %v1639 = vld [vmem:[#allocation3 + $0xb0] sm:$0xff]
      %v1640 = vld [vmem:[#allocation3 + $0xb8] sm:$0xff]
      %v1641 = vld [vmem:[#allocation3 + $0xc0] sm:$0xff]
      %v1642 = vld [vmem:[#allocation3 + $0xc8] sm:$0xff]
      %v1643 = vld [vmem:[#allocation3 + $0xd0] sm:$0xff]
      %v1644 = vld [vmem:[#allocation3 + $0xd8] sm:$0xff]
      %v1645 = vld [vmem:[#allocation3 + $0xe0] sm:$0xff]
      %v1646 = vld [vmem:[#allocation3 + $0xe8] sm:$0xff]
      %v1647 = vld [vmem:[#allocation3 + $0xf0] sm:$0xff]
      %v1648 = vld [vmem:[#allocation3 + $0xf8] sm:$0xff]
      %v1649 = vld [vmem:[#allocation3 + $0x100] sm:$0xff]
      %v1650 = vld [vmem:[#allocation3 + $0x108] sm:$0xff]
      %v1651 = vld [vmem:[#allocation3 + $0x110] sm:$0xff]
      %v1652 = vld [vmem:[#allocation3 + $0x118] sm:$0xff]
      %v1653 = vld [vmem:[#allocation3 + $0x120] sm:$0xff]
      %v1654 = vld [vmem:[#allocation3 + $0x128] sm:$0xff]
      %v1655 = vld [vmem:[#allocation3 + $0x130] sm:$0xff]
      %v1656 = vld [vmem:[#allocation3 + $0x138] sm:$0xff]
      %v1657 = vld [vmem:[#allocation3 + $0x140] sm:$0xff]
      %v1658 = vld [vmem:[#allocation3 + $0x148] sm:$0xff]
      %v1659 = vld [vmem:[#allocation3 + $0x150] sm:$0xff]
      %v1660 = vld [vmem:[#allocation3 + $0x158] sm:$0xff]
      %v1661 = vld [vmem:[#allocation3 + $0x160] sm:$0xff]
      %v1662 = vld [vmem:[#allocation3 + $0x168] sm:$0xff]
      %v1663 = vld [vmem:[#allocation3 + $0x170] sm:$0xff]
      %v1664 = vld [vmem:[#allocation3 + $0x178] sm:$0xff]
      %v1665 = vld [vmem:[#allocation3 + $0x180] sm:$0xff]
      %v1666 = vld [vmem:[#allocation3 + $0x188] sm:$0xff]
      %v1667 = vld [vmem:[#allocation3 + $0x190] sm:$0xff]
      %v1668 = vld [vmem:[#allocation3 + $0x198] sm:$0xff]
      %v1669 = vld [vmem:[#allocation3 + $0x1a0] sm:$0xff]
      %v1670 = vld [vmem:[#allocation3 + $0x1a8] sm:$0xff]
      %v1671 = vld [vmem:[#allocation3 + $0x1b0] sm:$0xff]
      %v1672 = vld [vmem:[#allocation3 + $0x1b8] sm:$0xff]
      %v1673 = vld [vmem:[#allocation3 + $0x1c0] sm:$0xff]
      %v1674 = vld [vmem:[#allocation3 + $0x1c8] sm:$0xff]
      %v1675 = vld [vmem:[#allocation3 + $0x1d0] sm:$0xff]
      %v1676 = vld [vmem:[#allocation3 + $0x1d8] sm:$0xff]
      %v1677 = vld [vmem:[#allocation3 + $0x1e0] sm:$0xff]
      %v1678 = vld [vmem:[#allocation3 + $0x1e8] sm:$0xff]
      %v1679 = vld [vmem:[#allocation3 + $0x1f0] sm:$0xff]
      %v1680 = vld [vmem:[#allocation3 + $0x1f8] sm:$0xff]
      %v1681 = vld [vmem:[#allocation3 + $0x200] sm:$0xff]
      %v1682 = vld [vmem:[#allocation3 + $0x208] sm:$0xff]
      %v1683 = vld [vmem:[#allocation3 + $0x210] sm:$0xff]
      %v1684 = vld [vmem:[#allocation3 + $0x218] sm:$0xff]
      %v1685 = vld [vmem:[#allocation3 + $0x220] sm:$0xff]
      %v1686 = vld [vmem:[#allocation3 + $0x228] sm:$0xff]
      %v1687 = vld [vmem:[#allocation3 + $0x230] sm:$0xff]
      %v1688 = vld [vmem:[#allocation3 + $0x238] sm:$0xff]
      %v1689 = vld [vmem:[#allocation3 + $0x240] sm:$0xff]
      %v1690 = vld [vmem:[#allocation3 + $0x248] sm:$0xff]
      %v1691 = vld [vmem:[#allocation3 + $0x250] sm:$0xff]
      %v1692 = vld [vmem:[#allocation3 + $0x258] sm:$0xff]
      %v1693 = vld [vmem:[#allocation3 + $0x260] sm:$0xff]
      %v1694 = vld [vmem:[#allocation3 + $0x268] sm:$0xff]
      %v1695 = vld [vmem:[#allocation3 + $0x270] sm:$0xff]
      %v1696 = vld [vmem:[#allocation3 + $0x278] sm:$0xff]
      %v1697 = vld [vmem:[#allocation3 + $0x280] sm:$0xff]
      %v1698 = vld [vmem:[#allocation3 + $0x288] sm:$0xff]
      %v1699 = vld [vmem:[#allocation3 + $0x290] sm:$0xff]
      %v1700 = vld [vmem:[#allocation3 + $0x298] sm:$0xff]
      %v1701 = vld [vmem:[#allocation3 + $0x2a0] sm:$0xff]
      %v1702 = vld [vmem:[#allocation3 + $0x2a8] sm:$0xff]
      %v1703 = vld [vmem:[#allocation3 + $0x2b0] sm:$0xff]
      %v1704 = vld [vmem:[#allocation3 + $0x2b8] sm:$0xff]
      %v1705 = vld [vmem:[#allocation3 + $0x2c0] sm:$0xff]
      %v1706 = vld [vmem:[#allocation3 + $0x2c8] sm:$0xff]
      %v1707 = vld [vmem:[#allocation3 + $0x2d0] sm:$0xff]
      %v1708 = vld [vmem:[#allocation3 + $0x2d8] sm:$0xff]
      %v1709 = vld [vmem:[#allocation3 + $0x2e0] sm:$0xff]
      %v1710 = vld [vmem:[#allocation3 + $0x2e8] sm:$0xff]
      %v1711 = vld [vmem:[#allocation3 + $0x2f0] sm:$0xff]
      %v1712 = vld [vmem:[#allocation3 + $0x2f8] sm:$0xff]
      %v1713 = vld [vmem:[#allocation3 + $0x300] sm:$0xff]
      %v1714 = vld [vmem:[#allocation3 + $0x308] sm:$0xff]
      %v1715 = vld [vmem:[#allocation3 + $0x310] sm:$0xff]
      %v1716 = vld [vmem:[#allocation3 + $0x318] sm:$0xff]
      %v1717 = vld [vmem:[#allocation3 + $0x320] sm:$0xff]
      %v1718 = vld [vmem:[#allocation3 + $0x328] sm:$0xff]
      %v1719 = vld [vmem:[#allocation3 + $0x330] sm:$0xff]
      %v1720 = vld [vmem:[#allocation3 + $0x338] sm:$0xff]
      %v1721 = vld [vmem:[#allocation3 + $0x340] sm:$0xf]
      %v1722 = vld [vmem:[#allocation3 + $0x348] sm:$0xf]
      %v1723 = vld [vmem:[#allocation3 + $0x350] sm:$0xf]
      %v1724 = vld [vmem:[#allocation3 + $0x358] sm:$0xf]
      %v1725 = vld [vmem:[#allocation3 + $0x360] sm:$0xf]
      %v1726 = vld [vmem:[#allocation3 + $0x368] sm:$0xf]
      %v1727 = vld [vmem:[#allocation3 + $0x370] sm:$0xf]
      %v1728 = vld [vmem:[#allocation3 + $0x378] sm:$0xf]
      %vm1729 = vcmask 883712
      %v1731 = vsel %vm1729, %v1616, 0
      %vm1733 = vcmask 1043456
      %v1735 = vsel %vm1733, %v1721, 0
      %v1738 = vsel %vm1733, %v1722, 0
      %v1741 = vsel %vm1733, %v1723, 0
      %v1744 = vsel %vm1733, %v1724, 0
      %v1747 = vsel %vm1733, %v1725, 0
      %v1750 = vsel %vm1733, %v1726, 0
      %v1753 = vsel %vm1733, %v1727, 0
      %v1756 = vsel %vm1733, %v1728, 0
      %1758 = vmatpush.msra.mxu0 0.0
      %1759 = vmatpush.msra.mxu0 0.0
      %1760 = vmatpush.msra.mxu0 %v1735
      %1761 = vmatpush.msra.mxu0 %v1713
      %1762 = vmatpush.msra.mxu0 %v1705
      %1763 = vmatpush.msra.mxu0 %v1697
      %1764 = vmatpush.msra.mxu0 %v1689
      %1765 = vmatpush.msra.mxu0 %v1681
      %1766 = vmatpush.msra.mxu0 %v1673
      %1767 = vmatpush.msra.mxu0 %v1665
      %1768 = vmatpush.msra.mxu0 %v1657
      %1769 = vmatpush.msra.mxu0 %v1649
      %1770 = vmatpush.msra.mxu0 %v1641
      %1771 = vmatpush.msra.mxu0 %v1633
      %1772 = vmatpush.msra.mxu0 %v1625
      %1773 = vmatpush.msra.mxu0 %v1617
      %1774 = vmatmul.f32.gmra.mxu0 %v1731
      %v1775 = vpop.f32.mrf.mxu0
      %v1776 = vadd.f32 0.0, %v1775
      %1777 = vdwg.mxu0
      %1778 = vmatpush.msra.mxu0 0.0
      %1779 = vmatpush.msra.mxu0 0.0
      %1780 = vmatpush.msra.mxu0 %v1738
      %1781 = vmatpush.msra.mxu0 %v1714
      %1782 = vmatpush.msra.mxu0 %v1706
      %1783 = vmatpush.msra.mxu0 %v1698
      %1784 = vmatpush.msra.mxu0 %v1690
      %1785 = vmatpush.msra.mxu0 %v1682
      %1786 = vmatpush.msra.mxu0 %v1674
      %1787 = vmatpush.msra.mxu0 %v1666
      %1788 = vmatpush.msra.mxu0 %v1658
      %1789 = vmatpush.msra.mxu0 %v1650
      %1790 = vmatpush.msra.mxu0 %v1642
      %1791 = vmatpush.msra.mxu0 %v1634
      %1792 = vmatpush.msra.mxu0 %v1626
      %1793 = vmatpush.msra.mxu0 %v1618
      %1794 = vmatmul.f32.gmra.mxu0 %v1731
      %v1795 = vpop.f32.mrf.mxu0
      %v1796 = vadd.f32 0.0, %v1795
      %1797 = vdwg.mxu0
      %1798 = vmatpush.msra.mxu0 0.0
      %1799 = vmatpush.msra.mxu0 0.0
      %1800 = vmatpush.msra.mxu0 %v1741
      %1801 = vmatpush.msra.mxu0 %v1715
      %1802 = vmatpush.msra.mxu0 %v1707
      %1803 = vmatpush.msra.mxu0 %v1699
      %1804 = vmatpush.msra.mxu0 %v1691
      %1805 = vmatpush.msra.mxu0 %v1683
      %1806 = vmatpush.msra.mxu0 %v1675
      %1807 = vmatpush.msra.mxu0 %v1667
      %1808 = vmatpush.msra.mxu0 %v1659
      %1809 = vmatpush.msra.mxu0 %v1651
      %1810 = vmatpush.msra.mxu0 %v1643
      %1811 = vmatpush.msra.mxu0 %v1635
      %1812 = vmatpush.msra.mxu0 %v1627
      %1813 = vmatpush.msra.mxu0 %v1619
      %1814 = vmatmul.f32.gmra.mxu0 %v1731
      %v1815 = vpop.f32.mrf.mxu0
      %v1816 = vadd.f32 0.0, %v1815
      %1817 = vdwg.mxu0
      %1818 = vmatpush.msra.mxu0 0.0
      %1819 = vmatpush.msra.mxu0 0.0
      %1820 = vmatpush.msra.mxu0 %v1744
      %1821 = vmatpush.msra.mxu0 %v1716
      %1822 = vmatpush.msra.mxu0 %v1708
      %1823 = vmatpush.msra.mxu0 %v1700
      %1824 = vmatpush.msra.mxu0 %v1692
      %1825 = vmatpush.msra.mxu0 %v1684
      %1826 = vmatpush.msra.mxu0 %v1676
      %1827 = vmatpush.msra.mxu0 %v1668
      %1828 = vmatpush.msra.mxu0 %v1660
      %1829 = vmatpush.msra.mxu0 %v1652
      %1830 = vmatpush.msra.mxu0 %v1644
      %1831 = vmatpush.msra.mxu0 %v1636
      %1832 = vmatpush.msra.mxu0 %v1628
      %1833 = vmatpush.msra.mxu0 %v1620
      %1834 = vmatmul.f32.gmra.mxu0 %v1731
      %v1835 = vpop.f32.mrf.mxu0
      %v1836 = vadd.f32 0.0, %v1835
      %1837 = vdwg.mxu0
      %1838 = vmatpush.msra.mxu0 0.0
      %1839 = vmatpush.msra.mxu0 0.0
      %1840 = vmatpush.msra.mxu0 %v1747
      %1841 = vmatpush.msra.mxu0 %v1717
      %1842 = vmatpush.msra.mxu0 %v1709
      %1843 = vmatpush.msra.mxu0 %v1701
      %1844 = vmatpush.msra.mxu0 %v1693
      %1845 = vmatpush.msra.mxu0 %v1685
      %1846 = vmatpush.msra.mxu0 %v1677
      %1847 = vmatpush.msra.mxu0 %v1669
      %1848 = vmatpush.msra.mxu0 %v1661
      %1849 = vmatpush.msra.mxu0 %v1653
      %1850 = vmatpush.msra.mxu0 %v1645
      %1851 = vmatpush.msra.mxu0 %v1637
      %1852 = vmatpush.msra.mxu0 %v1629
      %1853 = vmatpush.msra.mxu0 %v1621
      %1854 = vmatmul.f32.gmra.mxu0 %v1731
      %v1855 = vpop.f32.mrf.mxu0
      %v1856 = vadd.f32 0.0, %v1855
      %1857 = vdwg.mxu0
      %1858 = vmatpush.msra.mxu0 0.0
      %1859 = vmatpush.msra.mxu0 0.0
      %1860 = vmatpush.msra.mxu0 %v1750
      %1861 = vmatpush.msra.mxu0 %v1718
      %1862 = vmatpush.msra.mxu0 %v1710
      %1863 = vmatpush.msra.mxu0 %v1702
      %1864 = vmatpush.msra.mxu0 %v1694
      %1865 = vmatpush.msra.mxu0 %v1686
      %1866 = vmatpush.msra.mxu0 %v1678
      %1867 = vmatpush.msra.mxu0 %v1670
      %1868 = vmatpush.msra.mxu0 %v1662
      %1869 = vmatpush.msra.mxu0 %v1654
      %1870 = vmatpush.msra.mxu0 %v1646
      %1871 = vmatpush.msra.mxu0 %v1638
      %1872 = vmatpush.msra.mxu0 %v1630
      %1873 = vmatpush.msra.mxu0 %v1622
      %1874 = vmatmul.f32.gmra.mxu0 %v1731
      %v1875 = vpop.f32.mrf.mxu0
      %v1876 = vadd.f32 0.0, %v1875
      %1877 = vdwg.mxu0
      %1878 = vmatpush.msra.mxu0 0.0
      %1879 = vmatpush.msra.mxu0 0.0
      %1880 = vmatpush.msra.mxu0 %v1753
      %1881 = vmatpush.msra.mxu0 %v1719
      %1882 = vmatpush.msra.mxu0 %v1711
      %1883 = vmatpush.msra.mxu0 %v1703
      %1884 = vmatpush.msra.mxu0 %v1695
      %1885 = vmatpush.msra.mxu0 %v1687
      %1886 = vmatpush.msra.mxu0 %v1679
      %1887 = vmatpush.msra.mxu0 %v1671
      %1888 = vmatpush.msra.mxu0 %v1663
      %1889 = vmatpush.msra.mxu0 %v1655
      %1890 = vmatpush.msra.mxu0 %v1647
      %1891 = vmatpush.msra.mxu0 %v1639
      %1892 = vmatpush.msra.mxu0 %v1631
      %1893 = vmatpush.msra.mxu0 %v1623
      %1894 = vmatmul.f32.gmra.mxu0 %v1731
      %v1895 = vpop.f32.mrf.mxu0
      %v1896 = vadd.f32 0.0, %v1895
      %1897 = vdwg.mxu0
      %1898 = vmatpush.msra.mxu0 0.0
      %1899 = vmatpush.msra.mxu0 0.0
      %1900 = vmatpush.msra.mxu0 %v1756
      %1901 = vmatpush.msra.mxu0 %v1720
      %1902 = vmatpush.msra.mxu0 %v1712
      %1903 = vmatpush.msra.mxu0 %v1704
      %1904 = vmatpush.msra.mxu0 %v1696
      %1905 = vmatpush.msra.mxu0 %v1688
      %1906 = vmatpush.msra.mxu0 %v1680
      %1907 = vmatpush.msra.mxu0 %v1672
      %1908 = vmatpush.msra.mxu0 %v1664
      %1909 = vmatpush.msra.mxu0 %v1656
      %1910 = vmatpush.msra.mxu0 %v1648
      %1911 = vmatpush.msra.mxu0 %v1640
      %1912 = vmatpush.msra.mxu0 %v1632
      %1913 = vmatpush.msra.mxu0 %v1624
      %1914 = vmatmul.f32.gmra.mxu0 %v1731
      %v1915 = vpop.f32.mrf.mxu0
      %v1916 = vadd.f32 0.0, %v1915
      %1917 = vdwg.mxu0
      %v1918 = vld [vmem:[%s3] sm:$0xf]
      %1920 = vset.pattern.permute.xlu0 0
      %1921 = vperm.xlu0 %1920, %v1918
      %v1922 = vpop.permute.xlu0 %1921
      %v1924 = vmul.f32 %v1776, %v1922
      %v1925 = vmul.f32 %v1796, %v1922
      %v1926 = vmul.f32 %v1816, %v1922
      %v1927 = vmul.f32 %v1836, %v1922
      %v1928 = vmul.f32 %v1856, %v1922
      %v1929 = vmul.f32 %v1876, %v1922
      %v1930 = vmul.f32 %v1896, %v1922
      %v1931 = vmul.f32 %v1916, %v1922
      %v1932 = vld [vmem:[%s4] sm:$0xf]
      %1934 = vset.pattern.permute.xlu0 0
      %1935 = vperm.xlu0 %1934, %v1932
      %v1936 = vpop.permute.xlu0 %1935
      %v1938 = vadd.f32 %v1924, %v1936
      %v1939 = vadd.f32 %v1925, %v1936
      %v1940 = vadd.f32 %v1926, %v1936
      %v1941 = vadd.f32 %v1927, %v1936
      %v1942 = vadd.f32 %v1928, %v1936
      %v1943 = vadd.f32 %v1929, %v1936
      %v1944 = vadd.f32 %v1930, %v1936
      %v1945 = vadd.f32 %v1931, %v1936
      %v1946 = vld [vmem:[%s388] sm:$0xff]
      %v1947 = vld [vmem:[%s388 + $0x8] sm:$0xff]
      %v1948 = vunpack.c.l.bf16 %v1946
      %v1949 = vunpack.c.h.bf16 %v1946
      %v1950 = vunpack.c.l.bf16 %v1947
      %v1951 = vunpack.c.h.bf16 %v1947
      %1956 = vst [vmem:[#allocation1] ss:$2 sm:$0xff] %v1948
      %s1957 = scalar_lea.vmem [#allocation1], 16
      %1958 = vst [vmem:[%s1957] ss:$2 sm:$0xff] %v1949
      %s1959 = scalar_lea.vmem [#allocation1], 32
      %1960 = vst [vmem:[%s1959] ss:$2 sm:$0xff] %v1950
      %s1961 = scalar_lea.vmem [#allocation1], 48
      %1962 = vst [vmem:[%s1961] ss:$2 sm:$0xff] %v1951
      %v1963 = vld.sshfl [vmem:[#allocation1] sm:$0xff pattern:$0x75316420]
      %v1964 = vld.sshfl [vmem:[#allocation1 + $0x8] sm:$0xff pattern:$0x75316420]
      %v1965 = vld.sshfl [vmem:[#allocation1 + $0x10] sm:$0xff pattern:$0x75316420]
      %v1966 = vld.sshfl [vmem:[#allocation1 + $0x18] sm:$0xff pattern:$0x75316420]
      %v1967 = vld.sshfl [vmem:[#allocation1 + $0x20] sm:$0xff pattern:$0x75316420]
      %v1968 = vld.sshfl [vmem:[#allocation1 + $0x28] sm:$0xff pattern:$0x75316420]
      %v1969 = vld.sshfl [vmem:[#allocation1 + $0x30] sm:$0xff pattern:$0x75316420]
      %v1970 = vld.sshfl [vmem:[#allocation1 + $0x38] sm:$0xff pattern:$0x75316420]
      %v1979 = vadd.f32 %v1938, %v1963
      %v1980 = vadd.f32 %v1939, %v1964
      %v1981 = vadd.f32 %v1940, %v1965
      %v1982 = vadd.f32 %v1941, %v1966
      %v1983 = vadd.f32 %v1942, %v1967
      %v1984 = vadd.f32 %v1943, %v1968
      %v1985 = vadd.f32 %v1944, %v1969
      %v1986 = vadd.f32 %v1945, %v1970
      %v1987 = vmax.f32 %v1979, 0.0
      %v1988 = vmax.f32 %v1980, 0.0
      %v1989 = vmax.f32 %v1981, 0.0
      %v1990 = vmax.f32 %v1982, 0.0
      %v1991 = vmax.f32 %v1983, 0.0
      %v1992 = vmax.f32 %v1984, 0.0
      %v1993 = vmax.f32 %v1985, 0.0
      %v1994 = vmax.f32 %v1986, 0.0
      %v1995 = vld [vmem:[%s378] sm:$0xff]
      %v1996 = vunpack.c.l.bf16 %v1995
      %v1997 = vunpack.c.h.bf16 %v1995
      %vm1998 = vcmp.gt.f32.partialorder %v1996, 0.0
      %vm1999 = vcmp.gt.f32.partialorder %v1997, 0.0
      %v2000 = vsel %vm1998, 1, 0
      %v2001 = vsel %vm1999, 1, 0
      %v2002 = vperm.slane %v2000, 0
      %v2003 = vperm.slane %v2000, 2
      %v2004 = vperm.slane %v2000, 4
      %v2005 = vperm.slane %v2000, 6
      %v2006 = vperm.slane %v2001, 0
      %v2007 = vperm.slane %v2001, 2
      %v2008 = vperm.slane %v2001, 4
      %v2009 = vperm.slane %v2001, 6
      %v2010 = vperm.slane %v2002, 0
      %v2011 = vperm.slane %v2003, 0
      %v2012 = vperm.slane %v2004, 0
      %v2013 = vperm.slane %v2005, 0
      %v2014 = vperm.slane %v2006, 0
      %v2015 = vperm.slane %v2007, 0
      %v2016 = vperm.slane %v2008, 0
      %v2017 = vperm.slane %v2009, 0
      %vm2018 = vcmp.eq.s32.totalorder %v2010, 1
      %vm2019 = vcmp.eq.s32.totalorder %v2011, 1
      %vm2020 = vcmp.eq.s32.totalorder %v2012, 1
      %vm2021 = vcmp.eq.s32.totalorder %v2013, 1
      %vm2022 = vcmp.eq.s32.totalorder %v2014, 1
      %vm2023 = vcmp.eq.s32.totalorder %v2015, 1
      %vm2024 = vcmp.eq.s32.totalorder %v2016, 1
      %vm2025 = vcmp.eq.s32.totalorder %v2017, 1
      %v2026 = vsel %vm2018, %v1987, 0.0
      %v2027 = vsel %vm2019, %v1988, 0.0
      %v2028 = vsel %vm2020, %v1989, 0.0
      %v2029 = vsel %vm2021, %v1990, 0.0
      %v2030 = vsel %vm2022, %v1991, 0.0
      %v2031 = vsel %vm2023, %v1992, 0.0
      %v2032 = vsel %vm2024, %v1993, 0.0
      %v2033 = vsel %vm2025, %v1994, 0.0
      %v2042 = vrot.slane %v2027, 4
      %v2043 = vrot.slane %v2029, 4
      %v2044 = vrot.slane %v2031, 4
      %v2045 = vrot.slane %v2033, 4
      %v2046 = vsel %vm1733, %v2026, %v2042
      %v2047 = vsel %vm1733, %v2028, %v2043
      %v2048 = vsel %vm1733, %v2030, %v2044
      %v2049 = vsel %vm1733, %v2032, %v2045
      %2054 = vst [vmem:[%s398] sm:$0xff] %v2046
      %2055 = vst [vmem:[%s398 + $0x8] sm:$0xff] %v2047
      %2056 = vst [vmem:[%s398 + $0x10] sm:$0xff] %v2048
      %2057 = vst [vmem:[%s398 + $0x18] sm:$0xff] %v2049
      %v2058 = vld [vmem:[#allocation2 + $0x20] sm:$0xff]
      %v2059 = vld [vmem:[#allocation2 + $0x28] sm:$0xff]
      %v2060 = vld [vmem:[#allocation2 + $0x30] sm:$0xff]
      %v2061 = vld [vmem:[#allocation2 + $0x38] sm:$0xff]
      %2062 = vst [vmem:[#allocation2] sm:$0xff] %v2058
      %2063 = vst [vmem:[#allocation2 + $0x8] sm:$0xff] %v2059
      %2064 = vst [vmem:[#allocation2 + $0x10] sm:$0xff] %v2060
      %2065 = vst [vmem:[#allocation2 + $0x18] sm:$0xff] %v2061
      %2066 = vst [vmem:[#allocation2 + $0x20] sm:$0xff] %v420
      %2067 = vst [vmem:[#allocation2 + $0x28] sm:$0xff] %v421
      %2068 = vst [vmem:[#allocation2 + $0x30] sm:$0xff] %v422
      %2069 = vst [vmem:[#allocation2 + $0x38] sm:$0xff] %v423
      %s2070 = smul.u32 8, %s23
      %p2071 = scmp.lt.s32.totalorder %s22, 1
      %s2072 = scalar_select %p2071, %s22, 1
      %p2073 = scmp.lt.s32.totalorder %s2070, 15
      %s2074 = scalar_select %p2073, %s2070, 15
      %s2075 = smul.addr %s2072, 16
      %s2076 = sadd.s32 %s2074, %s2075
      %s2077 = smul.addr %s2076, 4
      %s2078 = scalar_lea.vmem %s7, %s2077
      // Predicated region
      $region53: #{block_forward.3} parent=47 // pred_check
        %p2079 = pneg %p223
      $region54: #{block_forward.3} parent=47 // pred_check_branch
        %2081 = sbr.rel (%p2079) target = $region56
      $region55: #{block_forward.3} parent=47 // pred_region
        %s2082 = smul.u32 8, %s23
      $region56: #{block_forward.3} parent=47 // pred_fallthru
        _
    $region48: #{block_forward.3} parent=5 // pred_fallthru
      _
    %p2083 = scmp.le.s32.totalorder 2, %s13
    // Predicated region
    $region57: #{block_forward.3} parent=5 // pred_check
      %p2084 = pneg %p2083
    $region58: #{block_forward.3} parent=5 // pred_check_branch
      %2086 = sbr.rel (%p2084) target = $region60
    $region59: #{block_forward.3} parent=5 // pred_region
      %s2087 = ssub.s32 %s13, 2
      // Predicated region
      $region61: #{block_forward.3} parent=59 // pred_check
        %p2088 = pneg %p229
      $region62: #{block_forward.3} parent=59 // pred_check_branch
        %2090 = sbr.rel (%p2088) target = $region64
      $region63: #{block_forward.3} parent=59 // pred_region
        %s2091 = smul.u32 8, %s25
        %p2092 = scmp.lt.s32.totalorder %s24, 1
        %s2093 = scalar_select %p2092, %s24, 1
        %p2094 = scmp.lt.s32.totalorder %s2091, 15
        %s2095 = scalar_select %p2094, %s2091, 15
        %s2096 = smul.addr %s2093, 16
        %s2097 = sadd.s32 %s2095, %s2096
        %s2098 = smul.addr %s2097, 4
        %s2099 = scalar_lea.vmem %s7, %s2098
      $region64: #{block_forward.3} parent=59 // pred_fallthru
        _
    $region60: #{block_forward.3} parent=5 // pred_fallthru
      _
  $region6: #{block_forward.3} parent=0 // loop_footer
    %s17 = sadd.s32 1, %s13
  $region7: #{block_forward.3} parent=0 // loop_footer_branch
    %12 = sbr.rel target = $region3
  $region8: #{block_forward.3} parent=0 // loop_exit
    _

</llo_original>
